<compile_context>
chip_gen: v5e
topology: v5e:2x2
jax: 0.10.0
libtpu: 0.0.40
codegen_flags: <defaults>
</compile_context>

<pallas_src>
import functools

import jax
import jax.numpy as jnp
from jax.experimental import pallas as pl
from jax.experimental.pallas import tpu as pltpu


NEG_SLOPE = 0.2


def _double_conv_kernel(x_ref, w1_ref, b1_ref, w2_ref, b2_ref, o_ref,
                        pad1_ref, col1_ref, pad2_ref, col2_ref,
                        *, H, W, c_in, c_mid, c_out):
    """Fused (conv3x3 + LeakyReLU) x 2 for one batch element.

    x_ref : (1, H, W, c_in)   f32 input tile
    w1_ref: (9*c_in, c_mid)   bf16 im2col-flattened conv1 weights
    b1_ref: (1, c_mid)        f32
    w2_ref: (9*c_mid, c_out)  bf16 im2col-flattened conv2 weights
    b2_ref: (1, c_out)        f32
    o_ref : (1, H*W, c_out)   f32 output tile
    pad*_ref / col*_ref: VMEM scratch (halo-padded activation / im2col matrix)
    """
    hw = H * W

    def conv(pad_ref, col_ref, w_ref, b_ref, c):
        # Pack the 9 shifted windows into the im2col scratch -> (H*W, 9*c),
        # then a single MXU matmul with K = 9*c.
        for ky in range(3):
            for kx in range(3):
                j = ky * 3 + kx
                col_ref[:, j * c:(j + 1) * c] = (
                    pad_ref[ky:ky + H, kx:kx + W, :].reshape(hw, c)
                )
        lhs = col_ref[...].astype(jnp.bfloat16)
        acc = jnp.dot(lhs, w_ref[...], preferred_element_type=jnp.float32)
        acc = acc + b_ref[...]                       # f32 bias add
        return jnp.where(acc >= 0.0, acc, NEG_SLOPE * acc)   # LeakyReLU(0.2)

    # ---- conv1 (in-kernel halo padding) ------------------------------------
    pad1_ref[...] = jnp.zeros(pad1_ref.shape, pad1_ref.dtype)
    pad1_ref[1:H + 1, 1:W + 1, :] = x_ref[0]
    act1 = conv(pad1_ref, col1_ref, w1_ref, b1_ref, c_in)     # (H*W, c_mid)

    # ---- conv2 (intermediate activation stays in VMEM) ---------------------
    pad2_ref[...] = jnp.zeros(pad2_ref.shape, pad2_ref.dtype)
    pad2_ref[1:H + 1, 1:W + 1, :] = act1.reshape(H, W, c_mid)
    act2 = conv(pad2_ref, col2_ref, w2_ref, b2_ref, c_mid)    # (H*W, c_out)

    o_ref[0] = act2.astype(o_ref.dtype)


def double_conv_forward(x_nchw, params):
    """Forward pass of double_conv.  Input/output in NCHW like the PyTorch module."""
    (w1, b1), (w2, b2) = params
    N, c_in, H, W = x_nchw.shape
    c_mid = w1.shape[-1]
    c_out = w2.shape[-1]

    x = jnp.transpose(x_nchw, (0, 2, 3, 1)).astype(jnp.float32)   # -> NHWC

    # im2col-flattened weights, stored bf16 for the MXU fast path.
    w1_f = w1.reshape(9 * c_in, c_mid).astype(jnp.bfloat16)
    w2_f = w2.reshape(9 * c_mid, c_out).astype(jnp.bfloat16)
    b1_f = b1.reshape(1, c_mid).astype(jnp.float32)
    b2_f = b2.reshape(1, c_out).astype(jnp.float32)

    kernel = functools.partial(
        _double_conv_kernel, H=H, W=W, c_in=c_in, c_mid=c_mid, c_out=c_out)

    out = pl.pallas_call(
        kernel,
        out_shape=jax.ShapeDtypeStruct((N, H * W, c_out), jnp.float32),
        grid_spec=pltpu.PrefetchScalarGridSpec(
            num_scalar_prefetch=0,
            grid=(N,),
            in_specs=[
                pl.BlockSpec((1, H, W, c_in), lambda n: (n, 0, 0, 0)),
                pl.BlockSpec((9 * c_in, c_mid), lambda n: (0, 0)),
                pl.BlockSpec((1, c_mid), lambda n: (0, 0)),
                pl.BlockSpec((9 * c_mid, c_out), lambda n: (0, 0)),
                pl.BlockSpec((1, c_out), lambda n: (0, 0)),
            ],
            out_specs=pl.BlockSpec((1, H * W, c_out), lambda n: (n, 0, 0)),
            scratch_shapes=[
                pltpu.VMEM((H + 2, W + 2, c_in), jnp.float32),    # conv1 halo pad
                pltpu.VMEM((H * W, 9 * c_in), jnp.float32),       # conv1 im2col
                pltpu.VMEM((H + 2, W + 2, c_mid), jnp.float32),   # conv2 halo pad
                pltpu.VMEM((H * W, 9 * c_mid), jnp.float32),      # conv2 im2col
            ],
        ),
        compiler_params=pltpu.CompilerParams(
            dimension_semantics=("parallel",),     # v7x: one batch elem per TC
            vmem_limit_bytes=32 * 1024 * 1024,
        ),
    )(x, w1_f, b1_f, w2_f, b2_f)

    out = out.reshape(N, H, W, c_out)             # NHWC (free metadata reshape)
    return jnp.transpose(out, (0, 3, 1, 2))       # -> NCHW


def init_double_conv_params(key, in_ch, out_ch):
    """PyTorch-Conv2d-style uniform init; weights stored (kh, kw, Cin, Cout)."""
    plan = [(in_ch, out_ch), (out_ch, out_ch)]
    params = []
    for cin, cout in plan:
        key, kw_key, kb_key = jax.random.split(key, 3)
        bound = 1.0 / jnp.sqrt(cin * 9.0)
        w = jax.random.uniform(kw_key, (3, 3, cin, cout), jnp.float32,
                               minval=-bound, maxval=bound)
        b = jax.random.uniform(kb_key, (cout,), jnp.float32,
                               minval=-bound, maxval=bound)
        params.append((w, b))
    return params


def _reference_double_conv(x_nchw, params):
    """Pure-JAX (f32) reference used only for a sanity check."""
    x = jnp.transpose(x_nchw, (0, 2, 3, 1))
    for w, b in params:
        x = jax.lax.conv_general_dilated(
            x, w, window_strides=(1, 1), padding="SAME",
            dimension_numbers=("NHWC", "HWIO", "NHWC"))
        x = x + b
        x = jnp.where(x >= 0.0, x, NEG_SLOPE * x)
    return jnp.transpose(x, (0, 3, 1, 2))


if __name__ == "__main__":
    key = jax.random.PRNGKey(0)
    key, kx = jax.random.split(key)

    batch, in_ch, H, W = 2, 4, 16, 16
    out_ch = 32

    x = jax.random.normal(kx, (batch, in_ch, H, W), dtype=jnp.float32)
    params = init_double_conv_params(key, in_ch, out_ch)

    out = jax.block_until_ready(double_conv_forward(x, params))

    assert out.shape == (batch, out_ch, H, W), out.shape
    assert jnp.all(jnp.isfinite(out))

    # Loose sanity check against the XLA f32 reference (kernel matmuls are bf16).
    ref = jax.block_until_ready(_reference_double_conv(x, params))
    assert float(jnp.max(jnp.abs(out - ref))) < 1e-1

    print("KERNEL_OK")
</pallas_src>

<mosaic_0001>
module attributes {stable_mosaic.version = 11 : i64} {
  func.func @_double_conv_kernel(%arg0: i32, %arg1: memref<1x16x16x4xf32, #tpu.memory_space<vmem>>, %arg2: memref<36x32xbf16, #tpu.memory_space<vmem>>, %arg3: memref<1x32xf32, #tpu.memory_space<vmem>>, %arg4: memref<288x32xbf16, #tpu.memory_space<vmem>>, %arg5: memref<1x32xf32, #tpu.memory_space<vmem>>, %arg6: memref<1x256x32xf32, #tpu.memory_space<vmem>>, %arg7: memref<18x18x4xf32, #tpu.memory_space<vmem>>, %arg8: memref<256x36xf32, #tpu.memory_space<vmem>>, %arg9: memref<18x18x32xf32, #tpu.memory_space<vmem>>, %arg10: memref<256x288xf32, #tpu.memory_space<vmem>>) attributes {dimension_semantics = [#tpu.dimension_semantics<parallel>], iteration_bounds = array<i64: 2>, scalar_prefetch = 0 : i64, scratch_operands = 4 : i64, tpu.core_type = #tpu.core_type<tc>, window_params = [{transform_indices = @transform_0, window_bounds = array<i64: 1, 16, 16, 4>}, {pipeline_mode = #tpu.pipeline_mode<synchronous>, transform_indices = @transform_1, window_bounds = array<i64: 36, 32>}, {pipeline_mode = #tpu.pipeline_mode<synchronous>, transform_indices = @transform_2, window_bounds = array<i64: 1, 32>}, {pipeline_mode = #tpu.pipeline_mode<synchronous>, transform_indices = @transform_3, window_bounds = array<i64: 288, 32>}, {pipeline_mode = #tpu.pipeline_mode<synchronous>, transform_indices = @transform_4, window_bounds = array<i64: 1, 32>}, {transform_indices = @transform_5, window_bounds = array<i64: 1, 256, 32>}]} {
    %cst = arith.constant 0.000000e+00 : f32
    %0 = vector.broadcast %cst : f32 to vector<18x18x4xf32>
    %c0 = arith.constant 0 : index
    %c0_0 = arith.constant 0 : index
    %c0_1 = arith.constant 0 : index
    %1 = vector.load %arg7[%c0, %c0_0, %c0_1] : memref<18x18x4xf32, #tpu.memory_space<vmem>>, vector<18x18x4xf32>
    tpu.vector_store %arg7[%c0, %c0_0, %c0_1], %0 {strides = array<i32>} : memref<18x18x4xf32, #tpu.memory_space<vmem>>, vector<18x18x4xf32>,
    %c0_2 = arith.constant 0 : index
    %c0_3 = arith.constant 0 : index
    %c0_4 = arith.constant 0 : index
    %c0_5 = arith.constant 0 : index
    %2 = vector.load %arg1[%c0_2, %c0_3, %c0_4, %c0_5] : memref<1x16x16x4xf32, #tpu.memory_space<vmem>>, vector<1x16x16x4xf32>
    %3 = vector.shape_cast %2 : vector<1x16x16x4xf32> to vector<16x16x4xf32>
    %c1 = arith.constant 1 : index
    %c1_6 = arith.constant 1 : index
    %c0_7 = arith.constant 0 : index
    %4 = vector.load %arg7[%c1, %c1_6, %c0_7] : memref<18x18x4xf32, #tpu.memory_space<vmem>>, vector<16x16x4xf32>
    tpu.vector_store %arg7[%c1, %c1_6, %c0_7], %3 {strides = array<i32>} : memref<18x18x4xf32, #tpu.memory_space<vmem>>, vector<16x16x4xf32>,
    %c0_8 = arith.constant 0 : index
    %c0_9 = arith.constant 0 : index
    %c0_10 = arith.constant 0 : index
    %5 = vector.load %arg7[%c0_8, %c0_9, %c0_10] : memref<18x18x4xf32, #tpu.memory_space<vmem>>, vector<16x16x4xf32>
    %6 = vector.shape_cast %5 : vector<16x16x4xf32> to vector<256x4xf32>
    %c0_11 = arith.constant 0 : index
    %c0_12 = arith.constant 0 : index
    %7 = vector.load %arg8[%c0_11, %c0_12] : memref<256x36xf32, #tpu.memory_space<vmem>>, vector<256x4xf32>
    tpu.vector_store %arg8[%c0_11, %c0_12], %6 {strides = array<i32>} : memref<256x36xf32, #tpu.memory_space<vmem>>, vector<256x4xf32>,
    %c0_13 = arith.constant 0 : index
    %c1_14 = arith.constant 1 : index
    %c0_15 = arith.constant 0 : index
    %8 = vector.load %arg7[%c0_13, %c1_14, %c0_15] : memref<18x18x4xf32, #tpu.memory_space<vmem>>, vector<16x16x4xf32>
    %9 = vector.shape_cast %8 : vector<16x16x4xf32> to vector<256x4xf32>
    %c0_16 = arith.constant 0 : index
    %c4 = arith.constant 4 : index
    %10 = vector.load %arg8[%c0_16, %c4] : memref<256x36xf32, #tpu.memory_space<vmem>>, vector<256x4xf32>
    tpu.vector_store %arg8[%c0_16, %c4], %9 {strides = array<i32>} : memref<256x36xf32, #tpu.memory_space<vmem>>, vector<256x4xf32>,
    %c0_17 = arith.constant 0 : index
    %c2 = arith.constant 2 : index
    %c0_18 = arith.constant 0 : index
    %11 = vector.load %arg7[%c0_17, %c2, %c0_18] : memref<18x18x4xf32, #tpu.memory_space<vmem>>, vector<16x16x4xf32>
    %12 = vector.shape_cast %11 : vector<16x16x4xf32> to vector<256x4xf32>
    %c0_19 = arith.constant 0 : index
    %c8 = arith.constant 8 : index
    %13 = vector.load %arg8[%c0_19, %c8] : memref<256x36xf32, #tpu.memory_space<vmem>>, vector<256x4xf32>
    tpu.vector_store %arg8[%c0_19, %c8], %12 {strides = array<i32>} : memref<256x36xf32, #tpu.memory_space<vmem>>, vector<256x4xf32>,
    %c1_20 = arith.constant 1 : index
    %c0_21 = arith.constant 0 : index
    %c0_22 = arith.constant 0 : index
    %14 = vector.load %arg7[%c1_20, %c0_21, %c0_22] : memref<18x18x4xf32, #tpu.memory_space<vmem>>, vector<16x16x4xf32>
    %15 = vector.shape_cast %14 : vector<16x16x4xf32> to vector<256x4xf32>
    %c0_23 = arith.constant 0 : index
    %c12 = arith.constant 12 : index
    %16 = vector.load %arg8[%c0_23, %c12] : memref<256x36xf32, #tpu.memory_space<vmem>>, vector<256x4xf32>
    tpu.vector_store %arg8[%c0_23, %c12], %15 {strides = array<i32>} : memref<256x36xf32, #tpu.memory_space<vmem>>, vector<256x4xf32>,
    %c1_24 = arith.constant 1 : index
    %c1_25 = arith.constant 1 : index
    %c0_26 = arith.constant 0 : index
    %17 = vector.load %arg7[%c1_24, %c1_25, %c0_26] : memref<18x18x4xf32, #tpu.memory_space<vmem>>, vector<16x16x4xf32>
    %18 = vector.shape_cast %17 : vector<16x16x4xf32> to vector<256x4xf32>
    %c0_27 = arith.constant 0 : index
    %c16 = arith.constant 16 : index
    %19 = vector.load %arg8[%c0_27, %c16] : memref<256x36xf32, #tpu.memory_space<vmem>>, vector<256x4xf32>
    tpu.vector_store %arg8[%c0_27, %c16], %18 {strides = array<i32>} : memref<256x36xf32, #tpu.memory_space<vmem>>, vector<256x4xf32>,
    %c1_28 = arith.constant 1 : index
    %c2_29 = arith.constant 2 : index
    %c0_30 = arith.constant 0 : index
    %20 = vector.load %arg7[%c1_28, %c2_29, %c0_30] : memref<18x18x4xf32, #tpu.memory_space<vmem>>, vector<16x16x4xf32>
    %21 = vector.shape_cast %20 : vector<16x16x4xf32> to vector<256x4xf32>
    %c0_31 = arith.constant 0 : index
    %c20 = arith.constant 20 : index
    %22 = vector.load %arg8[%c0_31, %c20] : memref<256x36xf32, #tpu.memory_space<vmem>>, vector<256x4xf32>
    tpu.vector_store %arg8[%c0_31, %c20], %21 {strides = array<i32>} : memref<256x36xf32, #tpu.memory_space<vmem>>, vector<256x4xf32>,
    %c2_32 = arith.constant 2 : index
    %c0_33 = arith.constant 0 : index
    %c0_34 = arith.constant 0 : index
    %23 = vector.load %arg7[%c2_32, %c0_33, %c0_34] : memref<18x18x4xf32, #tpu.memory_space<vmem>>, vector<16x16x4xf32>
    %24 = vector.shape_cast %23 : vector<16x16x4xf32> to vector<256x4xf32>
    %c0_35 = arith.constant 0 : index
    %c24 = arith.constant 24 : index
    %25 = vector.load %arg8[%c0_35, %c24] : memref<256x36xf32, #tpu.memory_space<vmem>>, vector<256x4xf32>
    tpu.vector_store %arg8[%c0_35, %c24], %24 {strides = array<i32>} : memref<256x36xf32, #tpu.memory_space<vmem>>, vector<256x4xf32>,
    %c2_36 = arith.constant 2 : index
    %c1_37 = arith.constant 1 : index
    %c0_38 = arith.constant 0 : index
    %26 = vector.load %arg7[%c2_36, %c1_37, %c0_38] : memref<18x18x4xf32, #tpu.memory_space<vmem>>, vector<16x16x4xf32>
    %27 = vector.shape_cast %26 : vector<16x16x4xf32> to vector<256x4xf32>
    %c0_39 = arith.constant 0 : index
    %c28 = arith.constant 28 : index
    %28 = vector.load %arg8[%c0_39, %c28] : memref<256x36xf32, #tpu.memory_space<vmem>>, vector<256x4xf32>
    tpu.vector_store %arg8[%c0_39, %c28], %27 {strides = array<i32>} : memref<256x36xf32, #tpu.memory_space<vmem>>, vector<256x4xf32>,
    %c2_40 = arith.constant 2 : index
    %c2_41 = arith.constant 2 : index
    %c0_42 = arith.constant 0 : index
    %29 = vector.load %arg7[%c2_40, %c2_41, %c0_42] : memref<18x18x4xf32, #tpu.memory_space<vmem>>, vector<16x16x4xf32>
    %30 = vector.shape_cast %29 : vector<16x16x4xf32> to vector<256x4xf32>
    %c0_43 = arith.constant 0 : index
    %c32 = arith.constant 32 : index
    %31 = vector.load %arg8[%c0_43, %c32] : memref<256x36xf32, #tpu.memory_space<vmem>>, vector<256x4xf32>
    tpu.vector_store %arg8[%c0_43, %c32], %30 {strides = array<i32>} : memref<256x36xf32, #tpu.memory_space<vmem>>, vector<256x4xf32>,
    %c0_44 = arith.constant 0 : index
    %c0_45 = arith.constant 0 : index
    %32 = vector.load %arg8[%c0_44, %c0_45] : memref<256x36xf32, #tpu.memory_space<vmem>>, vector<256x36xf32>
    %33 = arith.truncf %32 : vector<256x36xf32> to vector<256x36xbf16>
    %c0_46 = arith.constant 0 : index
    %c0_47 = arith.constant 0 : index
    %34 = vector.load %arg2[%c0_46, %c0_47] : memref<36x32xbf16, #tpu.memory_space<vmem>>, vector<36x32xbf16>
    %cst_48 = arith.constant dense<0.000000e+00> : vector<256x32xf32>
    %35 = tpu.matmul %33, %34, %cst_48 {dimension_numbers = #tpu.dot_dimension_numbers<[1], [0], [0], [1], [0, 0, 1, 1], [], []>} : vector<256x36xbf16>, vector<36x32xbf16>, vector<256x32xf32> -> vector<256x32xf32>
    %c0_49 = arith.constant 0 : index
    %c0_50 = arith.constant 0 : index
    %36 = vector.load %arg3[%c0_49, %c0_50] : memref<1x32xf32, #tpu.memory_space<vmem>>, vector<1x32xf32>
    %37 = vector.broadcast %36 : vector<1x32xf32> to vector<256x32xf32>
    %38 = arith.addf %35, %37 : vector<256x32xf32>
    %cst_51 = arith.constant 0.000000e+00 : f32
    %39 = vector.broadcast %cst_51 : f32 to vector<256x32xf32>
    %40 = arith.cmpf oge, %38, %39 : vector<256x32xf32>
    %cst_52 = arith.constant 2.000000e-01 : f32
    %41 = vector.broadcast %cst_52 : f32 to vector<256x32xf32>
    %42 = arith.mulf %41, %38 : vector<256x32xf32>
    %43 = arith.select %40, %38, %42 : vector<256x32xi1>, vector<256x32xf32>
    %cst_53 = arith.constant 0.000000e+00 : f32
    %44 = vector.broadcast %cst_53 : f32 to vector<18x18x32xf32>
    %c0_54 = arith.constant 0 : index
    %c0_55 = arith.constant 0 : index
    %c0_56 = arith.constant 0 : index
    %45 = vector.load %arg9[%c0_54, %c0_55, %c0_56] : memref<18x18x32xf32, #tpu.memory_space<vmem>>, vector<18x18x32xf32>
    tpu.vector_store %arg9[%c0_54, %c0_55, %c0_56], %44 {strides = array<i32>} : memref<18x18x32xf32, #tpu.memory_space<vmem>>, vector<18x18x32xf32>,
    %46 = vector.shape_cast %43 : vector<256x32xf32> to vector<16x16x32xf32>
    %c1_57 = arith.constant 1 : index
    %c1_58 = arith.constant 1 : index
    %c0_59 = arith.constant 0 : index
    %47 = vector.load %arg9[%c1_57, %c1_58, %c0_59] : memref<18x18x32xf32, #tpu.memory_space<vmem>>, vector<16x16x32xf32>
    tpu.vector_store %arg9[%c1_57, %c1_58, %c0_59], %46 {strides = array<i32>} : memref<18x18x32xf32, #tpu.memory_space<vmem>>, vector<16x16x32xf32>,
    %c0_60 = arith.constant 0 : index
    %c0_61 = arith.constant 0 : index
    %c0_62 = arith.constant 0 : index
    %48 = vector.load %arg9[%c0_60, %c0_61, %c0_62] : memref<18x18x32xf32, #tpu.memory_space<vmem>>, vector<16x16x32xf32>
    %49 = vector.shape_cast %48 : vector<16x16x32xf32> to vector<256x32xf32>
    %c0_63 = arith.constant 0 : index
    %c0_64 = arith.constant 0 : index
    %50 = vector.load %arg10[%c0_63, %c0_64] : memref<256x288xf32, #tpu.memory_space<vmem>>, vector<256x32xf32>
    tpu.vector_store %arg10[%c0_63, %c0_64], %49 {strides = array<i32>} : memref<256x288xf32, #tpu.memory_space<vmem>>, vector<256x32xf32>,
    %c0_65 = arith.constant 0 : index
    %c1_66 = arith.constant 1 : index
    %c0_67 = arith.constant 0 : index
    %51 = vector.load %arg9[%c0_65, %c1_66, %c0_67] : memref<18x18x32xf32, #tpu.memory_space<vmem>>, vector<16x16x32xf32>
    %52 = vector.shape_cast %51 : vector<16x16x32xf32> to vector<256x32xf32>
    %c0_68 = arith.constant 0 : index
    %c32_69 = arith.constant 32 : index
    %53 = vector.load %arg10[%c0_68, %c32_69] : memref<256x288xf32, #tpu.memory_space<vmem>>, vector<256x32xf32>
    tpu.vector_store %arg10[%c0_68, %c32_69], %52 {strides = array<i32>} : memref<256x288xf32, #tpu.memory_space<vmem>>, vector<256x32xf32>,
    %c0_70 = arith.constant 0 : index
    %c2_71 = arith.constant 2 : index
    %c0_72 = arith.constant 0 : index
    %54 = vector.load %arg9[%c0_70, %c2_71, %c0_72] : memref<18x18x32xf32, #tpu.memory_space<vmem>>, vector<16x16x32xf32>
    %55 = vector.shape_cast %54 : vector<16x16x32xf32> to vector<256x32xf32>
    %c0_73 = arith.constant 0 : index
    %c64 = arith.constant 64 : index
    %56 = vector.load %arg10[%c0_73, %c64] : memref<256x288xf32, #tpu.memory_space<vmem>>, vector<256x32xf32>
    tpu.vector_store %arg10[%c0_73, %c64], %55 {strides = array<i32>} : memref<256x288xf32, #tpu.memory_space<vmem>>, vector<256x32xf32>,
    %c1_74 = arith.constant 1 : index
    %c0_75 = arith.constant 0 : index
    %c0_76 = arith.constant 0 : index
    %57 = vector.load %arg9[%c1_74, %c0_75, %c0_76] : memref<18x18x32xf32, #tpu.memory_space<vmem>>, vector<16x16x32xf32>
    %58 = vector.shape_cast %57 : vector<16x16x32xf32> to vector<256x32xf32>
    %c0_77 = arith.constant 0 : index
    %c96 = arith.constant 96 : index
    %59 = vector.load %arg10[%c0_77, %c96] : memref<256x288xf32, #tpu.memory_space<vmem>>, vector<256x32xf32>
    tpu.vector_store %arg10[%c0_77, %c96], %58 {strides = array<i32>} : memref<256x288xf32, #tpu.memory_space<vmem>>, vector<256x32xf32>,
    %c1_78 = arith.constant 1 : index
    %c1_79 = arith.constant 1 : index
    %c0_80 = arith.constant 0 : index
    %60 = vector.load %arg9[%c1_78, %c1_79, %c0_80] : memref<18x18x32xf32, #tpu.memory_space<vmem>>, vector<16x16x32xf32>
    %61 = vector.shape_cast %60 : vector<16x16x32xf32> to vector<256x32xf32>
    %c0_81 = arith.constant 0 : index
    %c128 = arith.constant 128 : index
    %62 = vector.load %arg10[%c0_81, %c128] : memref<256x288xf32, #tpu.memory_space<vmem>>, vector<256x32xf32>
    tpu.vector_store %arg10[%c0_81, %c128], %61 {strides = array<i32>} : memref<256x288xf32, #tpu.memory_space<vmem>>, vector<256x32xf32>,
    %c1_82 = arith.constant 1 : index
    %c2_83 = arith.constant 2 : index
    %c0_84 = arith.constant 0 : index
    %63 = vector.load %arg9[%c1_82, %c2_83, %c0_84] : memref<18x18x32xf32, #tpu.memory_space<vmem>>, vector<16x16x32xf32>
    %64 = vector.shape_cast %63 : vector<16x16x32xf32> to vector<256x32xf32>
    %c0_85 = arith.constant 0 : index
    %c160 = arith.constant 160 : index
    %65 = vector.load %arg10[%c0_85, %c160] : memref<256x288xf32, #tpu.memory_space<vmem>>, vector<256x32xf32>
    tpu.vector_store %arg10[%c0_85, %c160], %64 {strides = array<i32>} : memref<256x288xf32, #tpu.memory_space<vmem>>, vector<256x32xf32>,
    %c2_86 = arith.constant 2 : index
    %c0_87 = arith.constant 0 : index
    %c0_88 = arith.constant 0 : index
    %66 = vector.load %arg9[%c2_86, %c0_87, %c0_88] : memref<18x18x32xf32, #tpu.memory_space<vmem>>, vector<16x16x32xf32>
    %67 = vector.shape_cast %66 : vector<16x16x32xf32> to vector<256x32xf32>
    %c0_89 = arith.constant 0 : index
    %c192 = arith.constant 192 : index
    %68 = vector.load %arg10[%c0_89, %c192] : memref<256x288xf32, #tpu.memory_space<vmem>>, vector<256x32xf32>
    tpu.vector_store %arg10[%c0_89, %c192], %67 {strides = array<i32>} : memref<256x288xf32, #tpu.memory_space<vmem>>, vector<256x32xf32>,
    %c2_90 = arith.constant 2 : index
    %c1_91 = arith.constant 1 : index
    %c0_92 = arith.constant 0 : index
    %69 = vector.load %arg9[%c2_90, %c1_91, %c0_92] : memref<18x18x32xf32, #tpu.memory_space<vmem>>, vector<16x16x32xf32>
    %70 = vector.shape_cast %69 : vector<16x16x32xf32> to vector<256x32xf32>
    %c0_93 = arith.constant 0 : index
    %c224 = arith.constant 224 : index
    %71 = vector.load %arg10[%c0_93, %c224] : memref<256x288xf32, #tpu.memory_space<vmem>>, vector<256x32xf32>
    tpu.vector_store %arg10[%c0_93, %c224], %70 {strides = array<i32>} : memref<256x288xf32, #tpu.memory_space<vmem>>, vector<256x32xf32>,
    %c2_94 = arith.constant 2 : index
    %c2_95 = arith.constant 2 : index
    %c0_96 = arith.constant 0 : index
    %72 = vector.load %arg9[%c2_94, %c2_95, %c0_96] : memref<18x18x32xf32, #tpu.memory_space<vmem>>, vector<16x16x32xf32>
    %73 = vector.shape_cast %72 : vector<16x16x32xf32> to vector<256x32xf32>
    %c0_97 = arith.constant 0 : index
    %c256 = arith.constant 256 : index
    %74 = vector.load %arg10[%c0_97, %c256] : memref<256x288xf32, #tpu.memory_space<vmem>>, vector<256x32xf32>
    tpu.vector_store %arg10[%c0_97, %c256], %73 {strides = array<i32>} : memref<256x288xf32, #tpu.memory_space<vmem>>, vector<256x32xf32>,
    %c0_98 = arith.constant 0 : index
    %c0_99 = arith.constant 0 : index
    %75 = vector.load %arg10[%c0_98, %c0_99] : memref<256x288xf32, #tpu.memory_space<vmem>>, vector<256x288xf32>
    %76 = arith.truncf %75 : vector<256x288xf32> to vector<256x288xbf16>
    %c0_100 = arith.constant 0 : index
    %c0_101 = arith.constant 0 : index
    %77 = vector.load %arg4[%c0_100, %c0_101] : memref<288x32xbf16, #tpu.memory_space<vmem>>, vector<288x32xbf16>
    %cst_102 = arith.constant dense<0.000000e+00> : vector<256x32xf32>
    %78 = tpu.matmul %76, %77, %cst_102 {dimension_numbers = #tpu.dot_dimension_numbers<[1], [0], [0], [1], [0, 0, 1, 1], [], []>} : vector<256x288xbf16>, vector<288x32xbf16>, vector<256x32xf32> -> vector<256x32xf32>
    %c0_103 = arith.constant 0 : index
    %c0_104 = arith.constant 0 : index
    %79 = vector.load %arg5[%c0_103, %c0_104] : memref<1x32xf32, #tpu.memory_space<vmem>>, vector<1x32xf32>
    %80 = vector.broadcast %79 : vector<1x32xf32> to vector<256x32xf32>
    %81 = arith.addf %78, %80 : vector<256x32xf32>
    %cst_105 = arith.constant 0.000000e+00 : f32
    %82 = vector.broadcast %cst_105 : f32 to vector<256x32xf32>
    %83 = arith.cmpf oge, %81, %82 : vector<256x32xf32>
    %cst_106 = arith.constant 2.000000e-01 : f32
    %84 = vector.broadcast %cst_106 : f32 to vector<256x32xf32>
    %85 = arith.mulf %84, %81 : vector<256x32xf32>
    %86 = arith.select %83, %81, %85 : vector<256x32xi1>, vector<256x32xf32>
    %c0_107 = arith.constant 0 : index
    %c0_108 = arith.constant 0 : index
    %c0_109 = arith.constant 0 : index
    %87 = vector.load %arg6[%c0_107, %c0_108, %c0_109] : memref<1x256x32xf32, #tpu.memory_space<vmem>>, vector<1x256x32xf32>
    %88 = vector.shape_cast %87 : vector<1x256x32xf32> to vector<256x32xf32>
    %89 = vector.shape_cast %86 : vector<256x32xf32> to vector<1x256x32xf32>
    tpu.vector_store %arg6[%c0_107, %c0_108, %c0_109], %89 {strides = array<i32>} : memref<1x256x32xf32, #tpu.memory_space<vmem>>, vector<1x256x32xf32>,
    return
  }
  func.func @transform_0(%arg0: i32) -> (i32, i32, i32, i32) {
    %c0_i32 = arith.constant 0 : i32
    %c0_i32_0 = arith.constant 0 : i32
    %c0_i32_1 = arith.constant 0 : i32
    %c0_i32_2 = arith.constant 0 : i32
    return %arg0, %c0_i32, %c0_i32_0, %c0_i32_1 : i32, i32, i32, i32
  }
  func.func @transform_1(%arg0: i32) -> (i32, i32) {
    %c0_i32 = arith.constant 0 : i32
    %c0_i32_0 = arith.constant 0 : i32
    %c0_i32_1 = arith.constant 0 : i32
    return %c0_i32, %c0_i32_0 : i32, i32
  }
  func.func @transform_2(%arg0: i32) -> (i32, i32) {
    %c0_i32 = arith.constant 0 : i32
    %c0_i32_0 = arith.constant 0 : i32
    %c0_i32_1 = arith.constant 0 : i32
    return %c0_i32, %c0_i32_0 : i32, i32
  }
  func.func @transform_3(%arg0: i32) -> (i32, i32) {
    %c0_i32 = arith.constant 0 : i32
    %c0_i32_0 = arith.constant 0 : i32
    %c0_i32_1 = arith.constant 0 : i32
    return %c0_i32, %c0_i32_0 : i32, i32
  }
  func.func @transform_4(%arg0: i32) -> (i32, i32) {
    %c0_i32 = arith.constant 0 : i32
    %c0_i32_0 = arith.constant 0 : i32
    %c0_i32_1 = arith.constant 0 : i32
    return %c0_i32, %c0_i32_0 : i32, i32
  }
  func.func @transform_5(%arg0: i32) -> (i32, i32, i32) {
    %c0_i32 = arith.constant 0 : i32
    %c0_i32_0 = arith.constant 0 : i32
    %c0_i32_1 = arith.constant 0 : i32
    return %arg0, %c0_i32, %c0_i32_0 : i32, i32, i32
  }
}

</mosaic_0001>

<llo_original>
// kernel: tpu_custom_call.1
$region0: #{tpu_custom_call.1}
  #allocation0 [shape = 'u32[]', space=smem, size = 0x4, offset = 0x4, fixed_abs, tag = 'smem constant byte address 0x4 - core index']
  #allocation1 [shape = 'u32[72,128]{1,0:T(1,128)}', space=vmem, size = 0x9000, scoped, tag = 'internal scratch']
  #allocation2 [shape = 'f32[18,18,4]{2,1,0:T(8,128)}', space=vmem, size = 0x36000, scoped, tag = 'scratch operand']
  #allocation3 [shape = 'f32[256,36]{1,0:T(8,128)}', space=vmem, size = 0x20000, scoped, tag = 'scratch operand']
  #allocation4 [shape = 'f32[18,18,32]{2,1,0:T(8,128)}', space=vmem, size = 0x36000, scoped, tag = 'scratch operand']
  #allocation5 [shape = 'f32[256,288]{1,0:T(8,128)}', space=vmem, size = 0x60000, scoped, tag = 'scratch operand']
  %s0 = inlined_call_operand.vmem [shape: f32[2,16,16,4], index: 0, kind: input, shape index: {}]
  %s1 = inlined_call_operand.vmem [shape: bf16[36,32], index: 1, kind: input, shape index: {}]
  %s2 = inlined_call_operand.vmem [shape: f32[1,32], index: 2, kind: input, shape index: {}]
  %s3 = inlined_call_operand.vmem [shape: bf16[288,32], index: 3, kind: input, shape index: {}]
  %s4 = inlined_call_operand.vmem [shape: f32[1,32], index: 4, kind: input, shape index: {}]
  %s5 = inlined_call_operand.vmem [shape: f32[2,256,32], index: 5, kind: output, shape index: {}]
  %s6 = sld [smem:[#allocation0]]
  $region53: #{tpu_custom_call.1} parent=0
    _
  %s8 = ssub.s32 1, %s6
  %s9 = scalar_select 0, %s8, %s6
  loop: start=0, step=1, limit=4
  $region2: #{tpu_custom_call.1} parent=0 // loop_pre_header
    _
  $region3: #{tpu_custom_call.1} parent=0 // loop_header
    %s11 = sphi 0, %s15
    %p12 = scmp.ge.s32.totalorder %s11, 4
    %s21 = sphi 0, %s23
    %s24 = sphi 0, %s21
    %s25 = sphi 0, %s24
    %s41 = sphi 0, %s25
    %s45 = sphi 0, %s45
    %s47 = sphi 0, %s45
    %s48 = sphi 0, %s47
    %s62 = sphi 0, %s48
    %s66 = sphi 0, %s66
    %s68 = sphi 0, %s66
    %s69 = sphi 0, %s68
    %s83 = sphi 0, %s69
    %s87 = sphi 0, %s87
    %s89 = sphi 0, %s87
    %s90 = sphi 0, %s89
    %s104 = sphi 0, %s90
    %s108 = sphi 0, %s108
    %s110 = sphi 0, %s108
    %s111 = sphi 0, %s110
    %s125 = sphi 0, %s111
    %s131 = sphi 0, %s133
    %s134 = sphi 0, %s131
    %s135 = sphi 0, %s134
    %s151 = sphi 0, %s135
  $region4: #{tpu_custom_call.1} parent=0 // loop_header_branch
    %14 = sbr.rel (%p12) target = $region8
  $region5: #{tpu_custom_call.1} parent=0 // loop_body
    %s16 = ssub.s32 %s11, 1
    %s17 = ssub.s32 %s11, 2
    %s18 = sadd.s32 %s11, 1
    %s19 = ssub.s32 %s11, %s18
    %p20 = scmp.eq.s32.totalorder %s19, 0
    %s22 = sadd.s32 %s21, 1
    %s23 = scalar_select %p20, %s21, %s22
    %p26 = pneg %p20
    %p27 = scmp.eq.s32.totalorder %s11, 1
    %p28 = por %p26, %p27
    %p29 = scmp.ne.s32.totalorder %s21, %s24
    %p30 = scmp.eq.s32.totalorder %s11, 0
    %p31 = por %p29, %p30
    %p32 = scmp.ne.s32.totalorder %s21, %s24
    %p33 = scmp.eq.s32.totalorder %s16, 1
    %p34 = por %p32, %p33
    %p35 = scmp.ne.s32.totalorder %s24, %s25
    %p36 = scmp.eq.s32.totalorder %s16, 0
    %p37 = por %p35, %p36
    %p38 = scmp.ne.s32.totalorder %s24, %s25
    %p39 = scmp.eq.s32.totalorder %s17, 1
    %p40 = por %p38, %p39
    %p42 = scmp.ne.s32.totalorder %s25, %s41
    %p43 = scmp.eq.s32.totalorder %s17, 0
    %p44 = por %p42, %p43
    %s46 = sadd.s32 %s45, 1
    %p49 = scmp.eq.s32.totalorder %s11, 1
    %p50 = scmp.ne.s32.totalorder %s45, %s47
    %p51 = scmp.eq.s32.totalorder %s11, 0
    %p52 = por %p50, %p51
    %p53 = scmp.ne.s32.totalorder %s45, %s47
    %p54 = scmp.eq.s32.totalorder %s16, 1
    %p55 = por %p53, %p54
    %p56 = scmp.ne.s32.totalorder %s47, %s48
    %p57 = scmp.eq.s32.totalorder %s16, 0
    %p58 = por %p56, %p57
    %p59 = scmp.ne.s32.totalorder %s47, %s48
    %p60 = scmp.eq.s32.totalorder %s17, 1
    %p61 = por %p59, %p60
    %p63 = scmp.ne.s32.totalorder %s48, %s62
    %p64 = scmp.eq.s32.totalorder %s17, 0
    %p65 = por %p63, %p64
    %s67 = sadd.s32 %s66, 1
    %p70 = scmp.eq.s32.totalorder %s11, 1
    %p71 = scmp.ne.s32.totalorder %s66, %s68
    %p72 = scmp.eq.s32.totalorder %s11, 0
    %p73 = por %p71, %p72
    %p74 = scmp.ne.s32.totalorder %s66, %s68
    %p75 = scmp.eq.s32.totalorder %s16, 1
    %p76 = por %p74, %p75
    %p77 = scmp.ne.s32.totalorder %s68, %s69
    %p78 = scmp.eq.s32.totalorder %s16, 0
    %p79 = por %p77, %p78
    %p80 = scmp.ne.s32.totalorder %s68, %s69
    %p81 = scmp.eq.s32.totalorder %s17, 1
    %p82 = por %p80, %p81
    %p84 = scmp.ne.s32.totalorder %s69, %s83
    %p85 = scmp.eq.s32.totalorder %s17, 0
    %p86 = por %p84, %p85
    %s88 = sadd.s32 %s87, 1
    %p91 = scmp.eq.s32.totalorder %s11, 1
    %p92 = scmp.ne.s32.totalorder %s87, %s89
    %p93 = scmp.eq.s32.totalorder %s11, 0
    %p94 = por %p92, %p93
    %p95 = scmp.ne.s32.totalorder %s87, %s89
    %p96 = scmp.eq.s32.totalorder %s16, 1
    %p97 = por %p95, %p96
    %p98 = scmp.ne.s32.totalorder %s89, %s90
    %p99 = scmp.eq.s32.totalorder %s16, 0
    %p100 = por %p98, %p99
    %p101 = scmp.ne.s32.totalorder %s89, %s90
    %p102 = scmp.eq.s32.totalorder %s17, 1
    %p103 = por %p101, %p102
    %p105 = scmp.ne.s32.totalorder %s90, %s104
    %p106 = scmp.eq.s32.totalorder %s17, 0
    %p107 = por %p105, %p106
    %s109 = sadd.s32 %s108, 1
    %p112 = scmp.eq.s32.totalorder %s11, 1
    %p113 = scmp.ne.s32.totalorder %s108, %s110
    %p114 = scmp.eq.s32.totalorder %s11, 0
    %p115 = por %p113, %p114
    %p116 = scmp.ne.s32.totalorder %s108, %s110
    %p117 = scmp.eq.s32.totalorder %s16, 1
    %p118 = por %p116, %p117
    %p119 = scmp.ne.s32.totalorder %s110, %s111
    %p120 = scmp.eq.s32.totalorder %s16, 0
    %p121 = por %p119, %p120
    %p122 = scmp.ne.s32.totalorder %s110, %s111
    %p123 = scmp.eq.s32.totalorder %s17, 1
    %p124 = por %p122, %p123
    %p126 = scmp.ne.s32.totalorder %s111, %s125
    %p127 = scmp.eq.s32.totalorder %s17, 0
    %p128 = por %p126, %p127
    %s129 = ssub.s32 %s11, %s18
    %p130 = scmp.eq.s32.totalorder %s129, 0
    %s132 = sadd.s32 %s131, 1
    %s133 = scalar_select %p130, %s131, %s132
    %p136 = pneg %p130
    %p137 = scmp.eq.s32.totalorder %s11, 1
    %p138 = por %p136, %p137
    %p139 = scmp.ne.s32.totalorder %s131, %s134
    %p140 = scmp.eq.s32.totalorder %s11, 0
    %p141 = por %p139, %p140
    %p142 = scmp.ne.s32.totalorder %s131, %s134
    %p143 = scmp.eq.s32.totalorder %s16, 1
    %p144 = por %p142, %p143
    %p145 = scmp.ne.s32.totalorder %s134, %s135
    %p146 = scmp.eq.s32.totalorder %s16, 0
    %p147 = por %p145, %p146
    %p148 = scmp.ne.s32.totalorder %s134, %s135
    %p149 = scmp.eq.s32.totalorder %s17, 1
    %p150 = por %p148, %p149
    %p152 = scmp.ne.s32.totalorder %s135, %s151
    %p153 = scmp.eq.s32.totalorder %s17, 0
    %p154 = por %p152, %p153
    %p155 = scmp.le.s32.totalorder 1, %s11
    %p156 = scmp.lt.s32.totalorder %s11, 3
    %p157 = pnand %p155, %p156
    %p158 = pneg %p157
    // Predicated region
    $region9: #{tpu_custom_call.1} parent=5 // pred_check
      _
    $region10: #{tpu_custom_call.1} parent=5 // pred_check_branch
      %160 = sbr.rel (%p157) target = $region12
    $region11: #{tpu_custom_call.1} parent=5 // pred_region
      %s161 = ssub.s32 %s11, 1
      // Predicated region
      $region13: #{tpu_custom_call.1} parent=11 // pred_check
        %p162 = pneg %p58
      $region14: #{tpu_custom_call.1} parent=11 // pred_check_branch
        %164 = sbr.rel (%p162) target = $region16
      $region15: #{tpu_custom_call.1} parent=11 // pred_region
        _
      $region16: #{tpu_custom_call.1} parent=11 // pred_fallthru
        _
      // Predicated region
      $region17: #{tpu_custom_call.1} parent=11 // pred_check
        %p165 = pneg %p79
      $region18: #{tpu_custom_call.1} parent=11 // pred_check_branch
        %167 = sbr.rel (%p165) target = $region20
      $region19: #{tpu_custom_call.1} parent=11 // pred_region
        _
      $region20: #{tpu_custom_call.1} parent=11 // pred_fallthru
        _
      // Predicated region
      $region21: #{tpu_custom_call.1} parent=11 // pred_check
        %p168 = pneg %p100
      $region22: #{tpu_custom_call.1} parent=11 // pred_check_branch
        %170 = sbr.rel (%p168) target = $region24
      $region23: #{tpu_custom_call.1} parent=11 // pred_region
        _
      $region24: #{tpu_custom_call.1} parent=11 // pred_fallthru
        _
      // Predicated region
      $region25: #{tpu_custom_call.1} parent=11 // pred_check
        %p171 = pneg %p121
      $region26: #{tpu_custom_call.1} parent=11 // pred_check_branch
        %173 = sbr.rel (%p171) target = $region28
      $region27: #{tpu_custom_call.1} parent=11 // pred_region
        _
      $region28: #{tpu_custom_call.1} parent=11 // pred_fallthru
        _
    $region12: #{tpu_custom_call.1} parent=5 // pred_fallthru
      _
    %p174 = scmp.lt.s32.totalorder %s11, 2
    // Predicated region
    $region29: #{tpu_custom_call.1} parent=5 // pred_check
      %p175 = pneg %p174
    $region30: #{tpu_custom_call.1} parent=5 // pred_check_branch
      %177 = sbr.rel (%p175) target = $region32
    $region31: #{tpu_custom_call.1} parent=5 // pred_region
      // Predicated region
      $region33: #{tpu_custom_call.1} parent=31 // pred_check
        %p178 = pneg %p31
      $region34: #{tpu_custom_call.1} parent=31 // pred_check_branch
        %180 = sbr.rel (%p178) target = $region36
      $region35: #{tpu_custom_call.1} parent=31 // pred_region
        %p181 = scmp.lt.s32.totalorder %s11, 1
        %s182 = scalar_select %p181, %s11, 1
        %s183 = smul.addr %s182, 32
        %s184 = smul.addr %s183, 8
        %s185 = scalar_lea.vmem %s0, %s184
      $region36: #{tpu_custom_call.1} parent=31 // pred_fallthru
        _
    $region32: #{tpu_custom_call.1} parent=5 // pred_fallthru
      _
    %p186 = scmp.le.s32.totalorder 1, %s11
    %p187 = scmp.lt.s32.totalorder %s11, 3
    %p188 = pnand %p186, %p187
    %p189 = pneg %p188
    // Predicated region
    $region37: #{tpu_custom_call.1} parent=5 // pred_check
      _
    $region38: #{tpu_custom_call.1} parent=5 // pred_check_branch
      %191 = sbr.rel (%p188) target = $region40
    $region39: #{tpu_custom_call.1} parent=5 // pred_region
      %s192 = ssub.s32 %s11, 1
      %p193 = scmp.lt.s32.totalorder %s16, 1
      %s194 = scalar_select %p193, %s16, 1
      %s195 = smul.addr %s194, 32
      %s196 = smul.addr %s195, 8
      %s197 = scalar_lea.vmem %s0, %s196
      %p198 = pneg %p37
      %p199 = pneg %p34
      %p200 = pneg %p58
      %p201 = pneg %p55
      %p202 = pneg %p79
      %p203 = pneg %p76
      %p204 = pneg %p100
      %p205 = pneg %p97
      %p206 = pneg %p121
      %p207 = pneg %p118
      %p208 = pneg %p147
      %p209 = pneg %p144
      %p210 = scmp.lt.s32.totalorder %s16, 1
      %s211 = scalar_select %p210, %s16, 1
      %s212 = smul.addr %s211, 32
      %s213 = smul.addr %s212, 8
      %s214 = scalar_lea.vmem %s5, %s213
      %p215 = scmp.lt.s32.totalorder %s16, 1
      %s216 = scalar_select %p215, %s16, 1
      %s217 = smul.addr %s216, 32
      %s218 = smul.addr %s217, 8
      %s219 = scalar_lea.vmem %s0, %s218
      %p220 = scmp.lt.s32.totalorder %s16, 1
      %s221 = scalar_select %p220, %s16, 1
      %s222 = smul.addr %s221, 32
      %s223 = smul.addr %s222, 8
      %s224 = scalar_lea.vmem %s5, %s223
      %vm226 = vcmask 31744
      %227 = vst.msk [vmem:[#allocation2] sm:$0xff] %vm226, 0.0
      %228 = vst.msk [vmem:[#allocation2 + $0x8] sm:$0xff] %vm226, 0.0
      %vm229 = vcmask 25600
      %230 = vst.msk [vmem:[#allocation2 + $0x10] sm:$0x3] %vm229, 0.0
      %231 = vst.msk [vmem:[#allocation2 + $0x18] sm:$0xff] %vm226, 0.0
      %232 = vst.msk [vmem:[#allocation2 + $0x20] sm:$0xff] %vm226, 0.0
      %233 = vst.msk [vmem:[#allocation2 + $0x28] sm:$0x3] %vm229, 0.0
      %234 = vst.msk [vmem:[#allocation2 + $0x30] sm:$0xff] %vm226, 0.0
      %235 = vst.msk [vmem:[#allocation2 + $0x38] sm:$0xff] %vm226, 0.0
      %236 = vst.msk [vmem:[#allocation2 + $0x40] sm:$0x3] %vm229, 0.0
      %237 = vst.msk [vmem:[#allocation2 + $0x48] sm:$0xff] %vm226, 0.0
      %238 = vst.msk [vmem:[#allocation2 + $0x50] sm:$0xff] %vm226, 0.0
      %239 = vst.msk [vmem:[#allocation2 + $0x58] sm:$0x3] %vm229, 0.0
      %240 = vst.msk [vmem:[#allocation2 + $0x60] sm:$0xff] %vm226, 0.0
      %241 = vst.msk [vmem:[#allocation2 + $0x68] sm:$0xff] %vm226, 0.0
      %242 = vst.msk [vmem:[#allocation2 + $0x70] sm:$0x3] %vm229, 0.0
      %243 = vst.msk [vmem:[#allocation2 + $0x78] sm:$0xff] %vm226, 0.0
      %244 = vst.msk [vmem:[#allocation2 + $0x80] sm:$0xff] %vm226, 0.0
      %245 = vst.msk [vmem:[#allocation2 + $0x88] sm:$0x3] %vm229, 0.0
      %246 = vst.msk [vmem:[#allocation2 + $0x90] sm:$0xff] %vm226, 0.0
      %247 = vst.msk [vmem:[#allocation2 + $0x98] sm:$0xff] %vm226, 0.0
      %248 = vst.msk [vmem:[#allocation2 + $0xa0] sm:$0x3] %vm229, 0.0
      %249 = vst.msk [vmem:[#allocation2 + $0xa8] sm:$0xff] %vm226, 0.0
      %250 = vst.msk [vmem:[#allocation2 + $0xb0] sm:$0xff] %vm226, 0.0
      %251 = vst.msk [vmem:[#allocation2 + $0xb8] sm:$0x3] %vm229, 0.0
      %252 = vst.msk [vmem:[#allocation2 + $0xc0] sm:$0xff] %vm226, 0.0
      %253 = vst.msk [vmem:[#allocation2 + $0xc8] sm:$0xff] %vm226, 0.0
      %254 = vst.msk [vmem:[#allocation2 + $0xd0] sm:$0x3] %vm229, 0.0
      %255 = vst.msk [vmem:[#allocation2 + $0xd8] sm:$0xff] %vm226, 0.0
      %256 = vst.msk [vmem:[#allocation2 + $0xe0] sm:$0xff] %vm226, 0.0
      %257 = vst.msk [vmem:[#allocation2 + $0xe8] sm:$0x3] %vm229, 0.0
      %258 = vst.msk [vmem:[#allocation2 + $0xf0] sm:$0xff] %vm226, 0.0
      %259 = vst.msk [vmem:[#allocation2 + $0xf8] sm:$0xff] %vm226, 0.0
      %260 = vst.msk [vmem:[#allocation2 + $0x100] sm:$0x3] %vm229, 0.0
      %261 = vst.msk [vmem:[#allocation2 + $0x108] sm:$0xff] %vm226, 0.0
      %262 = vst.msk [vmem:[#allocation2 + $0x110] sm:$0xff] %vm226, 0.0
      %263 = vst.msk [vmem:[#allocation2 + $0x118] sm:$0x3] %vm229, 0.0
      %264 = vst.msk [vmem:[#allocation2 + $0x120] sm:$0xff] %vm226, 0.0
      %265 = vst.msk [vmem:[#allocation2 + $0x128] sm:$0xff] %vm226, 0.0
      %266 = vst.msk [vmem:[#allocation2 + $0x130] sm:$0x3] %vm229, 0.0
      %267 = vst.msk [vmem:[#allocation2 + $0x138] sm:$0xff] %vm226, 0.0
      %268 = vst.msk [vmem:[#allocation2 + $0x140] sm:$0xff] %vm226, 0.0
      %269 = vst.msk [vmem:[#allocation2 + $0x148] sm:$0x3] %vm229, 0.0
      %270 = vst.msk [vmem:[#allocation2 + $0x150] sm:$0xff] %vm226, 0.0
      %271 = vst.msk [vmem:[#allocation2 + $0x158] sm:$0xff] %vm226, 0.0
      %272 = vst.msk [vmem:[#allocation2 + $0x160] sm:$0x3] %vm229, 0.0
      %273 = vst.msk [vmem:[#allocation2 + $0x168] sm:$0xff] %vm226, 0.0
      %274 = vst.msk [vmem:[#allocation2 + $0x170] sm:$0xff] %vm226, 0.0
      %275 = vst.msk [vmem:[#allocation2 + $0x178] sm:$0x3] %vm229, 0.0
      %276 = vst.msk [vmem:[#allocation2 + $0x180] sm:$0xff] %vm226, 0.0
      %277 = vst.msk [vmem:[#allocation2 + $0x188] sm:$0xff] %vm226, 0.0
      %278 = vst.msk [vmem:[#allocation2 + $0x190] sm:$0x3] %vm229, 0.0
      %279 = vst.msk [vmem:[#allocation2 + $0x198] sm:$0xff] %vm226, 0.0
      %280 = vst.msk [vmem:[#allocation2 + $0x1a0] sm:$0xff] %vm226, 0.0
      %281 = vst.msk [vmem:[#allocation2 + $0x1a8] sm:$0x3] %vm229, 0.0
      %v282 = vld [vmem:[%s219] sm:$0xff]
      %v283 = vld [vmem:[%s219 + $0x8] sm:$0xff]
      %v284 = vld [vmem:[%s219 + $0x10] sm:$0xff]
      %v285 = vld [vmem:[%s219 + $0x18] sm:$0xff]
      %v286 = vld [vmem:[%s219 + $0x20] sm:$0xff]
      %v287 = vld [vmem:[%s219 + $0x28] sm:$0xff]
      %v288 = vld [vmem:[%s219 + $0x30] sm:$0xff]
      %v289 = vld [vmem:[%s219 + $0x38] sm:$0xff]
      %v290 = vld [vmem:[%s219 + $0x40] sm:$0xff]
      %v291 = vld [vmem:[%s219 + $0x48] sm:$0xff]
      %v292 = vld [vmem:[%s219 + $0x50] sm:$0xff]
      %v293 = vld [vmem:[%s219 + $0x58] sm:$0xff]
      %v294 = vld [vmem:[%s219 + $0x60] sm:$0xff]
      %v295 = vld [vmem:[%s219 + $0x68] sm:$0xff]
      %v296 = vld [vmem:[%s219 + $0x70] sm:$0xff]
      %v297 = vld [vmem:[%s219 + $0x78] sm:$0xff]
      %v298 = vld [vmem:[%s219 + $0x80] sm:$0xff]
      %v299 = vld [vmem:[%s219 + $0x88] sm:$0xff]
      %v300 = vld [vmem:[%s219 + $0x90] sm:$0xff]
      %v301 = vld [vmem:[%s219 + $0x98] sm:$0xff]
      %v302 = vld [vmem:[%s219 + $0xa0] sm:$0xff]
      %v303 = vld [vmem:[%s219 + $0xa8] sm:$0xff]
      %v304 = vld [vmem:[%s219 + $0xb0] sm:$0xff]
      %v305 = vld [vmem:[%s219 + $0xb8] sm:$0xff]
      %v306 = vld [vmem:[%s219 + $0xc0] sm:$0xff]
      %v307 = vld [vmem:[%s219 + $0xc8] sm:$0xff]
      %v308 = vld [vmem:[%s219 + $0xd0] sm:$0xff]
      %v309 = vld [vmem:[%s219 + $0xd8] sm:$0xff]
      %v310 = vld [vmem:[%s219 + $0xe0] sm:$0xff]
      %v311 = vld [vmem:[%s219 + $0xe8] sm:$0xff]
      %v312 = vld [vmem:[%s219 + $0xf0] sm:$0xff]
      %v313 = vld [vmem:[%s219 + $0xf8] sm:$0xff]
      %s314 = scalar_lea.vmem [#allocation2], 24
      %315 = vst.msk [vmem:[%s314 + $0x1] sm:$0xff] %vm226, %v282
      %316 = vst.msk [vmem:[%s314 + $0x9] sm:$0xff] %vm226, %v283
      %317 = vst.msk [vmem:[%s314 + $0x19] sm:$0xff] %vm226, %v284
      %318 = vst.msk [vmem:[%s314 + $0x21] sm:$0xff] %vm226, %v285
      %319 = vst.msk [vmem:[%s314 + $0x31] sm:$0xff] %vm226, %v286
      %320 = vst.msk [vmem:[%s314 + $0x39] sm:$0xff] %vm226, %v287
      %321 = vst.msk [vmem:[%s314 + $0x49] sm:$0xff] %vm226, %v288
      %322 = vst.msk [vmem:[%s314 + $0x51] sm:$0xff] %vm226, %v289
      %323 = vst.msk [vmem:[%s314 + $0x61] sm:$0xff] %vm226, %v290
      %324 = vst.msk [vmem:[%s314 + $0x69] sm:$0xff] %vm226, %v291
      %325 = vst.msk [vmem:[%s314 + $0x79] sm:$0xff] %vm226, %v292
      %326 = vst.msk [vmem:[%s314 + $0x81] sm:$0xff] %vm226, %v293
      %327 = vst.msk [vmem:[%s314 + $0x91] sm:$0xff] %vm226, %v294
      %328 = vst.msk [vmem:[%s314 + $0x99] sm:$0xff] %vm226, %v295
      %329 = vst.msk [vmem:[%s314 + $0xa9] sm:$0xff] %vm226, %v296
      %330 = vst.msk [vmem:[%s314 + $0xb1] sm:$0xff] %vm226, %v297
      %331 = vst.msk [vmem:[%s314 + $0xc1] sm:$0xff] %vm226, %v298
      %332 = vst.msk [vmem:[%s314 + $0xc9] sm:$0xff] %vm226, %v299
      %333 = vst.msk [vmem:[%s314 + $0xd9] sm:$0xff] %vm226, %v300
      %334 = vst.msk [vmem:[%s314 + $0xe1] sm:$0xff] %vm226, %v301
      %335 = vst.msk [vmem:[%s314 + $0xf1] sm:$0xff] %vm226, %v302
      %336 = vst.msk [vmem:[%s314 + $0xf9] sm:$0xff] %vm226, %v303
      %337 = vst.msk [vmem:[%s314 + $0x109] sm:$0xff] %vm226, %v304
      %338 = vst.msk [vmem:[%s314 + $0x111] sm:$0xff] %vm226, %v305
      %339 = vst.msk [vmem:[%s314 + $0x121] sm:$0xff] %vm226, %v306
      %340 = vst.msk [vmem:[%s314 + $0x129] sm:$0xff] %vm226, %v307
      %341 = vst.msk [vmem:[%s314 + $0x139] sm:$0xff] %vm226, %v308
      %342 = vst.msk [vmem:[%s314 + $0x141] sm:$0xff] %vm226, %v309
      %343 = vst.msk [vmem:[%s314 + $0x151] sm:$0xff] %vm226, %v310
      %344 = vst.msk [vmem:[%s314 + $0x159] sm:$0xff] %vm226, %v311
      %345 = vst.msk [vmem:[%s314 + $0x169] sm:$0xff] %vm226, %v312
      %346 = vst.msk [vmem:[%s314 + $0x171] sm:$0xff] %vm226, %v313
      %v347 = vld [vmem:[#allocation2] sm:$0xff]
      %v348 = vld [vmem:[#allocation2 + $0x8] sm:$0xff]
      %v349 = vld [vmem:[#allocation2 + $0x18] sm:$0xff]
      %v350 = vld [vmem:[#allocation2 + $0x20] sm:$0xff]
      %v351 = vld [vmem:[#allocation2 + $0x30] sm:$0xff]
      %v352 = vld [vmem:[#allocation2 + $0x38] sm:$0xff]
      %v353 = vld [vmem:[#allocation2 + $0x48] sm:$0xff]
      %v354 = vld [vmem:[#allocation2 + $0x50] sm:$0xff]
      %v355 = vld [vmem:[#allocation2 + $0x60] sm:$0xff]
      %v356 = vld [vmem:[#allocation2 + $0x68] sm:$0xff]
      %v357 = vld [vmem:[#allocation2 + $0x78] sm:$0xff]
      %v358 = vld [vmem:[#allocation2 + $0x80] sm:$0xff]
      %v359 = vld [vmem:[#allocation2 + $0x90] sm:$0xff]
      %v360 = vld [vmem:[#allocation2 + $0x98] sm:$0xff]
      %v361 = vld [vmem:[#allocation2 + $0xa8] sm:$0xff]
      %v362 = vld [vmem:[#allocation2 + $0xb0] sm:$0xff]
      %v363 = vld [vmem:[#allocation2 + $0xc0] sm:$0xff]
      %v364 = vld [vmem:[#allocation2 + $0xc8] sm:$0xff]
      %v365 = vld [vmem:[#allocation2 + $0xd8] sm:$0xff]
      %v366 = vld [vmem:[#allocation2 + $0xe0] sm:$0xff]
      %v367 = vld [vmem:[#allocation2 + $0xf0] sm:$0xff]
      %v368 = vld [vmem:[#allocation2 + $0xf8] sm:$0xff]
      %v369 = vld [vmem:[#allocation2 + $0x108] sm:$0xff]
      %v370 = vld [vmem:[#allocation2 + $0x110] sm:$0xff]
      %v371 = vld [vmem:[#allocation2 + $0x120] sm:$0xff]
      %v372 = vld [vmem:[#allocation2 + $0x128] sm:$0xff]
      %v373 = vld [vmem:[#allocation2 + $0x138] sm:$0xff]
      %v374 = vld [vmem:[#allocation2 + $0x140] sm:$0xff]
      %v375 = vld [vmem:[#allocation2 + $0x150] sm:$0xff]
      %v376 = vld [vmem:[#allocation2 + $0x158] sm:$0xff]
      %v377 = vld [vmem:[#allocation2 + $0x168] sm:$0xff]
      %v378 = vld [vmem:[#allocation2 + $0x170] sm:$0xff]
      %379 = vst.msk [vmem:[#allocation3] sm:$0xff] %vm226, %v347
      %380 = vst.msk [vmem:[#allocation3 + $0x8] sm:$0xff] %vm226, %v348
      %381 = vst.msk [vmem:[#allocation3 + $0x10] sm:$0xff] %vm226, %v349
      %382 = vst.msk [vmem:[#allocation3 + $0x18] sm:$0xff] %vm226, %v350
      %383 = vst.msk [vmem:[#allocation3 + $0x20] sm:$0xff] %vm226, %v351
      %384 = vst.msk [vmem:[#allocation3 + $0x28] sm:$0xff] %vm226, %v352
      %385 = vst.msk [vmem:[#allocation3 + $0x30] sm:$0xff] %vm226, %v353
      %386 = vst.msk [vmem:[#allocation3 + $0x38] sm:$0xff] %vm226, %v354
      %387 = vst.msk [vmem:[#allocation3 + $0x40] sm:$0xff] %vm226, %v355
      %388 = vst.msk [vmem:[#allocation3 + $0x48] sm:$0xff] %vm226, %v356
      %389 = vst.msk [vmem:[#allocation3 + $0x50] sm:$0xff] %vm226, %v357
      %390 = vst.msk [vmem:[#allocation3 + $0x58] sm:$0xff] %vm226, %v358
      %391 = vst.msk [vmem:[#allocation3 + $0x60] sm:$0xff] %vm226, %v359
      %392 = vst.msk [vmem:[#allocation3 + $0x68] sm:$0xff] %vm226, %v360
      %393 = vst.msk [vmem:[#allocation3 + $0x70] sm:$0xff] %vm226, %v361
      %394 = vst.msk [vmem:[#allocation3 + $0x78] sm:$0xff] %vm226, %v362
      %395 = vst.msk [vmem:[#allocation3 + $0x80] sm:$0xff] %vm226, %v363
      %396 = vst.msk [vmem:[#allocation3 + $0x88] sm:$0xff] %vm226, %v364
      %397 = vst.msk [vmem:[#allocation3 + $0x90] sm:$0xff] %vm226, %v365
      %398 = vst.msk [vmem:[#allocation3 + $0x98] sm:$0xff] %vm226, %v366
      %399 = vst.msk [vmem:[#allocation3 + $0xa0] sm:$0xff] %vm226, %v367
      %400 = vst.msk [vmem:[#allocation3 + $0xa8] sm:$0xff] %vm226, %v368
      %401 = vst.msk [vmem:[#allocation3 + $0xb0] sm:$0xff] %vm226, %v369
      %402 = vst.msk [vmem:[#allocation3 + $0xb8] sm:$0xff] %vm226, %v370
      %403 = vst.msk [vmem:[#allocation3 + $0xc0] sm:$0xff] %vm226, %v371
      %404 = vst.msk [vmem:[#allocation3 + $0xc8] sm:$0xff] %vm226, %v372
      %405 = vst.msk [vmem:[#allocation3 + $0xd0] sm:$0xff] %vm226, %v373
      %406 = vst.msk [vmem:[#allocation3 + $0xd8] sm:$0xff] %vm226, %v374
      %407 = vst.msk [vmem:[#allocation3 + $0xe0] sm:$0xff] %vm226, %v375
      %408 = vst.msk [vmem:[#allocation3 + $0xe8] sm:$0xff] %vm226, %v376
      %409 = vst.msk [vmem:[#allocation3 + $0xf0] sm:$0xff] %vm226, %v377
      %410 = vst.msk [vmem:[#allocation3 + $0xf8] sm:$0xff] %vm226, %v378
      %v411 = vld [vmem:[#allocation2 + $0x1] sm:$0xff]
      %v412 = vld [vmem:[#allocation2 + $0x9] sm:$0xff]
      %v413 = vld [vmem:[#allocation2 + $0x19] sm:$0xff]
      %v414 = vld [vmem:[#allocation2 + $0x21] sm:$0xff]
      %v415 = vld [vmem:[#allocation2 + $0x31] sm:$0xff]
      %v416 = vld [vmem:[#allocation2 + $0x39] sm:$0xff]
      %v417 = vld [vmem:[#allocation2 + $0x49] sm:$0xff]
      %v418 = vld [vmem:[#allocation2 + $0x51] sm:$0xff]
      %v419 = vld [vmem:[#allocation2 + $0x61] sm:$0xff]
      %v420 = vld [vmem:[#allocation2 + $0x69] sm:$0xff]
      %v421 = vld [vmem:[#allocation2 + $0x79] sm:$0xff]
      %v422 = vld [vmem:[#allocation2 + $0x81] sm:$0xff]
      %v423 = vld [vmem:[#allocation2 + $0x91] sm:$0xff]
      %v424 = vld [vmem:[#allocation2 + $0x99] sm:$0xff]
      %v425 = vld [vmem:[#allocation2 + $0xa9] sm:$0xff]
      %v426 = vld [vmem:[#allocation2 + $0xb1] sm:$0xff]
      %v427 = vld [vmem:[#allocation2 + $0xc1] sm:$0xff]
      %v428 = vld [vmem:[#allocation2 + $0xc9] sm:$0xff]
      %v429 = vld [vmem:[#allocation2 + $0xd9] sm:$0xff]
      %v430 = vld [vmem:[#allocation2 + $0xe1] sm:$0xff]
      %v431 = vld [vmem:[#allocation2 + $0xf1] sm:$0xff]
      %v432 = vld [vmem:[#allocation2 + $0xf9] sm:$0xff]
      %v433 = vld [vmem:[#allocation2 + $0x109] sm:$0xff]
      %v434 = vld [vmem:[#allocation2 + $0x111] sm:$0xff]
      %v435 = vld [vmem:[#allocation2 + $0x121] sm:$0xff]
      %v436 = vld [vmem:[#allocation2 + $0x129] sm:$0xff]
      %v437 = vld [vmem:[#allocation2 + $0x139] sm:$0xff]
      %v438 = vld [vmem:[#allocation2 + $0x141] sm:$0xff]
      %v439 = vld [vmem:[#allocation2 + $0x151] sm:$0xff]
      %v440 = vld [vmem:[#allocation2 + $0x159] sm:$0xff]
      %v441 = vld [vmem:[#allocation2 + $0x169] sm:$0xff]
      %v442 = vld [vmem:[#allocation2 + $0x171] sm:$0xff]
      %475 = vrot.lane.b32.xlu0 %v411, 4
      %v476 = vpop.permute.xlu0 %475
      %477 = vrot.lane.b32.xlu0 %v412, 4
      %v478 = vpop.permute.xlu0 %477
      %479 = vrot.lane.b32.xlu0 %v413, 4
      %v480 = vpop.permute.xlu0 %479
      %481 = vrot.lane.b32.xlu0 %v414, 4
      %v482 = vpop.permute.xlu0 %481
      %483 = vrot.lane.b32.xlu0 %v415, 4
      %v484 = vpop.permute.xlu0 %483
      %485 = vrot.lane.b32.xlu0 %v416, 4
      %v486 = vpop.permute.xlu0 %485
      %487 = vrot.lane.b32.xlu0 %v417, 4
      %v488 = vpop.permute.xlu0 %487
      %489 = vrot.lane.b32.xlu0 %v418, 4
      %v490 = vpop.permute.xlu0 %489
      %491 = vrot.lane.b32.xlu0 %v419, 4
      %v492 = vpop.permute.xlu0 %491
      %493 = vrot.lane.b32.xlu0 %v420, 4
      %v494 = vpop.permute.xlu0 %493
      %495 = vrot.lane.b32.xlu0 %v421, 4
      %v496 = vpop.permute.xlu0 %495
      %497 = vrot.lane.b32.xlu0 %v422, 4
      %v498 = vpop.permute.xlu0 %497
      %499 = vrot.lane.b32.xlu0 %v423, 4
      %v500 = vpop.permute.xlu0 %499
      %501 = vrot.lane.b32.xlu0 %v424, 4
      %v502 = vpop.permute.xlu0 %501
      %503 = vrot.lane.b32.xlu0 %v425, 4
      %v504 = vpop.permute.xlu0 %503
      %505 = vrot.lane.b32.xlu0 %v426, 4
      %v506 = vpop.permute.xlu0 %505
      %507 = vrot.lane.b32.xlu0 %v427, 4
      %v508 = vpop.permute.xlu0 %507
      %509 = vrot.lane.b32.xlu0 %v428, 4
      %v510 = vpop.permute.xlu0 %509
      %511 = vrot.lane.b32.xlu0 %v429, 4
      %v512 = vpop.permute.xlu0 %511
      %513 = vrot.lane.b32.xlu0 %v430, 4
      %v514 = vpop.permute.xlu0 %513
      %515 = vrot.lane.b32.xlu0 %v431, 4
      %v516 = vpop.permute.xlu0 %515
      %517 = vrot.lane.b32.xlu0 %v432, 4
      %v518 = vpop.permute.xlu0 %517
      %519 = vrot.lane.b32.xlu0 %v433, 4
      %v520 = vpop.permute.xlu0 %519
      %521 = vrot.lane.b32.xlu0 %v434, 4
      %v522 = vpop.permute.xlu0 %521
      %523 = vrot.lane.b32.xlu0 %v435, 4
      %v524 = vpop.permute.xlu0 %523
      %525 = vrot.lane.b32.xlu0 %v436, 4
      %v526 = vpop.permute.xlu0 %525
      %527 = vrot.lane.b32.xlu0 %v437, 4
      %v528 = vpop.permute.xlu0 %527
      %529 = vrot.lane.b32.xlu0 %v438, 4
      %v530 = vpop.permute.xlu0 %529
      %531 = vrot.lane.b32.xlu0 %v439, 4
      %v532 = vpop.permute.xlu0 %531
      %533 = vrot.lane.b32.xlu0 %v440, 4
      %v534 = vpop.permute.xlu0 %533
      %535 = vrot.lane.b32.xlu0 %v441, 4
      %v536 = vpop.permute.xlu0 %535
      %537 = vrot.lane.b32.xlu0 %v442, 4
      %v538 = vpop.permute.xlu0 %537
      %vm571 = vcmask 64544
      %572 = vst.msk [vmem:[#allocation3] sm:$0xff] %vm571, %v476
      %573 = vst.msk [vmem:[#allocation3 + $0x8] sm:$0xff] %vm571, %v478
      %574 = vst.msk [vmem:[#allocation3 + $0x10] sm:$0xff] %vm571, %v480
      %575 = vst.msk [vmem:[#allocation3 + $0x18] sm:$0xff] %vm571, %v482
      %576 = vst.msk [vmem:[#allocation3 + $0x20] sm:$0xff] %vm571, %v484
      %577 = vst.msk [vmem:[#allocation3 + $0x28] sm:$0xff] %vm571, %v486
      %578 = vst.msk [vmem:[#allocation3 + $0x30] sm:$0xff] %vm571, %v488
      %579 = vst.msk [vmem:[#allocation3 + $0x38] sm:$0xff] %vm571, %v490
      %580 = vst.msk [vmem:[#allocation3 + $0x40] sm:$0xff] %vm571, %v492
      %581 = vst.msk [vmem:[#allocation3 + $0x48] sm:$0xff] %vm571, %v494
      %582 = vst.msk [vmem:[#allocation3 + $0x50] sm:$0xff] %vm571, %v496
      %583 = vst.msk [vmem:[#allocation3 + $0x58] sm:$0xff] %vm571, %v498
      %584 = vst.msk [vmem:[#allocation3 + $0x60] sm:$0xff] %vm571, %v500
      %585 = vst.msk [vmem:[#allocation3 + $0x68] sm:$0xff] %vm571, %v502
      %586 = vst.msk [vmem:[#allocation3 + $0x70] sm:$0xff] %vm571, %v504
      %587 = vst.msk [vmem:[#allocation3 + $0x78] sm:$0xff] %vm571, %v506
      %588 = vst.msk [vmem:[#allocation3 + $0x80] sm:$0xff] %vm571, %v508
      %589 = vst.msk [vmem:[#allocation3 + $0x88] sm:$0xff] %vm571, %v510
      %590 = vst.msk [vmem:[#allocation3 + $0x90] sm:$0xff] %vm571, %v512
      %591 = vst.msk [vmem:[#allocation3 + $0x98] sm:$0xff] %vm571, %v514
      %592 = vst.msk [vmem:[#allocation3 + $0xa0] sm:$0xff] %vm571, %v516
      %593 = vst.msk [vmem:[#allocation3 + $0xa8] sm:$0xff] %vm571, %v518
      %594 = vst.msk [vmem:[#allocation3 + $0xb0] sm:$0xff] %vm571, %v520
      %595 = vst.msk [vmem:[#allocation3 + $0xb8] sm:$0xff] %vm571, %v522
      %596 = vst.msk [vmem:[#allocation3 + $0xc0] sm:$0xff] %vm571, %v524
      %597 = vst.msk [vmem:[#allocation3 + $0xc8] sm:$0xff] %vm571, %v526
      %598 = vst.msk [vmem:[#allocation3 + $0xd0] sm:$0xff] %vm571, %v528
      %599 = vst.msk [vmem:[#allocation3 + $0xd8] sm:$0xff] %vm571, %v530
      %600 = vst.msk [vmem:[#allocation3 + $0xe0] sm:$0xff] %vm571, %v532
      %601 = vst.msk [vmem:[#allocation3 + $0xe8] sm:$0xff] %vm571, %v534
      %602 = vst.msk [vmem:[#allocation3 + $0xf0] sm:$0xff] %vm571, %v536
      %603 = vst.msk [vmem:[#allocation3 + $0xf8] sm:$0xff] %vm571, %v538
      %v604 = vld [vmem:[#allocation2 + $0x2] sm:$0xff]
      %v605 = vld [vmem:[#allocation2 + $0xa] sm:$0xff]
      %v606 = vld [vmem:[#allocation2 + $0x1a] sm:$0xff]
      %v607 = vld [vmem:[#allocation2 + $0x22] sm:$0xff]
      %v608 = vld [vmem:[#allocation2 + $0x32] sm:$0xff]
      %v609 = vld [vmem:[#allocation2 + $0x3a] sm:$0xff]
      %v610 = vld [vmem:[#allocation2 + $0x4a] sm:$0xff]
      %v611 = vld [vmem:[#allocation2 + $0x52] sm:$0xff]
      %v612 = vld [vmem:[#allocation2 + $0x62] sm:$0xff]
      %v613 = vld [vmem:[#allocation2 + $0x6a] sm:$0xff]
      %v614 = vld [vmem:[#allocation2 + $0x7a] sm:$0xff]
      %v615 = vld [vmem:[#allocation2 + $0x82] sm:$0xff]
      %v616 = vld [vmem:[#allocation2 + $0x92] sm:$0xff]
      %v617 = vld [vmem:[#allocation2 + $0x9a] sm:$0xff]
      %v618 = vld [vmem:[#allocation2 + $0xaa] sm:$0xff]
      %v619 = vld [vmem:[#allocation2 + $0xb2] sm:$0xff]
      %v620 = vld [vmem:[#allocation2 + $0xc2] sm:$0xff]
      %v621 = vld [vmem:[#allocation2 + $0xca] sm:$0xff]
      %v622 = vld [vmem:[#allocation2 + $0xda] sm:$0xff]
      %v623 = vld [vmem:[#allocation2 + $0xe2] sm:$0xff]
      %v624 = vld [vmem:[#allocation2 + $0xf2] sm:$0xff]
      %v625 = vld [vmem:[#allocation2 + $0xfa] sm:$0xff]
      %v626 = vld [vmem:[#allocation2 + $0x10a] sm:$0xff]
      %v627 = vld [vmem:[#allocation2 + $0x112] sm:$0xff]
      %v628 = vld [vmem:[#allocation2 + $0x122] sm:$0xff]
      %v629 = vld [vmem:[#allocation2 + $0x12a] sm:$0xff]
      %v630 = vld [vmem:[#allocation2 + $0x13a] sm:$0xff]
      %v631 = vld [vmem:[#allocation2 + $0x142] sm:$0xff]
      %v632 = vld [vmem:[#allocation2 + $0x152] sm:$0xff]
      %v633 = vld [vmem:[#allocation2 + $0x15a] sm:$0xff]
      %v634 = vld [vmem:[#allocation2 + $0x16a] sm:$0xff]
      %v635 = vld [vmem:[#allocation2 + $0x172] sm:$0xff]
      %668 = vrot.lane.b32.xlu0 %v604, 8
      %v669 = vpop.permute.xlu0 %668
      %670 = vrot.lane.b32.xlu0 %v605, 8
      %v671 = vpop.permute.xlu0 %670
      %672 = vrot.lane.b32.xlu0 %v606, 8
      %v673 = vpop.permute.xlu0 %672
      %674 = vrot.lane.b32.xlu0 %v607, 8
      %v675 = vpop.permute.xlu0 %674
      %676 = vrot.lane.b32.xlu0 %v608, 8
      %v677 = vpop.permute.xlu0 %676
      %678 = vrot.lane.b32.xlu0 %v609, 8
      %v679 = vpop.permute.xlu0 %678
      %680 = vrot.lane.b32.xlu0 %v610, 8
      %v681 = vpop.permute.xlu0 %680
      %682 = vrot.lane.b32.xlu0 %v611, 8
      %v683 = vpop.permute.xlu0 %682
      %684 = vrot.lane.b32.xlu0 %v612, 8
      %v685 = vpop.permute.xlu0 %684
      %686 = vrot.lane.b32.xlu0 %v613, 8
      %v687 = vpop.permute.xlu0 %686
      %688 = vrot.lane.b32.xlu0 %v614, 8
      %v689 = vpop.permute.xlu0 %688
      %690 = vrot.lane.b32.xlu0 %v615, 8
      %v691 = vpop.permute.xlu0 %690
      %692 = vrot.lane.b32.xlu0 %v616, 8
      %v693 = vpop.permute.xlu0 %692
      %694 = vrot.lane.b32.xlu0 %v617, 8
      %v695 = vpop.permute.xlu0 %694
      %696 = vrot.lane.b32.xlu0 %v618, 8
      %v697 = vpop.permute.xlu0 %696
      %698 = vrot.lane.b32.xlu0 %v619, 8
      %v699 = vpop.permute.xlu0 %698
      %700 = vrot.lane.b32.xlu0 %v620, 8
      %v701 = vpop.permute.xlu0 %700
      %702 = vrot.lane.b32.xlu0 %v621, 8
      %v703 = vpop.permute.xlu0 %702
      %704 = vrot.lane.b32.xlu0 %v622, 8
      %v705 = vpop.permute.xlu0 %704
      %706 = vrot.lane.b32.xlu0 %v623, 8
      %v707 = vpop.permute.xlu0 %706
      %708 = vrot.lane.b32.xlu0 %v624, 8
      %v709 = vpop.permute.xlu0 %708
      %710 = vrot.lane.b32.xlu0 %v625, 8
      %v711 = vpop.permute.xlu0 %710
      %712 = vrot.lane.b32.xlu0 %v626, 8
      %v713 = vpop.permute.xlu0 %712
      %714 = vrot.lane.b32.xlu0 %v627, 8
      %v715 = vpop.permute.xlu0 %714
      %716 = vrot.lane.b32.xlu0 %v628, 8
      %v717 = vpop.permute.xlu0 %716
      %718 = vrot.lane.b32.xlu0 %v629, 8
      %v719 = vpop.permute.xlu0 %718
      %720 = vrot.lane.b32.xlu0 %v630, 8
      %v721 = vpop.permute.xlu0 %720
      %722 = vrot.lane.b32.xlu0 %v631, 8
      %v723 = vpop.permute.xlu0 %722
      %724 = vrot.lane.b32.xlu0 %v632, 8
      %v725 = vpop.permute.xlu0 %724
      %726 = vrot.lane.b32.xlu0 %v633, 8
      %v727 = vpop.permute.xlu0 %726
      %728 = vrot.lane.b32.xlu0 %v634, 8
      %v729 = vpop.permute.xlu0 %728
      %730 = vrot.lane.b32.xlu0 %v635, 8
      %v731 = vpop.permute.xlu0 %730
      %vm764 = vcmask 97344
      %765 = vst.msk [vmem:[#allocation3] sm:$0xff] %vm764, %v669
      %766 = vst.msk [vmem:[#allocation3 + $0x8] sm:$0xff] %vm764, %v671
      %767 = vst.msk [vmem:[#allocation3 + $0x10] sm:$0xff] %vm764, %v673
      %768 = vst.msk [vmem:[#allocation3 + $0x18] sm:$0xff] %vm764, %v675
      %769 = vst.msk [vmem:[#allocation3 + $0x20] sm:$0xff] %vm764, %v677
      %770 = vst.msk [vmem:[#allocation3 + $0x28] sm:$0xff] %vm764, %v679
      %771 = vst.msk [vmem:[#allocation3 + $0x30] sm:$0xff] %vm764, %v681
      %772 = vst.msk [vmem:[#allocation3 + $0x38] sm:$0xff] %vm764, %v683
      %773 = vst.msk [vmem:[#allocation3 + $0x40] sm:$0xff] %vm764, %v685
      %774 = vst.msk [vmem:[#allocation3 + $0x48] sm:$0xff] %vm764, %v687
      %775 = vst.msk [vmem:[#allocation3 + $0x50] sm:$0xff] %vm764, %v689
      %776 = vst.msk [vmem:[#allocation3 + $0x58] sm:$0xff] %vm764, %v691
      %777 = vst.msk [vmem:[#allocation3 + $0x60] sm:$0xff] %vm764, %v693
      %778 = vst.msk [vmem:[#allocation3 + $0x68] sm:$0xff] %vm764, %v695
      %779 = vst.msk [vmem:[#allocation3 + $0x70] sm:$0xff] %vm764, %v697
      %780 = vst.msk [vmem:[#allocation3 + $0x78] sm:$0xff] %vm764, %v699
      %781 = vst.msk [vmem:[#allocation3 + $0x80] sm:$0xff] %vm764, %v701
      %782 = vst.msk [vmem:[#allocation3 + $0x88] sm:$0xff] %vm764, %v703
      %783 = vst.msk [vmem:[#allocation3 + $0x90] sm:$0xff] %vm764, %v705
      %784 = vst.msk [vmem:[#allocation3 + $0x98] sm:$0xff] %vm764, %v707
      %785 = vst.msk [vmem:[#allocation3 + $0xa0] sm:$0xff] %vm764, %v709
      %786 = vst.msk [vmem:[#allocation3 + $0xa8] sm:$0xff] %vm764, %v711
      %787 = vst.msk [vmem:[#allocation3 + $0xb0] sm:$0xff] %vm764, %v713
      %788 = vst.msk [vmem:[#allocation3 + $0xb8] sm:$0xff] %vm764, %v715
      %789 = vst.msk [vmem:[#allocation3 + $0xc0] sm:$0xff] %vm764, %v717
      %790 = vst.msk [vmem:[#allocation3 + $0xc8] sm:$0xff] %vm764, %v719
      %791 = vst.msk [vmem:[#allocation3 + $0xd0] sm:$0xff] %vm764, %v721
      %792 = vst.msk [vmem:[#allocation3 + $0xd8] sm:$0xff] %vm764, %v723
      %793 = vst.msk [vmem:[#allocation3 + $0xe0] sm:$0xff] %vm764, %v725
      %794 = vst.msk [vmem:[#allocation3 + $0xe8] sm:$0xff] %vm764, %v727
      %795 = vst.msk [vmem:[#allocation3 + $0xf0] sm:$0xff] %vm764, %v729
      %796 = vst.msk [vmem:[#allocation3 + $0xf8] sm:$0xff] %vm764, %v731
      %v797 = vld [vmem:[%s314] sm:$0xff]
      %v798 = vld [vmem:[%s314 + $0x8] sm:$0xff]
      %v799 = vld [vmem:[%s314 + $0x18] sm:$0xff]
      %v800 = vld [vmem:[%s314 + $0x20] sm:$0xff]
      %v801 = vld [vmem:[%s314 + $0x30] sm:$0xff]
      %v802 = vld [vmem:[%s314 + $0x38] sm:$0xff]
      %v803 = vld [vmem:[%s314 + $0x48] sm:$0xff]
      %v804 = vld [vmem:[%s314 + $0x50] sm:$0xff]
      %v805 = vld [vmem:[%s314 + $0x60] sm:$0xff]
      %v806 = vld [vmem:[%s314 + $0x68] sm:$0xff]
      %v807 = vld [vmem:[%s314 + $0x78] sm:$0xff]
      %v808 = vld [vmem:[%s314 + $0x80] sm:$0xff]
      %v809 = vld [vmem:[%s314 + $0x90] sm:$0xff]
      %v810 = vld [vmem:[%s314 + $0x98] sm:$0xff]
      %v811 = vld [vmem:[%s314 + $0xa8] sm:$0xff]
      %v812 = vld [vmem:[%s314 + $0xb0] sm:$0xff]
      %v813 = vld [vmem:[%s314 + $0xc0] sm:$0xff]
      %v814 = vld [vmem:[%s314 + $0xc8] sm:$0xff]
      %v815 = vld [vmem:[%s314 + $0xd8] sm:$0xff]
      %v816 = vld [vmem:[%s314 + $0xe0] sm:$0xff]
      %v817 = vld [vmem:[%s314 + $0xf0] sm:$0xff]
      %v818 = vld [vmem:[%s314 + $0xf8] sm:$0xff]
      %v819 = vld [vmem:[%s314 + $0x108] sm:$0xff]
      %v820 = vld [vmem:[%s314 + $0x110] sm:$0xff]
      %v821 = vld [vmem:[%s314 + $0x120] sm:$0xff]
      %v822 = vld [vmem:[%s314 + $0x128] sm:$0xff]
      %v823 = vld [vmem:[%s314 + $0x138] sm:$0xff]
      %v824 = vld [vmem:[%s314 + $0x140] sm:$0xff]
      %v825 = vld [vmem:[%s314 + $0x150] sm:$0xff]
      %v826 = vld [vmem:[%s314 + $0x158] sm:$0xff]
      %v827 = vld [vmem:[%s314 + $0x168] sm:$0xff]
      %v828 = vld [vmem:[%s314 + $0x170] sm:$0xff]
      %861 = vrot.lane.b32.xlu0 %v797, 12
      %v862 = vpop.permute.xlu0 %861
      %863 = vrot.lane.b32.xlu0 %v798, 12
      %v864 = vpop.permute.xlu0 %863
      %865 = vrot.lane.b32.xlu0 %v799, 12
      %v866 = vpop.permute.xlu0 %865
      %867 = vrot.lane.b32.xlu0 %v800, 12
      %v868 = vpop.permute.xlu0 %867
      %869 = vrot.lane.b32.xlu0 %v801, 12
      %v870 = vpop.permute.xlu0 %869
      %871 = vrot.lane.b32.xlu0 %v802, 12
      %v872 = vpop.permute.xlu0 %871
      %873 = vrot.lane.b32.xlu0 %v803, 12
      %v874 = vpop.permute.xlu0 %873
      %875 = vrot.lane.b32.xlu0 %v804, 12
      %v876 = vpop.permute.xlu0 %875
      %877 = vrot.lane.b32.xlu0 %v805, 12
      %v878 = vpop.permute.xlu0 %877
      %879 = vrot.lane.b32.xlu0 %v806, 12
      %v880 = vpop.permute.xlu0 %879
      %881 = vrot.lane.b32.xlu0 %v807, 12
      %v882 = vpop.permute.xlu0 %881
      %883 = vrot.lane.b32.xlu0 %v808, 12
      %v884 = vpop.permute.xlu0 %883
      %885 = vrot.lane.b32.xlu0 %v809, 12
      %v886 = vpop.permute.xlu0 %885
      %887 = vrot.lane.b32.xlu0 %v810, 12
      %v888 = vpop.permute.xlu0 %887
      %889 = vrot.lane.b32.xlu0 %v811, 12
      %v890 = vpop.permute.xlu0 %889
      %891 = vrot.lane.b32.xlu0 %v812, 12
      %v892 = vpop.permute.xlu0 %891
      %893 = vrot.lane.b32.xlu0 %v813, 12
      %v894 = vpop.permute.xlu0 %893
      %895 = vrot.lane.b32.xlu0 %v814, 12
      %v896 = vpop.permute.xlu0 %895
      %897 = vrot.lane.b32.xlu0 %v815, 12
      %v898 = vpop.permute.xlu0 %897
      %899 = vrot.lane.b32.xlu0 %v816, 12
      %v900 = vpop.permute.xlu0 %899
      %901 = vrot.lane.b32.xlu0 %v817, 12
      %v902 = vpop.permute.xlu0 %901
      %903 = vrot.lane.b32.xlu0 %v818, 12
      %v904 = vpop.permute.xlu0 %903
      %905 = vrot.lane.b32.xlu0 %v819, 12
      %v906 = vpop.permute.xlu0 %905
      %907 = vrot.lane.b32.xlu0 %v820, 12
      %v908 = vpop.permute.xlu0 %907
      %909 = vrot.lane.b32.xlu0 %v821, 12
      %v910 = vpop.permute.xlu0 %909
      %911 = vrot.lane.b32.xlu0 %v822, 12
      %v912 = vpop.permute.xlu0 %911
      %913 = vrot.lane.b32.xlu0 %v823, 12
      %v914 = vpop.permute.xlu0 %913
      %915 = vrot.lane.b32.xlu0 %v824, 12
      %v916 = vpop.permute.xlu0 %915
      %917 = vrot.lane.b32.xlu0 %v825, 12
      %v918 = vpop.permute.xlu0 %917
      %919 = vrot.lane.b32.xlu0 %v826, 12
      %v920 = vpop.permute.xlu0 %919
      %921 = vrot.lane.b32.xlu0 %v827, 12
      %v922 = vpop.permute.xlu0 %921
      %923 = vrot.lane.b32.xlu0 %v828, 12
      %v924 = vpop.permute.xlu0 %923
      %vm957 = vcmask 130144
      %958 = vst.msk [vmem:[#allocation3] sm:$0xff] %vm957, %v862
      %959 = vst.msk [vmem:[#allocation3 + $0x8] sm:$0xff] %vm957, %v864
      %960 = vst.msk [vmem:[#allocation3 + $0x10] sm:$0xff] %vm957, %v866
      %961 = vst.msk [vmem:[#allocation3 + $0x18] sm:$0xff] %vm957, %v868
      %962 = vst.msk [vmem:[#allocation3 + $0x20] sm:$0xff] %vm957, %v870
      %963 = vst.msk [vmem:[#allocation3 + $0x28] sm:$0xff] %vm957, %v872
      %964 = vst.msk [vmem:[#allocation3 + $0x30] sm:$0xff] %vm957, %v874
      %965 = vst.msk [vmem:[#allocation3 + $0x38] sm:$0xff] %vm957, %v876
      %966 = vst.msk [vmem:[#allocation3 + $0x40] sm:$0xff] %vm957, %v878
      %967 = vst.msk [vmem:[#allocation3 + $0x48] sm:$0xff] %vm957, %v880
      %968 = vst.msk [vmem:[#allocation3 + $0x50] sm:$0xff] %vm957, %v882
      %969 = vst.msk [vmem:[#allocation3 + $0x58] sm:$0xff] %vm957, %v884
      %970 = vst.msk [vmem:[#allocation3 + $0x60] sm:$0xff] %vm957, %v886
      %971 = vst.msk [vmem:[#allocation3 + $0x68] sm:$0xff] %vm957, %v888
      %972 = vst.msk [vmem:[#allocation3 + $0x70] sm:$0xff] %vm957, %v890
      %973 = vst.msk [vmem:[#allocation3 + $0x78] sm:$0xff] %vm957, %v892
      %974 = vst.msk [vmem:[#allocation3 + $0x80] sm:$0xff] %vm957, %v894
      %975 = vst.msk [vmem:[#allocation3 + $0x88] sm:$0xff] %vm957, %v896
      %976 = vst.msk [vmem:[#allocation3 + $0x90] sm:$0xff] %vm957, %v898
      %977 = vst.msk [vmem:[#allocation3 + $0x98] sm:$0xff] %vm957, %v900
      %978 = vst.msk [vmem:[#allocation3 + $0xa0] sm:$0xff] %vm957, %v902
      %979 = vst.msk [vmem:[#allocation3 + $0xa8] sm:$0xff] %vm957, %v904
      %980 = vst.msk [vmem:[#allocation3 + $0xb0] sm:$0xff] %vm957, %v906
      %981 = vst.msk [vmem:[#allocation3 + $0xb8] sm:$0xff] %vm957, %v908
      %982 = vst.msk [vmem:[#allocation3 + $0xc0] sm:$0xff] %vm957, %v910
      %983 = vst.msk [vmem:[#allocation3 + $0xc8] sm:$0xff] %vm957, %v912
      %984 = vst.msk [vmem:[#allocation3 + $0xd0] sm:$0xff] %vm957, %v914
      %985 = vst.msk [vmem:[#allocation3 + $0xd8] sm:$0xff] %vm957, %v916
      %986 = vst.msk [vmem:[#allocation3 + $0xe0] sm:$0xff] %vm957, %v918
      %987 = vst.msk [vmem:[#allocation3 + $0xe8] sm:$0xff] %vm957, %v920
      %988 = vst.msk [vmem:[#allocation3 + $0xf0] sm:$0xff] %vm957, %v922
      %989 = vst.msk [vmem:[#allocation3 + $0xf8] sm:$0xff] %vm957, %v924
      %v990 = vld [vmem:[%s314 + $0x1] sm:$0xff]
      %v991 = vld [vmem:[%s314 + $0x9] sm:$0xff]
      %v992 = vld [vmem:[%s314 + $0x19] sm:$0xff]
      %v993 = vld [vmem:[%s314 + $0x21] sm:$0xff]
      %v994 = vld [vmem:[%s314 + $0x31] sm:$0xff]
      %v995 = vld [vmem:[%s314 + $0x39] sm:$0xff]
      %v996 = vld [vmem:[%s314 + $0x49] sm:$0xff]
      %v997 = vld [vmem:[%s314 + $0x51] sm:$0xff]
      %v998 = vld [vmem:[%s314 + $0x61] sm:$0xff]
      %v999 = vld [vmem:[%s314 + $0x69] sm:$0xff]
      %v1000 = vld [vmem:[%s314 + $0x79] sm:$0xff]
      %v1001 = vld [vmem:[%s314 + $0x81] sm:$0xff]
      %v1002 = vld [vmem:[%s314 + $0x91] sm:$0xff]
      %v1003 = vld [vmem:[%s314 + $0x99] sm:$0xff]
      %v1004 = vld [vmem:[%s314 + $0xa9] sm:$0xff]
      %v1005 = vld [vmem:[%s314 + $0xb1] sm:$0xff]
      %v1006 = vld [vmem:[%s314 + $0xc1] sm:$0xff]
      %v1007 = vld [vmem:[%s314 + $0xc9] sm:$0xff]
      %v1008 = vld [vmem:[%s314 + $0xd9] sm:$0xff]
      %v1009 = vld [vmem:[%s314 + $0xe1] sm:$0xff]
      %v1010 = vld [vmem:[%s314 + $0xf1] sm:$0xff]
      %v1011 = vld [vmem:[%s314 + $0xf9] sm:$0xff]
      %v1012 = vld [vmem:[%s314 + $0x109] sm:$0xff]
      %v1013 = vld [vmem:[%s314 + $0x111] sm:$0xff]
      %v1014 = vld [vmem:[%s314 + $0x121] sm:$0xff]
      %v1015 = vld [vmem:[%s314 + $0x129] sm:$0xff]
      %v1016 = vld [vmem:[%s314 + $0x139] sm:$0xff]
      %v1017 = vld [vmem:[%s314 + $0x141] sm:$0xff]
      %v1018 = vld [vmem:[%s314 + $0x151] sm:$0xff]
      %v1019 = vld [vmem:[%s314 + $0x159] sm:$0xff]
      %v1020 = vld [vmem:[%s314 + $0x169] sm:$0xff]
      %v1021 = vld [vmem:[%s314 + $0x171] sm:$0xff]
      %1054 = vrot.lane.b32.xlu0 %v990, 16
      %v1055 = vpop.permute.xlu0 %1054
      %1056 = vrot.lane.b32.xlu0 %v991, 16
      %v1057 = vpop.permute.xlu0 %1056
      %1058 = vrot.lane.b32.xlu0 %v992, 16
      %v1059 = vpop.permute.xlu0 %1058
      %1060 = vrot.lane.b32.xlu0 %v993, 16
      %v1061 = vpop.permute.xlu0 %1060
      %1062 = vrot.lane.b32.xlu0 %v994, 16
      %v1063 = vpop.permute.xlu0 %1062
      %1064 = vrot.lane.b32.xlu0 %v995, 16
      %v1065 = vpop.permute.xlu0 %1064
      %1066 = vrot.lane.b32.xlu0 %v996, 16
      %v1067 = vpop.permute.xlu0 %1066
      %1068 = vrot.lane.b32.xlu0 %v997, 16
      %v1069 = vpop.permute.xlu0 %1068
      %1070 = vrot.lane.b32.xlu0 %v998, 16
      %v1071 = vpop.permute.xlu0 %1070
      %1072 = vrot.lane.b32.xlu0 %v999, 16
      %v1073 = vpop.permute.xlu0 %1072
      %1074 = vrot.lane.b32.xlu0 %v1000, 16
      %v1075 = vpop.permute.xlu0 %1074
      %1076 = vrot.lane.b32.xlu0 %v1001, 16
      %v1077 = vpop.permute.xlu0 %1076
      %1078 = vrot.lane.b32.xlu0 %v1002, 16
      %v1079 = vpop.permute.xlu0 %1078
      %1080 = vrot.lane.b32.xlu0 %v1003, 16
      %v1081 = vpop.permute.xlu0 %1080
      %1082 = vrot.lane.b32.xlu0 %v1004, 16
      %v1083 = vpop.permute.xlu0 %1082
      %1084 = vrot.lane.b32.xlu0 %v1005, 16
      %v1085 = vpop.permute.xlu0 %1084
      %1086 = vrot.lane.b32.xlu0 %v1006, 16
      %v1087 = vpop.permute.xlu0 %1086
      %1088 = vrot.lane.b32.xlu0 %v1007, 16
      %v1089 = vpop.permute.xlu0 %1088
      %1090 = vrot.lane.b32.xlu0 %v1008, 16
      %v1091 = vpop.permute.xlu0 %1090
      %1092 = vrot.lane.b32.xlu0 %v1009, 16
      %v1093 = vpop.permute.xlu0 %1092
      %1094 = vrot.lane.b32.xlu0 %v1010, 16
      %v1095 = vpop.permute.xlu0 %1094
      %1096 = vrot.lane.b32.xlu0 %v1011, 16
      %v1097 = vpop.permute.xlu0 %1096
      %1098 = vrot.lane.b32.xlu0 %v1012, 16
      %v1099 = vpop.permute.xlu0 %1098
      %1100 = vrot.lane.b32.xlu0 %v1013, 16
      %v1101 = vpop.permute.xlu0 %1100
      %1102 = vrot.lane.b32.xlu0 %v1014, 16
      %v1103 = vpop.permute.xlu0 %1102
      %1104 = vrot.lane.b32.xlu0 %v1015, 16
      %v1105 = vpop.permute.xlu0 %1104
      %1106 = vrot.lane.b32.xlu0 %v1016, 16
      %v1107 = vpop.permute.xlu0 %1106
      %1108 = vrot.lane.b32.xlu0 %v1017, 16
      %v1109 = vpop.permute.xlu0 %1108
      %1110 = vrot.lane.b32.xlu0 %v1018, 16
      %v1111 = vpop.permute.xlu0 %1110
      %1112 = vrot.lane.b32.xlu0 %v1019, 16
      %v1113 = vpop.permute.xlu0 %1112
      %1114 = vrot.lane.b32.xlu0 %v1020, 16
      %v1115 = vpop.permute.xlu0 %1114
      %1116 = vrot.lane.b32.xlu0 %v1021, 16
      %v1117 = vpop.permute.xlu0 %1116
      %vm1150 = vcmask 162944
      %1151 = vst.msk [vmem:[#allocation3] sm:$0xff] %vm1150, %v1055
      %1152 = vst.msk [vmem:[#allocation3 + $0x8] sm:$0xff] %vm1150, %v1057
      %1153 = vst.msk [vmem:[#allocation3 + $0x10] sm:$0xff] %vm1150, %v1059
      %1154 = vst.msk [vmem:[#allocation3 + $0x18] sm:$0xff] %vm1150, %v1061
      %1155 = vst.msk [vmem:[#allocation3 + $0x20] sm:$0xff] %vm1150, %v1063
      %1156 = vst.msk [vmem:[#allocation3 + $0x28] sm:$0xff] %vm1150, %v1065
      %1157 = vst.msk [vmem:[#allocation3 + $0x30] sm:$0xff] %vm1150, %v1067
      %1158 = vst.msk [vmem:[#allocation3 + $0x38] sm:$0xff] %vm1150, %v1069
      %1159 = vst.msk [vmem:[#allocation3 + $0x40] sm:$0xff] %vm1150, %v1071
      %1160 = vst.msk [vmem:[#allocation3 + $0x48] sm:$0xff] %vm1150, %v1073
      %1161 = vst.msk [vmem:[#allocation3 + $0x50] sm:$0xff] %vm1150, %v1075
      %1162 = vst.msk [vmem:[#allocation3 + $0x58] sm:$0xff] %vm1150, %v1077
      %1163 = vst.msk [vmem:[#allocation3 + $0x60] sm:$0xff] %vm1150, %v1079
      %1164 = vst.msk [vmem:[#allocation3 + $0x68] sm:$0xff] %vm1150, %v1081
      %1165 = vst.msk [vmem:[#allocation3 + $0x70] sm:$0xff] %vm1150, %v1083
      %1166 = vst.msk [vmem:[#allocation3 + $0x78] sm:$0xff] %vm1150, %v1085
      %1167 = vst.msk [vmem:[#allocation3 + $0x80] sm:$0xff] %vm1150, %v1087
      %1168 = vst.msk [vmem:[#allocation3 + $0x88] sm:$0xff] %vm1150, %v1089
      %1169 = vst.msk [vmem:[#allocation3 + $0x90] sm:$0xff] %vm1150, %v1091
      %1170 = vst.msk [vmem:[#allocation3 + $0x98] sm:$0xff] %vm1150, %v1093
      %1171 = vst.msk [vmem:[#allocation3 + $0xa0] sm:$0xff] %vm1150, %v1095
      %1172 = vst.msk [vmem:[#allocation3 + $0xa8] sm:$0xff] %vm1150, %v1097
      %1173 = vst.msk [vmem:[#allocation3 + $0xb0] sm:$0xff] %vm1150, %v1099
      %1174 = vst.msk [vmem:[#allocation3 + $0xb8] sm:$0xff] %vm1150, %v1101
      %1175 = vst.msk [vmem:[#allocation3 + $0xc0] sm:$0xff] %vm1150, %v1103
      %1176 = vst.msk [vmem:[#allocation3 + $0xc8] sm:$0xff] %vm1150, %v1105
      %1177 = vst.msk [vmem:[#allocation3 + $0xd0] sm:$0xff] %vm1150, %v1107
      %1178 = vst.msk [vmem:[#allocation3 + $0xd8] sm:$0xff] %vm1150, %v1109
      %1179 = vst.msk [vmem:[#allocation3 + $0xe0] sm:$0xff] %vm1150, %v1111
      %1180 = vst.msk [vmem:[#allocation3 + $0xe8] sm:$0xff] %vm1150, %v1113
      %1181 = vst.msk [vmem:[#allocation3 + $0xf0] sm:$0xff] %vm1150, %v1115
      %1182 = vst.msk [vmem:[#allocation3 + $0xf8] sm:$0xff] %vm1150, %v1117
      %v1183 = vld [vmem:[%s314 + $0x2] sm:$0xff]
      %v1184 = vld [vmem:[%s314 + $0xa] sm:$0xff]
      %v1185 = vld [vmem:[%s314 + $0x1a] sm:$0xff]
      %v1186 = vld [vmem:[%s314 + $0x22] sm:$0xff]
      %v1187 = vld [vmem:[%s314 + $0x32] sm:$0xff]
      %v1188 = vld [vmem:[%s314 + $0x3a] sm:$0xff]
      %v1189 = vld [vmem:[%s314 + $0x4a] sm:$0xff]
      %v1190 = vld [vmem:[%s314 + $0x52] sm:$0xff]
      %v1191 = vld [vmem:[%s314 + $0x62] sm:$0xff]
      %v1192 = vld [vmem:[%s314 + $0x6a] sm:$0xff]
      %v1193 = vld [vmem:[%s314 + $0x7a] sm:$0xff]
      %v1194 = vld [vmem:[%s314 + $0x82] sm:$0xff]
      %v1195 = vld [vmem:[%s314 + $0x92] sm:$0xff]
      %v1196 = vld [vmem:[%s314 + $0x9a] sm:$0xff]
      %v1197 = vld [vmem:[%s314 + $0xaa] sm:$0xff]
      %v1198 = vld [vmem:[%s314 + $0xb2] sm:$0xff]
      %v1199 = vld [vmem:[%s314 + $0xc2] sm:$0xff]
      %v1200 = vld [vmem:[%s314 + $0xca] sm:$0xff]
      %v1201 = vld [vmem:[%s314 + $0xda] sm:$0xff]
      %v1202 = vld [vmem:[%s314 + $0xe2] sm:$0xff]
      %v1203 = vld [vmem:[%s314 + $0xf2] sm:$0xff]
      %v1204 = vld [vmem:[%s314 + $0xfa] sm:$0xff]
      %v1205 = vld [vmem:[%s314 + $0x10a] sm:$0xff]
      %v1206 = vld [vmem:[%s314 + $0x112] sm:$0xff]
      %v1207 = vld [vmem:[%s314 + $0x122] sm:$0xff]
      %v1208 = vld [vmem:[%s314 + $0x12a] sm:$0xff]
      %v1209 = vld [vmem:[%s314 + $0x13a] sm:$0xff]
      %v1210 = vld [vmem:[%s314 + $0x142] sm:$0xff]
      %v1211 = vld [vmem:[%s314 + $0x152] sm:$0xff]
      %v1212 = vld [vmem:[%s314 + $0x15a] sm:$0xff]
      %v1213 = vld [vmem:[%s314 + $0x16a] sm:$0xff]
      %v1214 = vld [vmem:[%s314 + $0x172] sm:$0xff]
      %1247 = vrot.lane.b32.xlu0 %v1183, 20
      %v1248 = vpop.permute.xlu0 %1247
      %1249 = vrot.lane.b32.xlu0 %v1184, 20
      %v1250 = vpop.permute.xlu0 %1249
      %1251 = vrot.lane.b32.xlu0 %v1185, 20
      %v1252 = vpop.permute.xlu0 %1251
      %1253 = vrot.lane.b32.xlu0 %v1186, 20
      %v1254 = vpop.permute.xlu0 %1253
      %1255 = vrot.lane.b32.xlu0 %v1187, 20
      %v1256 = vpop.permute.xlu0 %1255
      %1257 = vrot.lane.b32.xlu0 %v1188, 20
      %v1258 = vpop.permute.xlu0 %1257
      %1259 = vrot.lane.b32.xlu0 %v1189, 20
      %v1260 = vpop.permute.xlu0 %1259
      %1261 = vrot.lane.b32.xlu0 %v1190, 20
      %v1262 = vpop.permute.xlu0 %1261
      %1263 = vrot.lane.b32.xlu0 %v1191, 20
      %v1264 = vpop.permute.xlu0 %1263
      %1265 = vrot.lane.b32.xlu0 %v1192, 20
      %v1266 = vpop.permute.xlu0 %1265
      %1267 = vrot.lane.b32.xlu0 %v1193, 20
      %v1268 = vpop.permute.xlu0 %1267
      %1269 = vrot.lane.b32.xlu0 %v1194, 20
      %v1270 = vpop.permute.xlu0 %1269
      %1271 = vrot.lane.b32.xlu0 %v1195, 20
      %v1272 = vpop.permute.xlu0 %1271
      %1273 = vrot.lane.b32.xlu0 %v1196, 20
      %v1274 = vpop.permute.xlu0 %1273
      %1275 = vrot.lane.b32.xlu0 %v1197, 20
      %v1276 = vpop.permute.xlu0 %1275
      %1277 = vrot.lane.b32.xlu0 %v1198, 20
      %v1278 = vpop.permute.xlu0 %1277
      %1279 = vrot.lane.b32.xlu0 %v1199, 20
      %v1280 = vpop.permute.xlu0 %1279
      %1281 = vrot.lane.b32.xlu0 %v1200, 20
      %v1282 = vpop.permute.xlu0 %1281
      %1283 = vrot.lane.b32.xlu0 %v1201, 20
      %v1284 = vpop.permute.xlu0 %1283
      %1285 = vrot.lane.b32.xlu0 %v1202, 20
      %v1286 = vpop.permute.xlu0 %1285
      %1287 = vrot.lane.b32.xlu0 %v1203, 20
      %v1288 = vpop.permute.xlu0 %1287
      %1289 = vrot.lane.b32.xlu0 %v1204, 20
      %v1290 = vpop.permute.xlu0 %1289
      %1291 = vrot.lane.b32.xlu0 %v1205, 20
      %v1292 = vpop.permute.xlu0 %1291
      %1293 = vrot.lane.b32.xlu0 %v1206, 20
      %v1294 = vpop.permute.xlu0 %1293
      %1295 = vrot.lane.b32.xlu0 %v1207, 20
      %v1296 = vpop.permute.xlu0 %1295
      %1297 = vrot.lane.b32.xlu0 %v1208, 20
      %v1298 = vpop.permute.xlu0 %1297
      %1299 = vrot.lane.b32.xlu0 %v1209, 20
      %v1300 = vpop.permute.xlu0 %1299
      %1301 = vrot.lane.b32.xlu0 %v1210, 20
      %v1302 = vpop.permute.xlu0 %1301
      %1303 = vrot.lane.b32.xlu0 %v1211, 20
      %v1304 = vpop.permute.xlu0 %1303
      %1305 = vrot.lane.b32.xlu0 %v1212, 20
      %v1306 = vpop.permute.xlu0 %1305
      %1307 = vrot.lane.b32.xlu0 %v1213, 20
      %v1308 = vpop.permute.xlu0 %1307
      %1309 = vrot.lane.b32.xlu0 %v1214, 20
      %v1310 = vpop.permute.xlu0 %1309
      %vm1343 = vcmask 195744
      %1344 = vst.msk [vmem:[#allocation3] sm:$0xff] %vm1343, %v1248
      %1345 = vst.msk [vmem:[#allocation3 + $0x8] sm:$0xff] %vm1343, %v1250
      %1346 = vst.msk [vmem:[#allocation3 + $0x10] sm:$0xff] %vm1343, %v1252
      %1347 = vst.msk [vmem:[#allocation3 + $0x18] sm:$0xff] %vm1343, %v1254
      %1348 = vst.msk [vmem:[#allocation3 + $0x20] sm:$0xff] %vm1343, %v1256
      %1349 = vst.msk [vmem:[#allocation3 + $0x28] sm:$0xff] %vm1343, %v1258
      %1350 = vst.msk [vmem:[#allocation3 + $0x30] sm:$0xff] %vm1343, %v1260
      %1351 = vst.msk [vmem:[#allocation3 + $0x38] sm:$0xff] %vm1343, %v1262
      %1352 = vst.msk [vmem:[#allocation3 + $0x40] sm:$0xff] %vm1343, %v1264
      %1353 = vst.msk [vmem:[#allocation3 + $0x48] sm:$0xff] %vm1343, %v1266
      %1354 = vst.msk [vmem:[#allocation3 + $0x50] sm:$0xff] %vm1343, %v1268
      %1355 = vst.msk [vmem:[#allocation3 + $0x58] sm:$0xff] %vm1343, %v1270
      %1356 = vst.msk [vmem:[#allocation3 + $0x60] sm:$0xff] %vm1343, %v1272
      %1357 = vst.msk [vmem:[#allocation3 + $0x68] sm:$0xff] %vm1343, %v1274
      %1358 = vst.msk [vmem:[#allocation3 + $0x70] sm:$0xff] %vm1343, %v1276
      %1359 = vst.msk [vmem:[#allocation3 + $0x78] sm:$0xff] %vm1343, %v1278
      %1360 = vst.msk [vmem:[#allocation3 + $0x80] sm:$0xff] %vm1343, %v1280
      %1361 = vst.msk [vmem:[#allocation3 + $0x88] sm:$0xff] %vm1343, %v1282
      %1362 = vst.msk [vmem:[#allocation3 + $0x90] sm:$0xff] %vm1343, %v1284
      %1363 = vst.msk [vmem:[#allocation3 + $0x98] sm:$0xff] %vm1343, %v1286
      %1364 = vst.msk [vmem:[#allocation3 + $0xa0] sm:$0xff] %vm1343, %v1288
      %1365 = vst.msk [vmem:[#allocation3 + $0xa8] sm:$0xff] %vm1343, %v1290
      %1366 = vst.msk [vmem:[#allocation3 + $0xb0] sm:$0xff] %vm1343, %v1292
      %1367 = vst.msk [vmem:[#allocation3 + $0xb8] sm:$0xff] %vm1343, %v1294
      %1368 = vst.msk [vmem:[#allocation3 + $0xc0] sm:$0xff] %vm1343, %v1296
      %1369 = vst.msk [vmem:[#allocation3 + $0xc8] sm:$0xff] %vm1343, %v1298
      %1370 = vst.msk [vmem:[#allocation3 + $0xd0] sm:$0xff] %vm1343, %v1300
      %1371 = vst.msk [vmem:[#allocation3 + $0xd8] sm:$0xff] %vm1343, %v1302
      %1372 = vst.msk [vmem:[#allocation3 + $0xe0] sm:$0xff] %vm1343, %v1304
      %1373 = vst.msk [vmem:[#allocation3 + $0xe8] sm:$0xff] %vm1343, %v1306
      %1374 = vst.msk [vmem:[#allocation3 + $0xf0] sm:$0xff] %vm1343, %v1308
      %1375 = vst.msk [vmem:[#allocation3 + $0xf8] sm:$0xff] %vm1343, %v1310
      %s1376 = scalar_lea.vmem [#allocation2], 48
      %v1377 = vld [vmem:[%s1376] sm:$0xff]
      %v1378 = vld [vmem:[%s1376 + $0x8] sm:$0xff]
      %v1379 = vld [vmem:[%s1376 + $0x18] sm:$0xff]
      %v1380 = vld [vmem:[%s1376 + $0x20] sm:$0xff]
      %v1381 = vld [vmem:[%s1376 + $0x30] sm:$0xff]
      %v1382 = vld [vmem:[%s1376 + $0x38] sm:$0xff]
      %v1383 = vld [vmem:[%s1376 + $0x48] sm:$0xff]
      %v1384 = vld [vmem:[%s1376 + $0x50] sm:$0xff]
      %v1385 = vld [vmem:[%s1376 + $0x60] sm:$0xff]
      %v1386 = vld [vmem:[%s1376 + $0x68] sm:$0xff]
      %v1387 = vld [vmem:[%s1376 + $0x78] sm:$0xff]
      %v1388 = vld [vmem:[%s1376 + $0x80] sm:$0xff]
      %v1389 = vld [vmem:[%s1376 + $0x90] sm:$0xff]
      %v1390 = vld [vmem:[%s1376 + $0x98] sm:$0xff]
      %v1391 = vld [vmem:[%s1376 + $0xa8] sm:$0xff]
      %v1392 = vld [vmem:[%s1376 + $0xb0] sm:$0xff]
      %v1393 = vld [vmem:[%s1376 + $0xc0] sm:$0xff]
      %v1394 = vld [vmem:[%s1376 + $0xc8] sm:$0xff]
      %v1395 = vld [vmem:[%s1376 + $0xd8] sm:$0xff]
      %v1396 = vld [vmem:[%s1376 + $0xe0] sm:$0xff]
      %v1397 = vld [vmem:[%s1376 + $0xf0] sm:$0xff]
      %v1398 = vld [vmem:[%s1376 + $0xf8] sm:$0xff]
      %v1399 = vld [vmem:[%s1376 + $0x108] sm:$0xff]
      %v1400 = vld [vmem:[%s1376 + $0x110] sm:$0xff]
      %v1401 = vld [vmem:[%s1376 + $0x120] sm:$0xff]
      %v1402 = vld [vmem:[%s1376 + $0x128] sm:$0xff]
      %v1403 = vld [vmem:[%s1376 + $0x138] sm:$0xff]
      %v1404 = vld [vmem:[%s1376 + $0x140] sm:$0xff]
      %v1405 = vld [vmem:[%s1376 + $0x150] sm:$0xff]
      %v1406 = vld [vmem:[%s1376 + $0x158] sm:$0xff]
      %v1407 = vld [vmem:[%s1376 + $0x168] sm:$0xff]
      %v1408 = vld [vmem:[%s1376 + $0x170] sm:$0xff]
      %1441 = vrot.lane.b32.xlu0 %v1377, 24
      %v1442 = vpop.permute.xlu0 %1441
      %1443 = vrot.lane.b32.xlu0 %v1378, 24
      %v1444 = vpop.permute.xlu0 %1443
      %1445 = vrot.lane.b32.xlu0 %v1379, 24
      %v1446 = vpop.permute.xlu0 %1445
      %1447 = vrot.lane.b32.xlu0 %v1380, 24
      %v1448 = vpop.permute.xlu0 %1447
      %1449 = vrot.lane.b32.xlu0 %v1381, 24
      %v1450 = vpop.permute.xlu0 %1449
      %1451 = vrot.lane.b32.xlu0 %v1382, 24
      %v1452 = vpop.permute.xlu0 %1451
      %1453 = vrot.lane.b32.xlu0 %v1383, 24
      %v1454 = vpop.permute.xlu0 %1453
      %1455 = vrot.lane.b32.xlu0 %v1384, 24
      %v1456 = vpop.permute.xlu0 %1455
      %1457 = vrot.lane.b32.xlu0 %v1385, 24
      %v1458 = vpop.permute.xlu0 %1457
      %1459 = vrot.lane.b32.xlu0 %v1386, 24
      %v1460 = vpop.permute.xlu0 %1459
      %1461 = vrot.lane.b32.xlu0 %v1387, 24
      %v1462 = vpop.permute.xlu0 %1461
      %1463 = vrot.lane.b32.xlu0 %v1388, 24
      %v1464 = vpop.permute.xlu0 %1463
      %1465 = vrot.lane.b32.xlu0 %v1389, 24
      %v1466 = vpop.permute.xlu0 %1465
      %1467 = vrot.lane.b32.xlu0 %v1390, 24
      %v1468 = vpop.permute.xlu0 %1467
      %1469 = vrot.lane.b32.xlu0 %v1391, 24
      %v1470 = vpop.permute.xlu0 %1469
      %1471 = vrot.lane.b32.xlu0 %v1392, 24
      %v1472 = vpop.permute.xlu0 %1471
      %1473 = vrot.lane.b32.xlu0 %v1393, 24
      %v1474 = vpop.permute.xlu0 %1473
      %1475 = vrot.lane.b32.xlu0 %v1394, 24
      %v1476 = vpop.permute.xlu0 %1475
      %1477 = vrot.lane.b32.xlu0 %v1395, 24
      %v1478 = vpop.permute.xlu0 %1477
      %1479 = vrot.lane.b32.xlu0 %v1396, 24
      %v1480 = vpop.permute.xlu0 %1479
      %1481 = vrot.lane.b32.xlu0 %v1397, 24
      %v1482 = vpop.permute.xlu0 %1481
      %1483 = vrot.lane.b32.xlu0 %v1398, 24
      %v1484 = vpop.permute.xlu0 %1483
      %1485 = vrot.lane.b32.xlu0 %v1399, 24
      %v1486 = vpop.permute.xlu0 %1485
      %1487 = vrot.lane.b32.xlu0 %v1400, 24
      %v1488 = vpop.permute.xlu0 %1487
      %1489 = vrot.lane.b32.xlu0 %v1401, 24
      %v1490 = vpop.permute.xlu0 %1489
      %1491 = vrot.lane.b32.xlu0 %v1402, 24
      %v1492 = vpop.permute.xlu0 %1491
      %1493 = vrot.lane.b32.xlu0 %v1403, 24
      %v1494 = vpop.permute.xlu0 %1493
      %1495 = vrot.lane.b32.xlu0 %v1404, 24
      %v1496 = vpop.permute.xlu0 %1495
      %1497 = vrot.lane.b32.xlu0 %v1405, 24
      %v1498 = vpop.permute.xlu0 %1497
      %1499 = vrot.lane.b32.xlu0 %v1406, 24
      %v1500 = vpop.permute.xlu0 %1499
      %1501 = vrot.lane.b32.xlu0 %v1407, 24
      %v1502 = vpop.permute.xlu0 %1501
      %1503 = vrot.lane.b32.xlu0 %v1408, 24
      %v1504 = vpop.permute.xlu0 %1503
      %vm1537 = vcmask 228544
      %1538 = vst.msk [vmem:[#allocation3] sm:$0xff] %vm1537, %v1442
      %1539 = vst.msk [vmem:[#allocation3 + $0x8] sm:$0xff] %vm1537, %v1444
      %1540 = vst.msk [vmem:[#allocation3 + $0x10] sm:$0xff] %vm1537, %v1446
      %1541 = vst.msk [vmem:[#allocation3 + $0x18] sm:$0xff] %vm1537, %v1448
      %1542 = vst.msk [vmem:[#allocation3 + $0x20] sm:$0xff] %vm1537, %v1450
      %1543 = vst.msk [vmem:[#allocation3 + $0x28] sm:$0xff] %vm1537, %v1452
      %1544 = vst.msk [vmem:[#allocation3 + $0x30] sm:$0xff] %vm1537, %v1454
      %1545 = vst.msk [vmem:[#allocation3 + $0x38] sm:$0xff] %vm1537, %v1456
      %1546 = vst.msk [vmem:[#allocation3 + $0x40] sm:$0xff] %vm1537, %v1458
      %1547 = vst.msk [vmem:[#allocation3 + $0x48] sm:$0xff] %vm1537, %v1460
      %1548 = vst.msk [vmem:[#allocation3 + $0x50] sm:$0xff] %vm1537, %v1462
      %1549 = vst.msk [vmem:[#allocation3 + $0x58] sm:$0xff] %vm1537, %v1464
      %1550 = vst.msk [vmem:[#allocation3 + $0x60] sm:$0xff] %vm1537, %v1466
      %1551 = vst.msk [vmem:[#allocation3 + $0x68] sm:$0xff] %vm1537, %v1468
      %1552 = vst.msk [vmem:[#allocation3 + $0x70] sm:$0xff] %vm1537, %v1470
      %1553 = vst.msk [vmem:[#allocation3 + $0x78] sm:$0xff] %vm1537, %v1472
      %1554 = vst.msk [vmem:[#allocation3 + $0x80] sm:$0xff] %vm1537, %v1474
      %1555 = vst.msk [vmem:[#allocation3 + $0x88] sm:$0xff] %vm1537, %v1476
      %1556 = vst.msk [vmem:[#allocation3 + $0x90] sm:$0xff] %vm1537, %v1478
      %1557 = vst.msk [vmem:[#allocation3 + $0x98] sm:$0xff] %vm1537, %v1480
      %1558 = vst.msk [vmem:[#allocation3 + $0xa0] sm:$0xff] %vm1537, %v1482
      %1559 = vst.msk [vmem:[#allocation3 + $0xa8] sm:$0xff] %vm1537, %v1484
      %1560 = vst.msk [vmem:[#allocation3 + $0xb0] sm:$0xff] %vm1537, %v1486
      %1561 = vst.msk [vmem:[#allocation3 + $0xb8] sm:$0xff] %vm1537, %v1488
      %1562 = vst.msk [vmem:[#allocation3 + $0xc0] sm:$0xff] %vm1537, %v1490
      %1563 = vst.msk [vmem:[#allocation3 + $0xc8] sm:$0xff] %vm1537, %v1492
      %1564 = vst.msk [vmem:[#allocation3 + $0xd0] sm:$0xff] %vm1537, %v1494
      %1565 = vst.msk [vmem:[#allocation3 + $0xd8] sm:$0xff] %vm1537, %v1496
      %1566 = vst.msk [vmem:[#allocation3 + $0xe0] sm:$0xff] %vm1537, %v1498
      %1567 = vst.msk [vmem:[#allocation3 + $0xe8] sm:$0xff] %vm1537, %v1500
      %1568 = vst.msk [vmem:[#allocation3 + $0xf0] sm:$0xff] %vm1537, %v1502
      %1569 = vst.msk [vmem:[#allocation3 + $0xf8] sm:$0xff] %vm1537, %v1504
      %v1570 = vld [vmem:[%s1376 + $0x1] sm:$0xff]
      %v1571 = vld [vmem:[%s1376 + $0x9] sm:$0xff]
      %v1572 = vld [vmem:[%s1376 + $0x19] sm:$0xff]
      %v1573 = vld [vmem:[%s1376 + $0x21] sm:$0xff]
      %v1574 = vld [vmem:[%s1376 + $0x31] sm:$0xff]
      %v1575 = vld [vmem:[%s1376 + $0x39] sm:$0xff]
      %v1576 = vld [vmem:[%s1376 + $0x49] sm:$0xff]
      %v1577 = vld [vmem:[%s1376 + $0x51] sm:$0xff]
      %v1578 = vld [vmem:[%s1376 + $0x61] sm:$0xff]
      %v1579 = vld [vmem:[%s1376 + $0x69] sm:$0xff]
      %v1580 = vld [vmem:[%s1376 + $0x79] sm:$0xff]
      %v1581 = vld [vmem:[%s1376 + $0x81] sm:$0xff]
      %v1582 = vld [vmem:[%s1376 + $0x91] sm:$0xff]
      %v1583 = vld [vmem:[%s1376 + $0x99] sm:$0xff]
      %v1584 = vld [vmem:[%s1376 + $0xa9] sm:$0xff]
      %v1585 = vld [vmem:[%s1376 + $0xb1] sm:$0xff]
      %v1586 = vld [vmem:[%s1376 + $0xc1] sm:$0xff]
      %v1587 = vld [vmem:[%s1376 + $0xc9] sm:$0xff]
      %v1588 = vld [vmem:[%s1376 + $0xd9] sm:$0xff]
      %v1589 = vld [vmem:[%s1376 + $0xe1] sm:$0xff]
      %v1590 = vld [vmem:[%s1376 + $0xf1] sm:$0xff]
      %v1591 = vld [vmem:[%s1376 + $0xf9] sm:$0xff]
      %v1592 = vld [vmem:[%s1376 + $0x109] sm:$0xff]
      %v1593 = vld [vmem:[%s1376 + $0x111] sm:$0xff]
      %v1594 = vld [vmem:[%s1376 + $0x121] sm:$0xff]
      %v1595 = vld [vmem:[%s1376 + $0x129] sm:$0xff]
      %v1596 = vld [vmem:[%s1376 + $0x139] sm:$0xff]
      %v1597 = vld [vmem:[%s1376 + $0x141] sm:$0xff]
      %v1598 = vld [vmem:[%s1376 + $0x151] sm:$0xff]
      %v1599 = vld [vmem:[%s1376 + $0x159] sm:$0xff]
      %v1600 = vld [vmem:[%s1376 + $0x169] sm:$0xff]
      %v1601 = vld [vmem:[%s1376 + $0x171] sm:$0xff]
      %1634 = vrot.lane.b32.xlu0 %v1570, 28
      %v1635 = vpop.permute.xlu0 %1634
      %1636 = vrot.lane.b32.xlu0 %v1571, 28
      %v1637 = vpop.permute.xlu0 %1636
      %1638 = vrot.lane.b32.xlu0 %v1572, 28
      %v1639 = vpop.permute.xlu0 %1638
      %1640 = vrot.lane.b32.xlu0 %v1573, 28
      %v1641 = vpop.permute.xlu0 %1640
      %1642 = vrot.lane.b32.xlu0 %v1574, 28
      %v1643 = vpop.permute.xlu0 %1642
      %1644 = vrot.lane.b32.xlu0 %v1575, 28
      %v1645 = vpop.permute.xlu0 %1644
      %1646 = vrot.lane.b32.xlu0 %v1576, 28
      %v1647 = vpop.permute.xlu0 %1646
      %1648 = vrot.lane.b32.xlu0 %v1577, 28
      %v1649 = vpop.permute.xlu0 %1648
      %1650 = vrot.lane.b32.xlu0 %v1578, 28
      %v1651 = vpop.permute.xlu0 %1650
      %1652 = vrot.lane.b32.xlu0 %v1579, 28
      %v1653 = vpop.permute.xlu0 %1652
      %1654 = vrot.lane.b32.xlu0 %v1580, 28
      %v1655 = vpop.permute.xlu0 %1654
      %1656 = vrot.lane.b32.xlu0 %v1581, 28
      %v1657 = vpop.permute.xlu0 %1656
      %1658 = vrot.lane.b32.xlu0 %v1582, 28
      %v1659 = vpop.permute.xlu0 %1658
      %1660 = vrot.lane.b32.xlu0 %v1583, 28
      %v1661 = vpop.permute.xlu0 %1660
      %1662 = vrot.lane.b32.xlu0 %v1584, 28
      %v1663 = vpop.permute.xlu0 %1662
      %1664 = vrot.lane.b32.xlu0 %v1585, 28
      %v1665 = vpop.permute.xlu0 %1664
      %1666 = vrot.lane.b32.xlu0 %v1586, 28
      %v1667 = vpop.permute.xlu0 %1666
      %1668 = vrot.lane.b32.xlu0 %v1587, 28
      %v1669 = vpop.permute.xlu0 %1668
      %1670 = vrot.lane.b32.xlu0 %v1588, 28
      %v1671 = vpop.permute.xlu0 %1670
      %1672 = vrot.lane.b32.xlu0 %v1589, 28
      %v1673 = vpop.permute.xlu0 %1672
      %1674 = vrot.lane.b32.xlu0 %v1590, 28
      %v1675 = vpop.permute.xlu0 %1674
      %1676 = vrot.lane.b32.xlu0 %v1591, 28
      %v1677 = vpop.permute.xlu0 %1676
      %1678 = vrot.lane.b32.xlu0 %v1592, 28
      %v1679 = vpop.permute.xlu0 %1678
      %1680 = vrot.lane.b32.xlu0 %v1593, 28
      %v1681 = vpop.permute.xlu0 %1680
      %1682 = vrot.lane.b32.xlu0 %v1594, 28
      %v1683 = vpop.permute.xlu0 %1682
      %1684 = vrot.lane.b32.xlu0 %v1595, 28
      %v1685 = vpop.permute.xlu0 %1684
      %1686 = vrot.lane.b32.xlu0 %v1596, 28
      %v1687 = vpop.permute.xlu0 %1686
      %1688 = vrot.lane.b32.xlu0 %v1597, 28
      %v1689 = vpop.permute.xlu0 %1688
      %1690 = vrot.lane.b32.xlu0 %v1598, 28
      %v1691 = vpop.permute.xlu0 %1690
      %1692 = vrot.lane.b32.xlu0 %v1599, 28
      %v1693 = vpop.permute.xlu0 %1692
      %1694 = vrot.lane.b32.xlu0 %v1600, 28
      %v1695 = vpop.permute.xlu0 %1694
      %1696 = vrot.lane.b32.xlu0 %v1601, 28
      %v1697 = vpop.permute.xlu0 %1696
      %vm1730 = vcmask 261344
      %1731 = vst.msk [vmem:[#allocation3] sm:$0xff] %vm1730, %v1635
      %1732 = vst.msk [vmem:[#allocation3 + $0x8] sm:$0xff] %vm1730, %v1637
      %1733 = vst.msk [vmem:[#allocation3 + $0x10] sm:$0xff] %vm1730, %v1639
      %1734 = vst.msk [vmem:[#allocation3 + $0x18] sm:$0xff] %vm1730, %v1641
      %1735 = vst.msk [vmem:[#allocation3 + $0x20] sm:$0xff] %vm1730, %v1643
      %1736 = vst.msk [vmem:[#allocation3 + $0x28] sm:$0xff] %vm1730, %v1645
      %1737 = vst.msk [vmem:[#allocation3 + $0x30] sm:$0xff] %vm1730, %v1647
      %1738 = vst.msk [vmem:[#allocation3 + $0x38] sm:$0xff] %vm1730, %v1649
      %1739 = vst.msk [vmem:[#allocation3 + $0x40] sm:$0xff] %vm1730, %v1651
      %1740 = vst.msk [vmem:[#allocation3 + $0x48] sm:$0xff] %vm1730, %v1653
      %1741 = vst.msk [vmem:[#allocation3 + $0x50] sm:$0xff] %vm1730, %v1655
      %1742 = vst.msk [vmem:[#allocation3 + $0x58] sm:$0xff] %vm1730, %v1657
      %1743 = vst.msk [vmem:[#allocation3 + $0x60] sm:$0xff] %vm1730, %v1659
      %1744 = vst.msk [vmem:[#allocation3 + $0x68] sm:$0xff] %vm1730, %v1661
      %1745 = vst.msk [vmem:[#allocation3 + $0x70] sm:$0xff] %vm1730, %v1663
      %1746 = vst.msk [vmem:[#allocation3 + $0x78] sm:$0xff] %vm1730, %v1665
      %1747 = vst.msk [vmem:[#allocation3 + $0x80] sm:$0xff] %vm1730, %v1667
      %1748 = vst.msk [vmem:[#allocation3 + $0x88] sm:$0xff] %vm1730, %v1669
      %1749 = vst.msk [vmem:[#allocation3 + $0x90] sm:$0xff] %vm1730, %v1671
      %1750 = vst.msk [vmem:[#allocation3 + $0x98] sm:$0xff] %vm1730, %v1673
      %1751 = vst.msk [vmem:[#allocation3 + $0xa0] sm:$0xff] %vm1730, %v1675
      %1752 = vst.msk [vmem:[#allocation3 + $0xa8] sm:$0xff] %vm1730, %v1677
      %1753 = vst.msk [vmem:[#allocation3 + $0xb0] sm:$0xff] %vm1730, %v1679
      %1754 = vst.msk [vmem:[#allocation3 + $0xb8] sm:$0xff] %vm1730, %v1681
      %1755 = vst.msk [vmem:[#allocation3 + $0xc0] sm:$0xff] %vm1730, %v1683
      %1756 = vst.msk [vmem:[#allocation3 + $0xc8] sm:$0xff] %vm1730, %v1685
      %1757 = vst.msk [vmem:[#allocation3 + $0xd0] sm:$0xff] %vm1730, %v1687
      %1758 = vst.msk [vmem:[#allocation3 + $0xd8] sm:$0xff] %vm1730, %v1689
      %1759 = vst.msk [vmem:[#allocation3 + $0xe0] sm:$0xff] %vm1730, %v1691
      %1760 = vst.msk [vmem:[#allocation3 + $0xe8] sm:$0xff] %vm1730, %v1693
      %1761 = vst.msk [vmem:[#allocation3 + $0xf0] sm:$0xff] %vm1730, %v1695
      %1762 = vst.msk [vmem:[#allocation3 + $0xf8] sm:$0xff] %vm1730, %v1697
      %v1763 = vld [vmem:[%s1376 + $0x2] sm:$0xff]
      %v1764 = vld [vmem:[%s1376 + $0xa] sm:$0xff]
      %v1765 = vld [vmem:[%s1376 + $0x1a] sm:$0xff]
      %v1766 = vld [vmem:[%s1376 + $0x22] sm:$0xff]
      %v1767 = vld [vmem:[%s1376 + $0x32] sm:$0xff]
      %v1768 = vld [vmem:[%s1376 + $0x3a] sm:$0xff]
      %v1769 = vld [vmem:[%s1376 + $0x4a] sm:$0xff]
      %v1770 = vld [vmem:[%s1376 + $0x52] sm:$0xff]
      %v1771 = vld [vmem:[%s1376 + $0x62] sm:$0xff]
      %v1772 = vld [vmem:[%s1376 + $0x6a] sm:$0xff]
      %v1773 = vld [vmem:[%s1376 + $0x7a] sm:$0xff]
      %v1774 = vld [vmem:[%s1376 + $0x82] sm:$0xff]
      %v1775 = vld [vmem:[%s1376 + $0x92] sm:$0xff]
      %v1776 = vld [vmem:[%s1376 + $0x9a] sm:$0xff]
      %v1777 = vld [vmem:[%s1376 + $0xaa] sm:$0xff]
      %v1778 = vld [vmem:[%s1376 + $0xb2] sm:$0xff]
      %v1779 = vld [vmem:[%s1376 + $0xc2] sm:$0xff]
      %v1780 = vld [vmem:[%s1376 + $0xca] sm:$0xff]
      %v1781 = vld [vmem:[%s1376 + $0xda] sm:$0xff]
      %v1782 = vld [vmem:[%s1376 + $0xe2] sm:$0xff]
      %v1783 = vld [vmem:[%s1376 + $0xf2] sm:$0xff]
      %v1784 = vld [vmem:[%s1376 + $0xfa] sm:$0xff]
      %v1785 = vld [vmem:[%s1376 + $0x10a] sm:$0xff]
      %v1786 = vld [vmem:[%s1376 + $0x112] sm:$0xff]
      %v1787 = vld [vmem:[%s1376 + $0x122] sm:$0xff]
      %v1788 = vld [vmem:[%s1376 + $0x12a] sm:$0xff]
      %v1789 = vld [vmem:[%s1376 + $0x13a] sm:$0xff]
      %v1790 = vld [vmem:[%s1376 + $0x142] sm:$0xff]
      %v1791 = vld [vmem:[%s1376 + $0x152] sm:$0xff]
      %v1792 = vld [vmem:[%s1376 + $0x15a] sm:$0xff]
      %v1793 = vld [vmem:[%s1376 + $0x16a] sm:$0xff]
      %v1794 = vld [vmem:[%s1376 + $0x172] sm:$0xff]
      %1827 = vrot.lane.b32.xlu0 %v1763, 32
      %v1828 = vpop.permute.xlu0 %1827
      %1829 = vrot.lane.b32.xlu0 %v1764, 32
      %v1830 = vpop.permute.xlu0 %1829
      %1831 = vrot.lane.b32.xlu0 %v1765, 32
      %v1832 = vpop.permute.xlu0 %1831
      %1833 = vrot.lane.b32.xlu0 %v1766, 32
      %v1834 = vpop.permute.xlu0 %1833
      %1835 = vrot.lane.b32.xlu0 %v1767, 32
      %v1836 = vpop.permute.xlu0 %1835
      %1837 = vrot.lane.b32.xlu0 %v1768, 32
      %v1838 = vpop.permute.xlu0 %1837
      %1839 = vrot.lane.b32.xlu0 %v1769, 32
      %v1840 = vpop.permute.xlu0 %1839
      %1841 = vrot.lane.b32.xlu0 %v1770, 32
      %v1842 = vpop.permute.xlu0 %1841
      %1843 = vrot.lane.b32.xlu0 %v1771, 32
      %v1844 = vpop.permute.xlu0 %1843
      %1845 = vrot.lane.b32.xlu0 %v1772, 32
      %v1846 = vpop.permute.xlu0 %1845
      %1847 = vrot.lane.b32.xlu0 %v1773, 32
      %v1848 = vpop.permute.xlu0 %1847
      %1849 = vrot.lane.b32.xlu0 %v1774, 32
      %v1850 = vpop.permute.xlu0 %1849
      %1851 = vrot.lane.b32.xlu0 %v1775, 32
      %v1852 = vpop.permute.xlu0 %1851
      %1853 = vrot.lane.b32.xlu0 %v1776, 32
      %v1854 = vpop.permute.xlu0 %1853
      %1855 = vrot.lane.b32.xlu0 %v1777, 32
      %v1856 = vpop.permute.xlu0 %1855
      %1857 = vrot.lane.b32.xlu0 %v1778, 32
      %v1858 = vpop.permute.xlu0 %1857
      %1859 = vrot.lane.b32.xlu0 %v1779, 32
      %v1860 = vpop.permute.xlu0 %1859
      %1861 = vrot.lane.b32.xlu0 %v1780, 32
      %v1862 = vpop.permute.xlu0 %1861
      %1863 = vrot.lane.b32.xlu0 %v1781, 32
      %v1864 = vpop.permute.xlu0 %1863
      %1865 = vrot.lane.b32.xlu0 %v1782, 32
      %v1866 = vpop.permute.xlu0 %1865
      %1867 = vrot.lane.b32.xlu0 %v1783, 32
      %v1868 = vpop.permute.xlu0 %1867
      %1869 = vrot.lane.b32.xlu0 %v1784, 32
      %v1870 = vpop.permute.xlu0 %1869
      %1871 = vrot.lane.b32.xlu0 %v1785, 32
      %v1872 = vpop.permute.xlu0 %1871
      %1873 = vrot.lane.b32.xlu0 %v1786, 32
      %v1874 = vpop.permute.xlu0 %1873
      %1875 = vrot.lane.b32.xlu0 %v1787, 32
      %v1876 = vpop.permute.xlu0 %1875
      %1877 = vrot.lane.b32.xlu0 %v1788, 32
      %v1878 = vpop.permute.xlu0 %1877
      %1879 = vrot.lane.b32.xlu0 %v1789, 32
      %v1880 = vpop.permute.xlu0 %1879
      %1881 = vrot.lane.b32.xlu0 %v1790, 32
      %v1882 = vpop.permute.xlu0 %1881
      %1883 = vrot.lane.b32.xlu0 %v1791, 32
      %v1884 = vpop.permute.xlu0 %1883
      %1885 = vrot.lane.b32.xlu0 %v1792, 32
      %v1886 = vpop.permute.xlu0 %1885
      %1887 = vrot.lane.b32.xlu0 %v1793, 32
      %v1888 = vpop.permute.xlu0 %1887
      %1889 = vrot.lane.b32.xlu0 %v1794, 32
      %v1890 = vpop.permute.xlu0 %1889
      %vm1923 = vcmask 294144
      %1924 = vst.msk [vmem:[#allocation3] sm:$0xff] %vm1923, %v1828
      %1925 = vst.msk [vmem:[#allocation3 + $0x8] sm:$0xff] %vm1923, %v1830
      %1926 = vst.msk [vmem:[#allocation3 + $0x10] sm:$0xff] %vm1923, %v1832
      %1927 = vst.msk [vmem:[#allocation3 + $0x18] sm:$0xff] %vm1923, %v1834
      %1928 = vst.msk [vmem:[#allocation3 + $0x20] sm:$0xff] %vm1923, %v1836
      %1929 = vst.msk [vmem:[#allocation3 + $0x28] sm:$0xff] %vm1923, %v1838
      %1930 = vst.msk [vmem:[#allocation3 + $0x30] sm:$0xff] %vm1923, %v1840
      %1931 = vst.msk [vmem:[#allocation3 + $0x38] sm:$0xff] %vm1923, %v1842
      %1932 = vst.msk [vmem:[#allocation3 + $0x40] sm:$0xff] %vm1923, %v1844
      %1933 = vst.msk [vmem:[#allocation3 + $0x48] sm:$0xff] %vm1923, %v1846
      %1934 = vst.msk [vmem:[#allocation3 + $0x50] sm:$0xff] %vm1923, %v1848
      %1935 = vst.msk [vmem:[#allocation3 + $0x58] sm:$0xff] %vm1923, %v1850
      %1936 = vst.msk [vmem:[#allocation3 + $0x60] sm:$0xff] %vm1923, %v1852
      %1937 = vst.msk [vmem:[#allocation3 + $0x68] sm:$0xff] %vm1923, %v1854
      %1938 = vst.msk [vmem:[#allocation3 + $0x70] sm:$0xff] %vm1923, %v1856
      %1939 = vst.msk [vmem:[#allocation3 + $0x78] sm:$0xff] %vm1923, %v1858
      %1940 = vst.msk [vmem:[#allocation3 + $0x80] sm:$0xff] %vm1923, %v1860
      %1941 = vst.msk [vmem:[#allocation3 + $0x88] sm:$0xff] %vm1923, %v1862
      %1942 = vst.msk [vmem:[#allocation3 + $0x90] sm:$0xff] %vm1923, %v1864
      %1943 = vst.msk [vmem:[#allocation3 + $0x98] sm:$0xff] %vm1923, %v1866
      %1944 = vst.msk [vmem:[#allocation3 + $0xa0] sm:$0xff] %vm1923, %v1868
      %1945 = vst.msk [vmem:[#allocation3 + $0xa8] sm:$0xff] %vm1923, %v1870
      %1946 = vst.msk [vmem:[#allocation3 + $0xb0] sm:$0xff] %vm1923, %v1872
      %1947 = vst.msk [vmem:[#allocation3 + $0xb8] sm:$0xff] %vm1923, %v1874
      %1948 = vst.msk [vmem:[#allocation3 + $0xc0] sm:$0xff] %vm1923, %v1876
      %1949 = vst.msk [vmem:[#allocation3 + $0xc8] sm:$0xff] %vm1923, %v1878
      %1950 = vst.msk [vmem:[#allocation3 + $0xd0] sm:$0xff] %vm1923, %v1880
      %1951 = vst.msk [vmem:[#allocation3 + $0xd8] sm:$0xff] %vm1923, %v1882
      %1952 = vst.msk [vmem:[#allocation3 + $0xe0] sm:$0xff] %vm1923, %v1884
      %1953 = vst.msk [vmem:[#allocation3 + $0xe8] sm:$0xff] %vm1923, %v1886
      %1954 = vst.msk [vmem:[#allocation3 + $0xf0] sm:$0xff] %vm1923, %v1888
      %1955 = vst.msk [vmem:[#allocation3 + $0xf8] sm:$0xff] %vm1923, %v1890
      %v1956 = vld [vmem:[#allocation3] sm:$0xff]
      %v1957 = vld [vmem:[#allocation3 + $0x8] sm:$0xff]
      %v1958 = vld [vmem:[#allocation3 + $0x10] sm:$0xff]
      %v1959 = vld [vmem:[#allocation3 + $0x18] sm:$0xff]
      %v1960 = vld [vmem:[#allocation3 + $0x20] sm:$0xff]
      %v1961 = vld [vmem:[#allocation3 + $0x28] sm:$0xff]
      %v1962 = vld [vmem:[#allocation3 + $0x30] sm:$0xff]
      %v1963 = vld [vmem:[#allocation3 + $0x38] sm:$0xff]
      %v1964 = vld [vmem:[#allocation3 + $0x40] sm:$0xff]
      %v1965 = vld [vmem:[#allocation3 + $0x48] sm:$0xff]
      %v1966 = vld [vmem:[#allocation3 + $0x50] sm:$0xff]
      %v1967 = vld [vmem:[#allocation3 + $0x58] sm:$0xff]
      %v1968 = vld [vmem:[#allocation3 + $0x60] sm:$0xff]
      %v1969 = vld [vmem:[#allocation3 + $0x68] sm:$0xff]
      %v1970 = vld [vmem:[#allocation3 + $0x70] sm:$0xff]
      %v1971 = vld [vmem:[#allocation3 + $0x78] sm:$0xff]
      %v1972 = vld [vmem:[#allocation3 + $0x80] sm:$0xff]
      %v1973 = vld [vmem:[#allocation3 + $0x88] sm:$0xff]
      %v1974 = vld [vmem:[#allocation3 + $0x90] sm:$0xff]
      %v1975 = vld [vmem:[#allocation3 + $0x98] sm:$0xff]
      %v1976 = vld [vmem:[#allocation3 + $0xa0] sm:$0xff]
      %v1977 = vld [vmem:[#allocation3 + $0xa8] sm:$0xff]
      %v1978 = vld [vmem:[#allocation3 + $0xb0] sm:$0xff]
      %v1979 = vld [vmem:[#allocation3 + $0xb8] sm:$0xff]
      %v1980 = vld [vmem:[#allocation3 + $0xc0] sm:$0xff]
      %v1981 = vld [vmem:[#allocation3 + $0xc8] sm:$0xff]
      %v1982 = vld [vmem:[#allocation3 + $0xd0] sm:$0xff]
      %v1983 = vld [vmem:[#allocation3 + $0xd8] sm:$0xff]
      %v1984 = vld [vmem:[#allocation3 + $0xe0] sm:$0xff]
      %v1985 = vld [vmem:[#allocation3 + $0xe8] sm:$0xff]
      %v1986 = vld [vmem:[#allocation3 + $0xf0] sm:$0xff]
      %v1987 = vld [vmem:[#allocation3 + $0xf8] sm:$0xff]
      %v1988 = vpack.c.bf16 %v1957, %v1956
      %v1989 = vpack.c.bf16 %v1959, %v1958
      %v1990 = vpack.c.bf16 %v1961, %v1960
      %v1991 = vpack.c.bf16 %v1963, %v1962
      %v1992 = vpack.c.bf16 %v1965, %v1964
      %v1993 = vpack.c.bf16 %v1967, %v1966
      %v1994 = vpack.c.bf16 %v1969, %v1968
      %v1995 = vpack.c.bf16 %v1971, %v1970
      %v1996 = vpack.c.bf16 %v1973, %v1972
      %v1997 = vpack.c.bf16 %v1975, %v1974
      %v1998 = vpack.c.bf16 %v1977, %v1976
      %v1999 = vpack.c.bf16 %v1979, %v1978
      %v2000 = vpack.c.bf16 %v1981, %v1980
      %v2001 = vpack.c.bf16 %v1983, %v1982
      %v2002 = vpack.c.bf16 %v1985, %v1984
      %v2003 = vpack.c.bf16 %v1987, %v1986
      %v2004 = vld [vmem:[%s1] sm:$0xf]
      %v2005 = vld [vmem:[%s1 + $0x4] sm:$0xf]
      %v2006 = vld [vmem:[%s1 + $0x8] sm:$0xf]
      %v2007 = vld [vmem:[%s1 + $0xc] sm:$0xf]
      %v2008 = vld [vmem:[%s1 + $0x10] sm:$0x3]
      %v2009 = vld [vmem:[%s2] sm:$0x1]
      %v2011 = vperm.slane %v2009, 0
      %v2018 = vunpack.c.l.b16 %v2004
      %v2019 = vunpack.c.l.b16 %v2005
      %v2020 = vunpack.c.l.b16 %v2006
      %v2021 = vunpack.c.l.b16 %v2007
      %v2022 = vunpack.c.l.b16 %v2008
      %v2023 = vpack.c.b16 %v2019, %v2018
      %v2024 = vpack.c.b16 %v2021, %v2020
      %v2025 = vpack.c.b16 %v2022, %v2022
      %vm2028 = vcmask 293888
      %v2030 = vsel %vm2028, %v1988, 0
      %v2033 = vsel %vm2028, %v1989, 0
      %v2036 = vsel %vm2028, %v1990, 0
      %v2039 = vsel %vm2028, %v1991, 0
      %v2042 = vsel %vm2028, %v1992, 0
      %v2045 = vsel %vm2028, %v1993, 0
      %v2048 = vsel %vm2028, %v1994, 0
      %v2051 = vsel %vm2028, %v1995, 0
      %v2054 = vsel %vm2028, %v1996, 0
      %v2057 = vsel %vm2028, %v1997, 0
      %v2060 = vsel %vm2028, %v1998, 0
      %v2063 = vsel %vm2028, %v1999, 0
      %v2066 = vsel %vm2028, %v2000, 0
      %v2069 = vsel %vm2028, %v2001, 0
      %v2072 = vsel %vm2028, %v2002, 0
      %v2075 = vsel %vm2028, %v2003, 0
      %vm2077 = vcmask 1041408
      %v2079 = vsel %vm2077, %v2025, 0
      %2081 = vmatpush.bf16.msra.mxu0 0
      %2082 = vmatpush.bf16.msra.mxu0 0
      %2083 = vmatpush.bf16.msra.mxu0 0
      %2084 = vmatpush.bf16.msra.mxu0 0
      %2085 = vmatpush.bf16.msra.mxu0 0
      %2086 = vmatpush.bf16.msra.mxu0 %v2079
      %2087 = vmatpush.bf16.msra.mxu0 %v2024
      %2088 = vmatpush.bf16.msra.mxu0 %v2023
      %2089 = vmatmul.bf16.gmra.mxu0 %v2030
      %v2090 = vpop.f32.mrf.mxu0
      %v2091 = vadd.f32 %v2011, %v2090
      %v2092 = vpop.f32.mrf.mxu0
      %v2093 = vadd.f32 %v2011, %v2092
      %2094 = vmatmul.bf16.gmra.mxu0 %v2033
      %v2095 = vpop.f32.mrf.mxu0
      %v2096 = vadd.f32 %v2011, %v2095
      %v2097 = vpop.f32.mrf.mxu0
      %v2098 = vadd.f32 %v2011, %v2097
      %2099 = vmatmul.bf16.gmra.mxu0 %v2036
      %v2100 = vpop.f32.mrf.mxu0
      %v2101 = vadd.f32 %v2011, %v2100
      %v2102 = vpop.f32.mrf.mxu0
      %v2103 = vadd.f32 %v2011, %v2102
      %2104 = vmatmul.bf16.gmra.mxu0 %v2039
      %v2105 = vpop.f32.mrf.mxu0
      %v2106 = vadd.f32 %v2011, %v2105
      %v2107 = vpop.f32.mrf.mxu0
      %v2108 = vadd.f32 %v2011, %v2107
      %2109 = vmatmul.bf16.gmra.mxu0 %v2042
      %v2110 = vpop.f32.mrf.mxu0
      %v2111 = vadd.f32 %v2011, %v2110
      %v2112 = vpop.f32.mrf.mxu0
      %v2113 = vadd.f32 %v2011, %v2112
      %2114 = vmatmul.bf16.gmra.mxu0 %v2045
      %v2115 = vpop.f32.mrf.mxu0
      %v2116 = vadd.f32 %v2011, %v2115
      %v2117 = vpop.f32.mrf.mxu0
      %v2118 = vadd.f32 %v2011, %v2117
      %2119 = vmatmul.bf16.gmra.mxu0 %v2048
      %v2120 = vpop.f32.mrf.mxu0
      %v2121 = vadd.f32 %v2011, %v2120
      %v2122 = vpop.f32.mrf.mxu0
      %v2123 = vadd.f32 %v2011, %v2122
      %2124 = vmatmul.bf16.gmra.mxu0 %v2051
      %v2125 = vpop.f32.mrf.mxu0
      %v2126 = vadd.f32 %v2011, %v2125
      %v2127 = vpop.f32.mrf.mxu0
      %v2128 = vadd.f32 %v2011, %v2127
      %2129 = vmatmul.bf16.gmra.mxu0 %v2054
      %v2130 = vpop.f32.mrf.mxu0
      %v2131 = vadd.f32 %v2011, %v2130
      %v2132 = vpop.f32.mrf.mxu0
      %v2133 = vadd.f32 %v2011, %v2132
      %2134 = vmatmul.bf16.gmra.mxu0 %v2057
      %v2135 = vpop.f32.mrf.mxu0
      %v2136 = vadd.f32 %v2011, %v2135
      %v2137 = vpop.f32.mrf.mxu0
      %v2138 = vadd.f32 %v2011, %v2137
      %2139 = vmatmul.bf16.gmra.mxu0 %v2060
      %v2140 = vpop.f32.mrf.mxu0
      %v2141 = vadd.f32 %v2011, %v2140
      %v2142 = vpop.f32.mrf.mxu0
      %v2143 = vadd.f32 %v2011, %v2142
      %2144 = vmatmul.bf16.gmra.mxu0 %v2063
      %v2145 = vpop.f32.mrf.mxu0
      %v2146 = vadd.f32 %v2011, %v2145
      %v2147 = vpop.f32.mrf.mxu0
      %v2148 = vadd.f32 %v2011, %v2147
      %2149 = vmatmul.bf16.gmra.mxu0 %v2066
      %v2150 = vpop.f32.mrf.mxu0
      %v2151 = vadd.f32 %v2011, %v2150
      %v2152 = vpop.f32.mrf.mxu0
      %v2153 = vadd.f32 %v2011, %v2152
      %2154 = vmatmul.bf16.gmra.mxu0 %v2069
      %v2155 = vpop.f32.mrf.mxu0
      %v2156 = vadd.f32 %v2011, %v2155
      %v2157 = vpop.f32.mrf.mxu0
      %v2158 = vadd.f32 %v2011, %v2157
      %2159 = vmatmul.bf16.gmra.mxu0 %v2072
      %v2160 = vpop.f32.mrf.mxu0
      %v2161 = vadd.f32 %v2011, %v2160
      %v2162 = vpop.f32.mrf.mxu0
      %v2163 = vadd.f32 %v2011, %v2162
      %2164 = vmatmul.bf16.gmra.mxu0 %v2075
      %v2165 = vpop.f32.mrf.mxu0
      %v2166 = vadd.f32 %v2011, %v2165
      %v2167 = vpop.f32.mrf.mxu0
      %v2168 = vadd.f32 %v2011, %v2167
      %2169 = vdwg.mxu0
      %vm2170 = vcmp.ge.f32.partialorder %v2091, 0.0
      %vm2171 = vcmp.ge.f32.partialorder %v2093, 0.0
      %vm2172 = vcmp.ge.f32.partialorder %v2096, 0.0
      %vm2173 = vcmp.ge.f32.partialorder %v2098, 0.0
      %vm2174 = vcmp.ge.f32.partialorder %v2101, 0.0
      %vm2175 = vcmp.ge.f32.partialorder %v2103, 0.0
      %vm2176 = vcmp.ge.f32.partialorder %v2106, 0.0
      %vm2177 = vcmp.ge.f32.partialorder %v2108, 0.0
      %vm2178 = vcmp.ge.f32.partialorder %v2111, 0.0
      %vm2179 = vcmp.ge.f32.partialorder %v2113, 0.0
      %vm2180 = vcmp.ge.f32.partialorder %v2116, 0.0
      %vm2181 = vcmp.ge.f32.partialorder %v2118, 0.0
      %vm2182 = vcmp.ge.f32.partialorder %v2121, 0.0
      %vm2183 = vcmp.ge.f32.partialorder %v2123, 0.0
      %vm2184 = vcmp.ge.f32.partialorder %v2126, 0.0
      %vm2185 = vcmp.ge.f32.partialorder %v2128, 0.0
      %vm2186 = vcmp.ge.f32.partialorder %v2131, 0.0
      %vm2187 = vcmp.ge.f32.partialorder %v2133, 0.0
      %vm2188 = vcmp.ge.f32.partialorder %v2136, 0.0
      %vm2189 = vcmp.ge.f32.partialorder %v2138, 0.0
      %vm2190 = vcmp.ge.f32.partialorder %v2141, 0.0
      %vm2191 = vcmp.ge.f32.partialorder %v2143, 0.0
      %vm2192 = vcmp.ge.f32.partialorder %v2146, 0.0
      %vm2193 = vcmp.ge.f32.partialorder %v2148, 0.0
      %vm2194 = vcmp.ge.f32.partialorder %v2151, 0.0
      %vm2195 = vcmp.ge.f32.partialorder %v2153, 0.0
      %vm2196 = vcmp.ge.f32.partialorder %v2156, 0.0
      %vm2197 = vcmp.ge.f32.partialorder %v2158, 0.0
      %vm2198 = vcmp.ge.f32.partialorder %v2161, 0.0
      %vm2199 = vcmp.ge.f32.partialorder %v2163, 0.0
      %vm2200 = vcmp.ge.f32.partialorder %v2166, 0.0
      %vm2201 = vcmp.ge.f32.partialorder %v2168, 0.0
      %v2202 = vmul.f32 %v2091, 0.2
      %v2203 = vmul.f32 %v2093, 0.2
      %v2204 = vmul.f32 %v2096, 0.2
      %v2205 = vmul.f32 %v2098, 0.2
      %v2206 = vmul.f32 %v2101, 0.2
      %v2207 = vmul.f32 %v2103, 0.2
      %v2208 = vmul.f32 %v2106, 0.2
      %v2209 = vmul.f32 %v2108, 0.2
      %v2210 = vmul.f32 %v2111, 0.2
      %v2211 = vmul.f32 %v2113, 0.2
      %v2212 = vmul.f32 %v2116, 0.2
      %v2213 = vmul.f32 %v2118, 0.2
      %v2214 = vmul.f32 %v2121, 0.2
      %v2215 = vmul.f32 %v2123, 0.2
      %v2216 = vmul.f32 %v2126, 0.2
      %v2217 = vmul.f32 %v2128, 0.2
      %v2218 = vmul.f32 %v2131, 0.2
      %v2219 = vmul.f32 %v2133, 0.2
      %v2220 = vmul.f32 %v2136, 0.2
      %v2221 = vmul.f32 %v2138, 0.2
      %v2222 = vmul.f32 %v2141, 0.2
      %v2223 = vmul.f32 %v2143, 0.2
      %v2224 = vmul.f32 %v2146, 0.2
      %v2225 = vmul.f32 %v2148, 0.2
      %v2226 = vmul.f32 %v2151, 0.2
      %v2227 = vmul.f32 %v2153, 0.2
      %v2228 = vmul.f32 %v2156, 0.2
      %v2229 = vmul.f32 %v2158, 0.2
      %v2230 = vmul.f32 %v2161, 0.2
      %v2231 = vmul.f32 %v2163, 0.2
      %v2232 = vmul.f32 %v2166, 0.2
      %v2233 = vmul.f32 %v2168, 0.2
      %v2234 = vsel %vm2170, %v2091, %v2202
      %v2235 = vsel %vm2171, %v2093, %v2203
      %v2236 = vsel %vm2172, %v2096, %v2204
      %v2237 = vsel %vm2173, %v2098, %v2205
      %v2238 = vsel %vm2174, %v2101, %v2206
      %v2239 = vsel %vm2175, %v2103, %v2207
      %v2240 = vsel %vm2176, %v2106, %v2208
      %v2241 = vsel %vm2177, %v2108, %v2209
      %v2242 = vsel %vm2178, %v2111, %v2210
      %v2243 = vsel %vm2179, %v2113, %v2211
      %v2244 = vsel %vm2180, %v2116, %v2212
      %v2245 = vsel %vm2181, %v2118, %v2213
      %v2246 = vsel %vm2182, %v2121, %v2214
      %v2247 = vsel %vm2183, %v2123, %v2215
      %v2248 = vsel %vm2184, %v2126, %v2216
      %v2249 = vsel %vm2185, %v2128, %v2217
      %v2250 = vsel %vm2186, %v2131, %v2218
      %v2251 = vsel %vm2187, %v2133, %v2219
      %v2252 = vsel %vm2188, %v2136, %v2220
      %v2253 = vsel %vm2189, %v2138, %v2221
      %v2254 = vsel %vm2190, %v2141, %v2222
      %v2255 = vsel %vm2191, %v2143, %v2223
      %v2256 = vsel %vm2192, %v2146, %v2224
      %v2257 = vsel %vm2193, %v2148, %v2225
      %v2258 = vsel %vm2194, %v2151, %v2226
      %v2259 = vsel %vm2195, %v2153, %v2227
      %v2260 = vsel %vm2196, %v2156, %v2228
      %v2261 = vsel %vm2197, %v2158, %v2229
      %v2262 = vsel %vm2198, %v2161, %v2230
      %v2263 = vsel %vm2199, %v2163, %v2231
      %v2264 = vsel %vm2200, %v2166, %v2232
      %v2265 = vsel %vm2201, %v2168, %v2233
      %vm2266 = vcmask 261120
      %2267 = vst.msk [vmem:[#allocation4] sm:$0xff] %vm2266, 0.0
      %2268 = vst.msk [vmem:[#allocation4 + $0x8] sm:$0xff] %vm2266, 0.0
      %vm2269 = vcmask 254976
      %2270 = vst.msk [vmem:[#allocation4 + $0x10] sm:$0x3] %vm2269, 0.0
      %2271 = vst.msk [vmem:[#allocation4 + $0x18] sm:$0xff] %vm2266, 0.0
      %2272 = vst.msk [vmem:[#allocation4 + $0x20] sm:$0xff] %vm2266, 0.0
      %2273 = vst.msk [vmem:[#allocation4 + $0x28] sm:$0x3] %vm2269, 0.0
      %2274 = vst.msk [vmem:[#allocation4 + $0x30] sm:$0xff] %vm2266, 0.0
      %2275 = vst.msk [vmem:[#allocation4 + $0x38] sm:$0xff] %vm2266, 0.0
      %2276 = vst.msk [vmem:[#allocation4 + $0x40] sm:$0x3] %vm2269, 0.0
      %2277 = vst.msk [vmem:[#allocation4 + $0x48] sm:$0xff] %vm2266, 0.0
      %2278 = vst.msk [vmem:[#allocation4 + $0x50] sm:$0xff] %vm2266, 0.0
      %2279 = vst.msk [vmem:[#allocation4 + $0x58] sm:$0x3] %vm2269, 0.0
      %2280 = vst.msk [vmem:[#allocation4 + $0x60] sm:$0xff] %vm2266, 0.0
      %2281 = vst.msk [vmem:[#allocation4 + $0x68] sm:$0xff] %vm2266, 0.0
      %2282 = vst.msk [vmem:[#allocation4 + $0x70] sm:$0x3] %vm2269, 0.0
      %2283 = vst.msk [vmem:[#allocation4 + $0x78] sm:$0xff] %vm2266, 0.0
      %2284 = vst.msk [vmem:[#allocation4 + $0x80] sm:$0xff] %vm2266, 0.0
      %2285 = vst.msk [vmem:[#allocation4 + $0x88] sm:$0x3] %vm2269, 0.0
      %2286 = vst.msk [vmem:[#allocation4 + $0x90] sm:$0xff] %vm2266, 0.0
      %2287 = vst.msk [vmem:[#allocation4 + $0x98] sm:$0xff] %vm2266, 0.0
      %2288 = vst.msk [vmem:[#allocation4 + $0xa0] sm:$0x3] %vm2269, 0.0
      %2289 = vst.msk [vmem:[#allocation4 + $0xa8] sm:$0xff] %vm2266, 0.0
      %2290 = vst.msk [vmem:[#allocation4 + $0xb0] sm:$0xff] %vm2266, 0.0
      %2291 = vst.msk [vmem:[#allocation4 + $0xb8] sm:$0x3] %vm2269, 0.0
      %2292 = vst.msk [vmem:[#allocation4 + $0xc0] sm:$0xff] %vm2266, 0.0
      %2293 = vst.msk [vmem:[#allocation4 + $0xc8] sm:$0xff] %vm2266, 0.0
      %2294 = vst.msk [vmem:[#allocation4 + $0xd0] sm:$0x3] %vm2269, 0.0
      %2295 = vst.msk [vmem:[#allocation4 + $0xd8] sm:$0xff] %vm2266, 0.0
      %2296 = vst.msk [vmem:[#allocation4 + $0xe0] sm:$0xff] %vm2266, 0.0
      %2297 = vst.msk [vmem:[#allocation4 + $0xe8] sm:$0x3] %vm2269, 0.0
      %2298 = vst.msk [vmem:[#allocation4 + $0xf0] sm:$0xff] %vm2266, 0.0
      %2299 = vst.msk [vmem:[#allocation4 + $0xf8] sm:$0xff] %vm2266, 0.0
      %2300 = vst.msk [vmem:[#allocation4 + $0x100] sm:$0x3] %vm2269, 0.0
      %2301 = vst.msk [vmem:[#allocation4 + $0x108] sm:$0xff] %vm2266, 0.0
      %2302 = vst.msk [vmem:[#allocation4 + $0x110] sm:$0xff] %vm2266, 0.0
      %2303 = vst.msk [vmem:[#allocation4 + $0x118] sm:$0x3] %vm2269, 0.0
      %2304 = vst.msk [vmem:[#allocation4 + $0x120] sm:$0xff] %vm2266, 0.0
      %2305 = vst.msk [vmem:[#allocation4 + $0x128] sm:$0xff] %vm2266, 0.0
      %2306 = vst.msk [vmem:[#allocation4 + $0x130] sm:$0x3] %vm2269, 0.0
      %2307 = vst.msk [vmem:[#allocation4 + $0x138] sm:$0xff] %vm2266, 0.0
      %2308 = vst.msk [vmem:[#allocation4 + $0x140] sm:$0xff] %vm2266, 0.0
      %2309 = vst.msk [vmem:[#allocation4 + $0x148] sm:$0x3] %vm2269, 0.0
      %2310 = vst.msk [vmem:[#allocation4 + $0x150] sm:$0xff] %vm2266, 0.0
      %2311 = vst.msk [vmem:[#allocation4 + $0x158] sm:$0xff] %vm2266, 0.0
      %2312 = vst.msk [vmem:[#allocation4 + $0x160] sm:$0x3] %vm2269, 0.0
      %2313 = vst.msk [vmem:[#allocation4 + $0x168] sm:$0xff] %vm2266, 0.0
      %2314 = vst.msk [vmem:[#allocation4 + $0x170] sm:$0xff] %vm2266, 0.0
      %2315 = vst.msk [vmem:[#allocation4 + $0x178] sm:$0x3] %vm2269, 0.0
      %2316 = vst.msk [vmem:[#allocation4 + $0x180] sm:$0xff] %vm2266, 0.0
      %2317 = vst.msk [vmem:[#allocation4 + $0x188] sm:$0xff] %vm2266, 0.0
      %2318 = vst.msk [vmem:[#allocation4 + $0x190] sm:$0x3] %vm2269, 0.0
      %2319 = vst.msk [vmem:[#allocation4 + $0x198] sm:$0xff] %vm2266, 0.0
      %2320 = vst.msk [vmem:[#allocation4 + $0x1a0] sm:$0xff] %vm2266, 0.0
      %2321 = vst.msk [vmem:[#allocation4 + $0x1a8] sm:$0x3] %vm2269, 0.0
      %s2322 = scalar_lea.vmem [#allocation4], 24
      %2323 = vst.msk [vmem:[%s2322 + $0x1] sm:$0xff] %vm2266, %v2234
      %2324 = vst.msk [vmem:[%s2322 + $0x9] sm:$0xff] %vm2266, %v2235
      %2325 = vst.msk [vmem:[%s2322 + $0x19] sm:$0xff] %vm2266, %v2236
      %2326 = vst.msk [vmem:[%s2322 + $0x21] sm:$0xff] %vm2266, %v2237
      %2327 = vst.msk [vmem:[%s2322 + $0x31] sm:$0xff] %vm2266, %v2238
      %2328 = vst.msk [vmem:[%s2322 + $0x39] sm:$0xff] %vm2266, %v2239
      %2329 = vst.msk [vmem:[%s2322 + $0x49] sm:$0xff] %vm2266, %v2240
      %2330 = vst.msk [vmem:[%s2322 + $0x51] sm:$0xff] %vm2266, %v2241
      %2331 = vst.msk [vmem:[%s2322 + $0x61] sm:$0xff] %vm2266, %v2242
      %2332 = vst.msk [vmem:[%s2322 + $0x69] sm:$0xff] %vm2266, %v2243
      %2333 = vst.msk [vmem:[%s2322 + $0x79] sm:$0xff] %vm2266, %v2244
      %2334 = vst.msk [vmem:[%s2322 + $0x81] sm:$0xff] %vm2266, %v2245
      %2335 = vst.msk [vmem:[%s2322 + $0x91] sm:$0xff] %vm2266, %v2246
      %2336 = vst.msk [vmem:[%s2322 + $0x99] sm:$0xff] %vm2266, %v2247
      %2337 = vst.msk [vmem:[%s2322 + $0xa9] sm:$0xff] %vm2266, %v2248
      %2338 = vst.msk [vmem:[%s2322 + $0xb1] sm:$0xff] %vm2266, %v2249
      %2339 = vst.msk [vmem:[%s2322 + $0xc1] sm:$0xff] %vm2266, %v2250
      %2340 = vst.msk [vmem:[%s2322 + $0xc9] sm:$0xff] %vm2266, %v2251
      %2341 = vst.msk [vmem:[%s2322 + $0xd9] sm:$0xff] %vm2266, %v2252
      %2342 = vst.msk [vmem:[%s2322 + $0xe1] sm:$0xff] %vm2266, %v2253
      %2343 = vst.msk [vmem:[%s2322 + $0xf1] sm:$0xff] %vm2266, %v2254
      %2344 = vst.msk [vmem:[%s2322 + $0xf9] sm:$0xff] %vm2266, %v2255
      %2345 = vst.msk [vmem:[%s2322 + $0x109] sm:$0xff] %vm2266, %v2256
      %2346 = vst.msk [vmem:[%s2322 + $0x111] sm:$0xff] %vm2266, %v2257
      %2347 = vst.msk [vmem:[%s2322 + $0x121] sm:$0xff] %vm2266, %v2258
      %2348 = vst.msk [vmem:[%s2322 + $0x129] sm:$0xff] %vm2266, %v2259
      %2349 = vst.msk [vmem:[%s2322 + $0x139] sm:$0xff] %vm2266, %v2260
      %2350 = vst.msk [vmem:[%s2322 + $0x141] sm:$0xff] %vm2266, %v2261
      %2351 = vst.msk [vmem:[%s2322 + $0x151] sm:$0xff] %vm2266, %v2262
      %2352 = vst.msk [vmem:[%s2322 + $0x159] sm:$0xff] %vm2266, %v2263
      %2353 = vst.msk [vmem:[%s2322 + $0x169] sm:$0xff] %vm2266, %v2264
      %2354 = vst.msk [vmem:[%s2322 + $0x171] sm:$0xff] %vm2266, %v2265
      %v2355 = vld [vmem:[#allocation4] sm:$0xff]
      %v2356 = vld [vmem:[#allocation4 + $0x8] sm:$0xff]
      %v2357 = vld [vmem:[#allocation4 + $0x18] sm:$0xff]
      %v2358 = vld [vmem:[#allocation4 + $0x20] sm:$0xff]
      %v2359 = vld [vmem:[#allocation4 + $0x30] sm:$0xff]
      %v2360 = vld [vmem:[#allocation4 + $0x38] sm:$0xff]
      %v2361 = vld [vmem:[#allocation4 + $0x48] sm:$0xff]
      %v2362 = vld [vmem:[#allocation4 + $0x50] sm:$0xff]
      %v2363 = vld [vmem:[#allocation4 + $0x60] sm:$0xff]
      %v2364 = vld [vmem:[#allocation4 + $0x68] sm:$0xff]
      %v2365 = vld [vmem:[#allocation4 + $0x78] sm:$0xff]
      %v2366 = vld [vmem:[#allocation4 + $0x80] sm:$0xff]
      %v2367 = vld [vmem:[#allocation4 + $0x90] sm:$0xff]
      %v2368 = vld [vmem:[#allocation4 + $0x98] sm:$0xff]
      %v2369 = vld [vmem:[#allocation4 + $0xa8] sm:$0xff]
      %v2370 = vld [vmem:[#allocation4 + $0xb0] sm:$0xff]
      %v2371 = vld [vmem:[#allocation4 + $0xc0] sm:$0xff]
      %v2372 = vld [vmem:[#allocation4 + $0xc8] sm:$0xff]
      %v2373 = vld [vmem:[#allocation4 + $0xd8] sm:$0xff]
      %v2374 = vld [vmem:[#allocation4 + $0xe0] sm:$0xff]
      %v2375 = vld [vmem:[#allocation4 + $0xf0] sm:$0xff]
      %v2376 = vld [vmem:[#allocation4 + $0xf8] sm:$0xff]
      %v2377 = vld [vmem:[#allocation4 + $0x108] sm:$0xff]
      %v2378 = vld [vmem:[#allocation4 + $0x110] sm:$0xff]
      %v2379 = vld [vmem:[#allocation4 + $0x120] sm:$0xff]
      %v2380 = vld [vmem:[#allocation4 + $0x128] sm:$0xff]
      %v2381 = vld [vmem:[#allocation4 + $0x138] sm:$0xff]
      %v2382 = vld [vmem:[#allocation4 + $0x140] sm:$0xff]
      %v2383 = vld [vmem:[#allocation4 + $0x150] sm:$0xff]
      %v2384 = vld [vmem:[#allocation4 + $0x158] sm:$0xff]
      %v2385 = vld [vmem:[#allocation4 + $0x168] sm:$0xff]
      %v2386 = vld [vmem:[#allocation4 + $0x170] sm:$0xff]
      %2387 = vst.msk [vmem:[#allocation5] sm:$0xff] %vm2266, %v2355
      %2388 = vst.msk [vmem:[#allocation5 + $0x18] sm:$0xff] %vm2266, %v2356
      %2389 = vst.msk [vmem:[#allocation5 + $0x30] sm:$0xff] %vm2266, %v2357
      %2390 = vst.msk [vmem:[#allocation5 + $0x48] sm:$0xff] %vm2266, %v2358
      %2391 = vst.msk [vmem:[#allocation5 + $0x60] sm:$0xff] %vm2266, %v2359
      %2392 = vst.msk [vmem:[#allocation5 + $0x78] sm:$0xff] %vm2266, %v2360
      %2393 = vst.msk [vmem:[#allocation5 + $0x90] sm:$0xff] %vm2266, %v2361
      %2394 = vst.msk [vmem:[#allocation5 + $0xa8] sm:$0xff] %vm2266, %v2362
      %2395 = vst.msk [vmem:[#allocation5 + $0xc0] sm:$0xff] %vm2266, %v2363
      %2396 = vst.msk [vmem:[#allocation5 + $0xd8] sm:$0xff] %vm2266, %v2364
      %2397 = vst.msk [vmem:[#allocation5 + $0xf0] sm:$0xff] %vm2266, %v2365
      %2398 = vst.msk [vmem:[#allocation5 + $0x108] sm:$0xff] %vm2266, %v2366
      %2399 = vst.msk [vmem:[#allocation5 + $0x120] sm:$0xff] %vm2266, %v2367
      %2400 = vst.msk [vmem:[#allocation5 + $0x138] sm:$0xff] %vm2266, %v2368
      %2401 = vst.msk [vmem:[#allocation5 + $0x150] sm:$0xff] %vm2266, %v2369
      %2402 = vst.msk [vmem:[#allocation5 + $0x168] sm:$0xff] %vm2266, %v2370
      %2403 = vst.msk [vmem:[#allocation5 + $0x180] sm:$0xff] %vm2266, %v2371
      %2404 = vst.msk [vmem:[#allocation5 + $0x198] sm:$0xff] %vm2266, %v2372
      %2405 = vst.msk [vmem:[#allocation5 + $0x1b0] sm:$0xff] %vm2266, %v2373
      %2406 = vst.msk [vmem:[#allocation5 + $0x1c8] sm:$0xff] %vm2266, %v2374
      %2407 = vst.msk [vmem:[#allocation5 + $0x1e0] sm:$0xff] %vm2266, %v2375
      %2408 = vst.msk [vmem:[#allocation5 + $0x1f8] sm:$0xff] %vm2266, %v2376
      %2409 = vst.msk [vmem:[#allocation5 + $0x210] sm:$0xff] %vm2266, %v2377
      %2410 = vst.msk [vmem:[#allocation5 + $0x228] sm:$0xff] %vm2266, %v2378
      %2411 = vst.msk [vmem:[#allocation5 + $0x240] sm:$0xff] %vm2266, %v2379
      %2412 = vst.msk [vmem:[#allocation5 + $0x258] sm:$0xff] %vm2266, %v2380
      %2413 = vst.msk [vmem:[#allocation5 + $0x270] sm:$0xff] %vm2266, %v2381
      %2414 = vst.msk [vmem:[#allocation5 + $0x288] sm:$0xff] %vm2266, %v2382
      %2415 = vst.msk [vmem:[#allocation5 + $0x2a0] sm:$0xff] %vm2266, %v2383
      %2416 = vst.msk [vmem:[#allocation5 + $0x2b8] sm:$0xff] %vm2266, %v2384
      %2417 = vst.msk [vmem:[#allocation5 + $0x2d0] sm:$0xff] %vm2266, %v2385
      %2418 = vst.msk [vmem:[#allocation5 + $0x2e8] sm:$0xff] %vm2266, %v2386
      %v2419 = vld [vmem:[#allocation4 + $0x1] sm:$0xff]
      %v2420 = vld [vmem:[#allocation4 + $0x9] sm:$0xff]
      %v2421 = vld [vmem:[#allocation4 + $0x19] sm:$0xff]
      %v2422 = vld [vmem:[#allocation4 + $0x21] sm:$0xff]
      %v2423 = vld [vmem:[#allocation4 + $0x31] sm:$0xff]
      %v2424 = vld [vmem:[#allocation4 + $0x39] sm:$0xff]
      %v2425 = vld [vmem:[#allocation4 + $0x49] sm:$0xff]
      %v2426 = vld [vmem:[#allocation4 + $0x51] sm:$0xff]
      %v2427 = vld [vmem:[#allocation4 + $0x61] sm:$0xff]
      %v2428 = vld [vmem:[#allocation4 + $0x69] sm:$0xff]
      %v2429 = vld [vmem:[#allocation4 + $0x79] sm:$0xff]
      %v2430 = vld [vmem:[#allocation4 + $0x81] sm:$0xff]
      %v2431 = vld [vmem:[#allocation4 + $0x91] sm:$0xff]
      %v2432 = vld [vmem:[#allocation4 + $0x99] sm:$0xff]
      %v2433 = vld [vmem:[#allocation4 + $0xa9] sm:$0xff]
      %v2434 = vld [vmem:[#allocation4 + $0xb1] sm:$0xff]
      %v2435 = vld [vmem:[#allocation4 + $0xc1] sm:$0xff]
      %v2436 = vld [vmem:[#allocation4 + $0xc9] sm:$0xff]
      %v2437 = vld [vmem:[#allocation4 + $0xd9] sm:$0xff]
      %v2438 = vld [vmem:[#allocation4 + $0xe1] sm:$0xff]
      %v2439 = vld [vmem:[#allocation4 + $0xf1] sm:$0xff]
      %v2440 = vld [vmem:[#allocation4 + $0xf9] sm:$0xff]
      %v2441 = vld [vmem:[#allocation4 + $0x109] sm:$0xff]
      %v2442 = vld [vmem:[#allocation4 + $0x111] sm:$0xff]
      %v2443 = vld [vmem:[#allocation4 + $0x121] sm:$0xff]
      %v2444 = vld [vmem:[#allocation4 + $0x129] sm:$0xff]
      %v2445 = vld [vmem:[#allocation4 + $0x139] sm:$0xff]
      %v2446 = vld [vmem:[#allocation4 + $0x141] sm:$0xff]
      %v2447 = vld [vmem:[#allocation4 + $0x151] sm:$0xff]
      %v2448 = vld [vmem:[#allocation4 + $0x159] sm:$0xff]
      %v2449 = vld [vmem:[#allocation4 + $0x169] sm:$0xff]
      %v2450 = vld [vmem:[#allocation4 + $0x171] sm:$0xff]
      %2483 = vrot.lane.b32.xlu0 %v2419, 32
      %v2484 = vpop.permute.xlu0 %2483
      %2485 = vrot.lane.b32.xlu0 %v2420, 32
      %v2486 = vpop.permute.xlu0 %2485
      %2487 = vrot.lane.b32.xlu0 %v2421, 32
      %v2488 = vpop.permute.xlu0 %2487
      %2489 = vrot.lane.b32.xlu0 %v2422, 32
      %v2490 = vpop.permute.xlu0 %2489
      %2491 = vrot.lane.b32.xlu0 %v2423, 32
      %v2492 = vpop.permute.xlu0 %2491
      %2493 = vrot.lane.b32.xlu0 %v2424, 32
      %v2494 = vpop.permute.xlu0 %2493
      %2495 = vrot.lane.b32.xlu0 %v2425, 32
      %v2496 = vpop.permute.xlu0 %2495
      %2497 = vrot.lane.b32.xlu0 %v2426, 32
      %v2498 = vpop.permute.xlu0 %2497
      %2499 = vrot.lane.b32.xlu0 %v2427, 32
      %v2500 = vpop.permute.xlu0 %2499
      %2501 = vrot.lane.b32.xlu0 %v2428, 32
      %v2502 = vpop.permute.xlu0 %2501
      %2503 = vrot.lane.b32.xlu0 %v2429, 32
      %v2504 = vpop.permute.xlu0 %2503
      %2505 = vrot.lane.b32.xlu0 %v2430, 32
      %v2506 = vpop.permute.xlu0 %2505
      %2507 = vrot.lane.b32.xlu0 %v2431, 32
      %v2508 = vpop.permute.xlu0 %2507
      %2509 = vrot.lane.b32.xlu0 %v2432, 32
      %v2510 = vpop.permute.xlu0 %2509
      %2511 = vrot.lane.b32.xlu0 %v2433, 32
      %v2512 = vpop.permute.xlu0 %2511
      %2513 = vrot.lane.b32.xlu0 %v2434, 32
      %v2514 = vpop.permute.xlu0 %2513
      %2515 = vrot.lane.b32.xlu0 %v2435, 32
      %v2516 = vpop.permute.xlu0 %2515
      %2517 = vrot.lane.b32.xlu0 %v2436, 32
      %v2518 = vpop.permute.xlu0 %2517
      %2519 = vrot.lane.b32.xlu0 %v2437, 32
      %v2520 = vpop.permute.xlu0 %2519
      %2521 = vrot.lane.b32.xlu0 %v2438, 32
      %v2522 = vpop.permute.xlu0 %2521
      %2523 = vrot.lane.b32.xlu0 %v2439, 32
      %v2524 = vpop.permute.xlu0 %2523
      %2525 = vrot.lane.b32.xlu0 %v2440, 32
      %v2526 = vpop.permute.xlu0 %2525
      %2527 = vrot.lane.b32.xlu0 %v2441, 32
      %v2528 = vpop.permute.xlu0 %2527
      %2529 = vrot.lane.b32.xlu0 %v2442, 32
      %v2530 = vpop.permute.xlu0 %2529
      %2531 = vrot.lane.b32.xlu0 %v2443, 32
      %v2532 = vpop.permute.xlu0 %2531
      %2533 = vrot.lane.b32.xlu0 %v2444, 32
      %v2534 = vpop.permute.xlu0 %2533
      %2535 = vrot.lane.b32.xlu0 %v2445, 32
      %v2536 = vpop.permute.xlu0 %2535
      %2537 = vrot.lane.b32.xlu0 %v2446, 32
      %v2538 = vpop.permute.xlu0 %2537
      %2539 = vrot.lane.b32.xlu0 %v2447, 32
      %v2540 = vpop.permute.xlu0 %2539
      %2541 = vrot.lane.b32.xlu0 %v2448, 32
      %v2542 = vpop.permute.xlu0 %2541
      %2543 = vrot.lane.b32.xlu0 %v2449, 32
      %v2544 = vpop.permute.xlu0 %2543
      %2545 = vrot.lane.b32.xlu0 %v2450, 32
      %v2546 = vpop.permute.xlu0 %2545
      %vm2579 = vcmask 523520
      %2580 = vst.msk [vmem:[#allocation5] sm:$0xff] %vm2579, %v2484
      %2581 = vst.msk [vmem:[#allocation5 + $0x18] sm:$0xff] %vm2579, %v2486
      %2582 = vst.msk [vmem:[#allocation5 + $0x30] sm:$0xff] %vm2579, %v2488
      %2583 = vst.msk [vmem:[#allocation5 + $0x48] sm:$0xff] %vm2579, %v2490
      %2584 = vst.msk [vmem:[#allocation5 + $0x60] sm:$0xff] %vm2579, %v2492
      %2585 = vst.msk [vmem:[#allocation5 + $0x78] sm:$0xff] %vm2579, %v2494
      %2586 = vst.msk [vmem:[#allocation5 + $0x90] sm:$0xff] %vm2579, %v2496
      %2587 = vst.msk [vmem:[#allocation5 + $0xa8] sm:$0xff] %vm2579, %v2498
      %2588 = vst.msk [vmem:[#allocation5 + $0xc0] sm:$0xff] %vm2579, %v2500
      %2589 = vst.msk [vmem:[#allocation5 + $0xd8] sm:$0xff] %vm2579, %v2502
      %2590 = vst.msk [vmem:[#allocation5 + $0xf0] sm:$0xff] %vm2579, %v2504
      %2591 = vst.msk [vmem:[#allocation5 + $0x108] sm:$0xff] %vm2579, %v2506
      %2592 = vst.msk [vmem:[#allocation5 + $0x120] sm:$0xff] %vm2579, %v2508
      %2593 = vst.msk [vmem:[#allocation5 + $0x138] sm:$0xff] %vm2579, %v2510
      %2594 = vst.msk [vmem:[#allocation5 + $0x150] sm:$0xff] %vm2579, %v2512
      %2595 = vst.msk [vmem:[#allocation5 + $0x168] sm:$0xff] %vm2579, %v2514
      %2596 = vst.msk [vmem:[#allocation5 + $0x180] sm:$0xff] %vm2579, %v2516
      %2597 = vst.msk [vmem:[#allocation5 + $0x198] sm:$0xff] %vm2579, %v2518
      %2598 = vst.msk [vmem:[#allocation5 + $0x1b0] sm:$0xff] %vm2579, %v2520
      %2599 = vst.msk [vmem:[#allocation5 + $0x1c8] sm:$0xff] %vm2579, %v2522
      %2600 = vst.msk [vmem:[#allocation5 + $0x1e0] sm:$0xff] %vm2579, %v2524
      %2601 = vst.msk [vmem:[#allocation5 + $0x1f8] sm:$0xff] %vm2579, %v2526
      %2602 = vst.msk [vmem:[#allocation5 + $0x210] sm:$0xff] %vm2579, %v2528
      %2603 = vst.msk [vmem:[#allocation5 + $0x228] sm:$0xff] %vm2579, %v2530
      %2604 = vst.msk [vmem:[#allocation5 + $0x240] sm:$0xff] %vm2579, %v2532
      %2605 = vst.msk [vmem:[#allocation5 + $0x258] sm:$0xff] %vm2579, %v2534
      %2606 = vst.msk [vmem:[#allocation5 + $0x270] sm:$0xff] %vm2579, %v2536
      %2607 = vst.msk [vmem:[#allocation5 + $0x288] sm:$0xff] %vm2579, %v2538
      %2608 = vst.msk [vmem:[#allocation5 + $0x2a0] sm:$0xff] %vm2579, %v2540
      %2609 = vst.msk [vmem:[#allocation5 + $0x2b8] sm:$0xff] %vm2579, %v2542
      %2610 = vst.msk [vmem:[#allocation5 + $0x2d0] sm:$0xff] %vm2579, %v2544
      %2611 = vst.msk [vmem:[#allocation5 + $0x2e8] sm:$0xff] %vm2579, %v2546
      %v2612 = vld [vmem:[#allocation4 + $0x2] sm:$0xff]
      %v2613 = vld [vmem:[#allocation4 + $0xa] sm:$0xff]
      %v2614 = vld [vmem:[#allocation4 + $0x1a] sm:$0xff]
      %v2615 = vld [vmem:[#allocation4 + $0x22] sm:$0xff]
      %v2616 = vld [vmem:[#allocation4 + $0x32] sm:$0xff]
      %v2617 = vld [vmem:[#allocation4 + $0x3a] sm:$0xff]
      %v2618 = vld [vmem:[#allocation4 + $0x4a] sm:$0xff]
      %v2619 = vld [vmem:[#allocation4 + $0x52] sm:$0xff]
      %v2620 = vld [vmem:[#allocation4 + $0x62] sm:$0xff]
      %v2621 = vld [vmem:[#allocation4 + $0x6a] sm:$0xff]
      %v2622 = vld [vmem:[#allocation4 + $0x7a] sm:$0xff]
      %v2623 = vld [vmem:[#allocation4 + $0x82] sm:$0xff]
      %v2624 = vld [vmem:[#allocation4 + $0x92] sm:$0xff]
      %v2625 = vld [vmem:[#allocation4 + $0x9a] sm:$0xff]
      %v2626 = vld [vmem:[#allocation4 + $0xaa] sm:$0xff]
      %v2627 = vld [vmem:[#allocation4 + $0xb2] sm:$0xff]
      %v2628 = vld [vmem:[#allocation4 + $0xc2] sm:$0xff]
      %v2629 = vld [vmem:[#allocation4 + $0xca] sm:$0xff]
      %v2630 = vld [vmem:[#allocation4 + $0xda] sm:$0xff]
      %v2631 = vld [vmem:[#allocation4 + $0xe2] sm:$0xff]
      %v2632 = vld [vmem:[#allocation4 + $0xf2] sm:$0xff]
      %v2633 = vld [vmem:[#allocation4 + $0xfa] sm:$0xff]
      %v2634 = vld [vmem:[#allocation4 + $0x10a] sm:$0xff]
      %v2635 = vld [vmem:[#allocation4 + $0x112] sm:$0xff]
      %v2636 = vld [vmem:[#allocation4 + $0x122] sm:$0xff]
      %v2637 = vld [vmem:[#allocation4 + $0x12a] sm:$0xff]
      %v2638 = vld [vmem:[#allocation4 + $0x13a] sm:$0xff]
      %v2639 = vld [vmem:[#allocation4 + $0x142] sm:$0xff]
      %v2640 = vld [vmem:[#allocation4 + $0x152] sm:$0xff]
      %v2641 = vld [vmem:[#allocation4 + $0x15a] sm:$0xff]
      %v2642 = vld [vmem:[#allocation4 + $0x16a] sm:$0xff]
      %v2643 = vld [vmem:[#allocation4 + $0x172] sm:$0xff]
      %2676 = vrot.lane.b32.xlu0 %v2612, 64
      %v2677 = vpop.permute.xlu0 %2676
      %2678 = vrot.lane.b32.xlu0 %v2613, 64
      %v2679 = vpop.permute.xlu0 %2678
      %2680 = vrot.lane.b32.xlu0 %v2614, 64
      %v2681 = vpop.permute.xlu0 %2680
      %2682 = vrot.lane.b32.xlu0 %v2615, 64
      %v2683 = vpop.permute.xlu0 %2682
      %2684 = vrot.lane.b32.xlu0 %v2616, 64
      %v2685 = vpop.permute.xlu0 %2684
      %2686 = vrot.lane.b32.xlu0 %v2617, 64
      %v2687 = vpop.permute.xlu0 %2686
      %2688 = vrot.lane.b32.xlu0 %v2618, 64
      %v2689 = vpop.permute.xlu0 %2688
      %2690 = vrot.lane.b32.xlu0 %v2619, 64
      %v2691 = vpop.permute.xlu0 %2690
      %2692 = vrot.lane.b32.xlu0 %v2620, 64
      %v2693 = vpop.permute.xlu0 %2692
      %2694 = vrot.lane.b32.xlu0 %v2621, 64
      %v2695 = vpop.permute.xlu0 %2694
      %2696 = vrot.lane.b32.xlu0 %v2622, 64
      %v2697 = vpop.permute.xlu0 %2696
      %2698 = vrot.lane.b32.xlu0 %v2623, 64
      %v2699 = vpop.permute.xlu0 %2698
      %2700 = vrot.lane.b32.xlu0 %v2624, 64
      %v2701 = vpop.permute.xlu0 %2700
      %2702 = vrot.lane.b32.xlu0 %v2625, 64
      %v2703 = vpop.permute.xlu0 %2702
      %2704 = vrot.lane.b32.xlu0 %v2626, 64
      %v2705 = vpop.permute.xlu0 %2704
      %2706 = vrot.lane.b32.xlu0 %v2627, 64
      %v2707 = vpop.permute.xlu0 %2706
      %2708 = vrot.lane.b32.xlu0 %v2628, 64
      %v2709 = vpop.permute.xlu0 %2708
      %2710 = vrot.lane.b32.xlu0 %v2629, 64
      %v2711 = vpop.permute.xlu0 %2710
      %2712 = vrot.lane.b32.xlu0 %v2630, 64
      %v2713 = vpop.permute.xlu0 %2712
      %2714 = vrot.lane.b32.xlu0 %v2631, 64
      %v2715 = vpop.permute.xlu0 %2714
      %2716 = vrot.lane.b32.xlu0 %v2632, 64
      %v2717 = vpop.permute.xlu0 %2716
      %2718 = vrot.lane.b32.xlu0 %v2633, 64
      %v2719 = vpop.permute.xlu0 %2718
      %2720 = vrot.lane.b32.xlu0 %v2634, 64
      %v2721 = vpop.permute.xlu0 %2720
      %2722 = vrot.lane.b32.xlu0 %v2635, 64
      %v2723 = vpop.permute.xlu0 %2722
      %2724 = vrot.lane.b32.xlu0 %v2636, 64
      %v2725 = vpop.permute.xlu0 %2724
      %2726 = vrot.lane.b32.xlu0 %v2637, 64
      %v2727 = vpop.permute.xlu0 %2726
      %2728 = vrot.lane.b32.xlu0 %v2638, 64
      %v2729 = vpop.permute.xlu0 %2728
      %2730 = vrot.lane.b32.xlu0 %v2639, 64
      %v2731 = vpop.permute.xlu0 %2730
      %2732 = vrot.lane.b32.xlu0 %v2640, 64
      %v2733 = vpop.permute.xlu0 %2732
      %2734 = vrot.lane.b32.xlu0 %v2641, 64
      %v2735 = vpop.permute.xlu0 %2734
      %2736 = vrot.lane.b32.xlu0 %v2642, 64
      %v2737 = vpop.permute.xlu0 %2736
      %2738 = vrot.lane.b32.xlu0 %v2643, 64
      %v2739 = vpop.permute.xlu0 %2738
      %vm2772 = vcmask 785920
      %2773 = vst.msk [vmem:[#allocation5] sm:$0xff] %vm2772, %v2677
      %2774 = vst.msk [vmem:[#allocation5 + $0x18] sm:$0xff] %vm2772, %v2679
      %2775 = vst.msk [vmem:[#allocation5 + $0x30] sm:$0xff] %vm2772, %v2681
      %2776 = vst.msk [vmem:[#allocation5 + $0x48] sm:$0xff] %vm2772, %v2683
      %2777 = vst.msk [vmem:[#allocation5 + $0x60] sm:$0xff] %vm2772, %v2685
      %2778 = vst.msk [vmem:[#allocation5 + $0x78] sm:$0xff] %vm2772, %v2687
      %2779 = vst.msk [vmem:[#allocation5 + $0x90] sm:$0xff] %vm2772, %v2689
      %2780 = vst.msk [vmem:[#allocation5 + $0xa8] sm:$0xff] %vm2772, %v2691
      %2781 = vst.msk [vmem:[#allocation5 + $0xc0] sm:$0xff] %vm2772, %v2693
      %2782 = vst.msk [vmem:[#allocation5 + $0xd8] sm:$0xff] %vm2772, %v2695
      %2783 = vst.msk [vmem:[#allocation5 + $0xf0] sm:$0xff] %vm2772, %v2697
      %2784 = vst.msk [vmem:[#allocation5 + $0x108] sm:$0xff] %vm2772, %v2699
      %2785 = vst.msk [vmem:[#allocation5 + $0x120] sm:$0xff] %vm2772, %v2701
      %2786 = vst.msk [vmem:[#allocation5 + $0x138] sm:$0xff] %vm2772, %v2703
      %2787 = vst.msk [vmem:[#allocation5 + $0x150] sm:$0xff] %vm2772, %v2705
      %2788 = vst.msk [vmem:[#allocation5 + $0x168] sm:$0xff] %vm2772, %v2707
      %2789 = vst.msk [vmem:[#allocation5 + $0x180] sm:$0xff] %vm2772, %v2709
      %2790 = vst.msk [vmem:[#allocation5 + $0x198] sm:$0xff] %vm2772, %v2711
      %2791 = vst.msk [vmem:[#allocation5 + $0x1b0] sm:$0xff] %vm2772, %v2713
      %2792 = vst.msk [vmem:[#allocation5 + $0x1c8] sm:$0xff] %vm2772, %v2715
      %2793 = vst.msk [vmem:[#allocation5 + $0x1e0] sm:$0xff] %vm2772, %v2717
      %2794 = vst.msk [vmem:[#allocation5 + $0x1f8] sm:$0xff] %vm2772, %v2719
      %2795 = vst.msk [vmem:[#allocation5 + $0x210] sm:$0xff] %vm2772, %v2721
      %2796 = vst.msk [vmem:[#allocation5 + $0x228] sm:$0xff] %vm2772, %v2723
      %2797 = vst.msk [vmem:[#allocation5 + $0x240] sm:$0xff] %vm2772, %v2725
      %2798 = vst.msk [vmem:[#allocation5 + $0x258] sm:$0xff] %vm2772, %v2727
      %2799 = vst.msk [vmem:[#allocation5 + $0x270] sm:$0xff] %vm2772, %v2729
      %2800 = vst.msk [vmem:[#allocation5 + $0x288] sm:$0xff] %vm2772, %v2731
      %2801 = vst.msk [vmem:[#allocation5 + $0x2a0] sm:$0xff] %vm2772, %v2733
      %2802 = vst.msk [vmem:[#allocation5 + $0x2b8] sm:$0xff] %vm2772, %v2735
      %2803 = vst.msk [vmem:[#allocation5 + $0x2d0] sm:$0xff] %vm2772, %v2737
      %2804 = vst.msk [vmem:[#allocation5 + $0x2e8] sm:$0xff] %vm2772, %v2739
      %v2805 = vld [vmem:[%s2322] sm:$0xff]
      %v2806 = vld [vmem:[%s2322 + $0x8] sm:$0xff]
      %v2807 = vld [vmem:[%s2322 + $0x18] sm:$0xff]
      %v2808 = vld [vmem:[%s2322 + $0x20] sm:$0xff]
      %v2809 = vld [vmem:[%s2322 + $0x30] sm:$0xff]
      %v2810 = vld [vmem:[%s2322 + $0x38] sm:$0xff]
      %v2811 = vld [vmem:[%s2322 + $0x48] sm:$0xff]
      %v2812 = vld [vmem:[%s2322 + $0x50] sm:$0xff]
      %v2813 = vld [vmem:[%s2322 + $0x60] sm:$0xff]
      %v2814 = vld [vmem:[%s2322 + $0x68] sm:$0xff]
      %v2815 = vld [vmem:[%s2322 + $0x78] sm:$0xff]
      %v2816 = vld [vmem:[%s2322 + $0x80] sm:$0xff]
      %v2817 = vld [vmem:[%s2322 + $0x90] sm:$0xff]
      %v2818 = vld [vmem:[%s2322 + $0x98] sm:$0xff]
      %v2819 = vld [vmem:[%s2322 + $0xa8] sm:$0xff]
      %v2820 = vld [vmem:[%s2322 + $0xb0] sm:$0xff]
      %v2821 = vld [vmem:[%s2322 + $0xc0] sm:$0xff]
      %v2822 = vld [vmem:[%s2322 + $0xc8] sm:$0xff]
      %v2823 = vld [vmem:[%s2322 + $0xd8] sm:$0xff]
      %v2824 = vld [vmem:[%s2322 + $0xe0] sm:$0xff]
      %v2825 = vld [vmem:[%s2322 + $0xf0] sm:$0xff]
      %v2826 = vld [vmem:[%s2322 + $0xf8] sm:$0xff]
      %v2827 = vld [vmem:[%s2322 + $0x108] sm:$0xff]
      %v2828 = vld [vmem:[%s2322 + $0x110] sm:$0xff]
      %v2829 = vld [vmem:[%s2322 + $0x120] sm:$0xff]
      %v2830 = vld [vmem:[%s2322 + $0x128] sm:$0xff]
      %v2831 = vld [vmem:[%s2322 + $0x138] sm:$0xff]
      %v2832 = vld [vmem:[%s2322 + $0x140] sm:$0xff]
      %v2833 = vld [vmem:[%s2322 + $0x150] sm:$0xff]
      %v2834 = vld [vmem:[%s2322 + $0x158] sm:$0xff]
      %v2835 = vld [vmem:[%s2322 + $0x168] sm:$0xff]
      %v2836 = vld [vmem:[%s2322 + $0x170] sm:$0xff]
      %2869 = vrot.lane.b32.xlu0 %v2805, 96
      %v2870 = vpop.permute.xlu0 %2869
      %2871 = vrot.lane.b32.xlu0 %v2806, 96
      %v2872 = vpop.permute.xlu0 %2871
      %2873 = vrot.lane.b32.xlu0 %v2807, 96
      %v2874 = vpop.permute.xlu0 %2873
      %2875 = vrot.lane.b32.xlu0 %v2808, 96
      %v2876 = vpop.permute.xlu0 %2875
      %2877 = vrot.lane.b32.xlu0 %v2809, 96
      %v2878 = vpop.permute.xlu0 %2877
      %2879 = vrot.lane.b32.xlu0 %v2810, 96
      %v2880 = vpop.permute.xlu0 %2879
      %2881 = vrot.lane.b32.xlu0 %v2811, 96
      %v2882 = vpop.permute.xlu0 %2881
      %2883 = vrot.lane.b32.xlu0 %v2812, 96
      %v2884 = vpop.permute.xlu0 %2883
      %2885 = vrot.lane.b32.xlu0 %v2813, 96
      %v2886 = vpop.permute.xlu0 %2885
      %2887 = vrot.lane.b32.xlu0 %v2814, 96
      %v2888 = vpop.permute.xlu0 %2887
      %2889 = vrot.lane.b32.xlu0 %v2815, 96
      %v2890 = vpop.permute.xlu0 %2889
      %2891 = vrot.lane.b32.xlu0 %v2816, 96
      %v2892 = vpop.permute.xlu0 %2891
      %2893 = vrot.lane.b32.xlu0 %v2817, 96
      %v2894 = vpop.permute.xlu0 %2893
      %2895 = vrot.lane.b32.xlu0 %v2818, 96
      %v2896 = vpop.permute.xlu0 %2895
      %2897 = vrot.lane.b32.xlu0 %v2819, 96
      %v2898 = vpop.permute.xlu0 %2897
      %2899 = vrot.lane.b32.xlu0 %v2820, 96
      %v2900 = vpop.permute.xlu0 %2899
      %2901 = vrot.lane.b32.xlu0 %v2821, 96
      %v2902 = vpop.permute.xlu0 %2901
      %2903 = vrot.lane.b32.xlu0 %v2822, 96
      %v2904 = vpop.permute.xlu0 %2903
      %2905 = vrot.lane.b32.xlu0 %v2823, 96
      %v2906 = vpop.permute.xlu0 %2905
      %2907 = vrot.lane.b32.xlu0 %v2824, 96
      %v2908 = vpop.permute.xlu0 %2907
      %2909 = vrot.lane.b32.xlu0 %v2825, 96
      %v2910 = vpop.permute.xlu0 %2909
      %2911 = vrot.lane.b32.xlu0 %v2826, 96
      %v2912 = vpop.permute.xlu0 %2911
      %2913 = vrot.lane.b32.xlu0 %v2827, 96
      %v2914 = vpop.permute.xlu0 %2913
      %2915 = vrot.lane.b32.xlu0 %v2828, 96
      %v2916 = vpop.permute.xlu0 %2915
      %2917 = vrot.lane.b32.xlu0 %v2829, 96
      %v2918 = vpop.permute.xlu0 %2917
      %2919 = vrot.lane.b32.xlu0 %v2830, 96
      %v2920 = vpop.permute.xlu0 %2919
      %2921 = vrot.lane.b32.xlu0 %v2831, 96
      %v2922 = vpop.permute.xlu0 %2921
      %2923 = vrot.lane.b32.xlu0 %v2832, 96
      %v2924 = vpop.permute.xlu0 %2923
      %2925 = vrot.lane.b32.xlu0 %v2833, 96
      %v2926 = vpop.permute.xlu0 %2925
      %2927 = vrot.lane.b32.xlu0 %v2834, 96
      %v2928 = vpop.permute.xlu0 %2927
      %2929 = vrot.lane.b32.xlu0 %v2835, 96
      %v2930 = vpop.permute.xlu0 %2929
      %2931 = vrot.lane.b32.xlu0 %v2836, 96
      %v2932 = vpop.permute.xlu0 %2931
      %vm2965 = vcmask 1048320
      %2966 = vst.msk [vmem:[#allocation5] sm:$0xff] %vm2965, %v2870
      %2967 = vst.msk [vmem:[#allocation5 + $0x18] sm:$0xff] %vm2965, %v2872
      %2968 = vst.msk [vmem:[#allocation5 + $0x30] sm:$0xff] %vm2965, %v2874
      %2969 = vst.msk [vmem:[#allocation5 + $0x48] sm:$0xff] %vm2965, %v2876
      %2970 = vst.msk [vmem:[#allocation5 + $0x60] sm:$0xff] %vm2965, %v2878
      %2971 = vst.msk [vmem:[#allocation5 + $0x78] sm:$0xff] %vm2965, %v2880
      %2972 = vst.msk [vmem:[#allocation5 + $0x90] sm:$0xff] %vm2965, %v2882
      %2973 = vst.msk [vmem:[#allocation5 + $0xa8] sm:$0xff] %vm2965, %v2884
      %2974 = vst.msk [vmem:[#allocation5 + $0xc0] sm:$0xff] %vm2965, %v2886
      %2975 = vst.msk [vmem:[#allocation5 + $0xd8] sm:$0xff] %vm2965, %v2888
      %2976 = vst.msk [vmem:[#allocation5 + $0xf0] sm:$0xff] %vm2965, %v2890
      %2977 = vst.msk [vmem:[#allocation5 + $0x108] sm:$0xff] %vm2965, %v2892
      %2978 = vst.msk [vmem:[#allocation5 + $0x120] sm:$0xff] %vm2965, %v2894
      %2979 = vst.msk [vmem:[#allocation5 + $0x138] sm:$0xff] %vm2965, %v2896
      %2980 = vst.msk [vmem:[#allocation5 + $0x150] sm:$0xff] %vm2965, %v2898
      %2981 = vst.msk [vmem:[#allocation5 + $0x168] sm:$0xff] %vm2965, %v2900
      %2982 = vst.msk [vmem:[#allocation5 + $0x180] sm:$0xff] %vm2965, %v2902
      %2983 = vst.msk [vmem:[#allocation5 + $0x198] sm:$0xff] %vm2965, %v2904
      %2984 = vst.msk [vmem:[#allocation5 + $0x1b0] sm:$0xff] %vm2965, %v2906
      %2985 = vst.msk [vmem:[#allocation5 + $0x1c8] sm:$0xff] %vm2965, %v2908
      %2986 = vst.msk [vmem:[#allocation5 + $0x1e0] sm:$0xff] %vm2965, %v2910
      %2987 = vst.msk [vmem:[#allocation5 + $0x1f8] sm:$0xff] %vm2965, %v2912
      %2988 = vst.msk [vmem:[#allocation5 + $0x210] sm:$0xff] %vm2965, %v2914
      %2989 = vst.msk [vmem:[#allocation5 + $0x228] sm:$0xff] %vm2965, %v2916
      %2990 = vst.msk [vmem:[#allocation5 + $0x240] sm:$0xff] %vm2965, %v2918
      %2991 = vst.msk [vmem:[#allocation5 + $0x258] sm:$0xff] %vm2965, %v2920
      %2992 = vst.msk [vmem:[#allocation5 + $0x270] sm:$0xff] %vm2965, %v2922
      %2993 = vst.msk [vmem:[#allocation5 + $0x288] sm:$0xff] %vm2965, %v2924
      %2994 = vst.msk [vmem:[#allocation5 + $0x2a0] sm:$0xff] %vm2965, %v2926
      %2995 = vst.msk [vmem:[#allocation5 + $0x2b8] sm:$0xff] %vm2965, %v2928
      %2996 = vst.msk [vmem:[#allocation5 + $0x2d0] sm:$0xff] %vm2965, %v2930
      %2997 = vst.msk [vmem:[#allocation5 + $0x2e8] sm:$0xff] %vm2965, %v2932
      %v2998 = vld [vmem:[%s2322 + $0x1] sm:$0xff]
      %v2999 = vld [vmem:[%s2322 + $0x9] sm:$0xff]
      %v3000 = vld [vmem:[%s2322 + $0x19] sm:$0xff]
      %v3001 = vld [vmem:[%s2322 + $0x21] sm:$0xff]
      %v3002 = vld [vmem:[%s2322 + $0x31] sm:$0xff]
      %v3003 = vld [vmem:[%s2322 + $0x39] sm:$0xff]
      %v3004 = vld [vmem:[%s2322 + $0x49] sm:$0xff]
      %v3005 = vld [vmem:[%s2322 + $0x51] sm:$0xff]
      %v3006 = vld [vmem:[%s2322 + $0x61] sm:$0xff]
      %v3007 = vld [vmem:[%s2322 + $0x69] sm:$0xff]
      %v3008 = vld [vmem:[%s2322 + $0x79] sm:$0xff]
      %v3009 = vld [vmem:[%s2322 + $0x81] sm:$0xff]
      %v3010 = vld [vmem:[%s2322 + $0x91] sm:$0xff]
      %v3011 = vld [vmem:[%s2322 + $0x99] sm:$0xff]
      %v3012 = vld [vmem:[%s2322 + $0xa9] sm:$0xff]
      %v3013 = vld [vmem:[%s2322 + $0xb1] sm:$0xff]
      %v3014 = vld [vmem:[%s2322 + $0xc1] sm:$0xff]
      %v3015 = vld [vmem:[%s2322 + $0xc9] sm:$0xff]
      %v3016 = vld [vmem:[%s2322 + $0xd9] sm:$0xff]
      %v3017 = vld [vmem:[%s2322 + $0xe1] sm:$0xff]
      %v3018 = vld [vmem:[%s2322 + $0xf1] sm:$0xff]
      %v3019 = vld [vmem:[%s2322 + $0xf9] sm:$0xff]
      %v3020 = vld [vmem:[%s2322 + $0x109] sm:$0xff]
      %v3021 = vld [vmem:[%s2322 + $0x111] sm:$0xff]
      %v3022 = vld [vmem:[%s2322 + $0x121] sm:$0xff]
      %v3023 = vld [vmem:[%s2322 + $0x129] sm:$0xff]
      %v3024 = vld [vmem:[%s2322 + $0x139] sm:$0xff]
      %v3025 = vld [vmem:[%s2322 + $0x141] sm:$0xff]
      %v3026 = vld [vmem:[%s2322 + $0x151] sm:$0xff]
      %v3027 = vld [vmem:[%s2322 + $0x159] sm:$0xff]
      %v3028 = vld [vmem:[%s2322 + $0x169] sm:$0xff]
      %v3029 = vld [vmem:[%s2322 + $0x171] sm:$0xff]
      %3030 = vst.msk [vmem:[#allocation5 + $0x8] sm:$0xff] %vm2266, %v2998
      %3031 = vst.msk [vmem:[#allocation5 + $0x20] sm:$0xff] %vm2266, %v2999
      %3032 = vst.msk [vmem:[#allocation5 + $0x38] sm:$0xff] %vm2266, %v3000
      %3033 = vst.msk [vmem:[#allocation5 + $0x50] sm:$0xff] %vm2266, %v3001
      %3034 = vst.msk [vmem:[#allocation5 + $0x68] sm:$0xff] %vm2266, %v3002
      %3035 = vst.msk [vmem:[#allocation5 + $0x80] sm:$0xff] %vm2266, %v3003
      %3036 = vst.msk [vmem:[#allocation5 + $0x98] sm:$0xff] %vm2266, %v3004
      %3037 = vst.msk [vmem:[#allocation5 + $0xb0] sm:$0xff] %vm2266, %v3005
      %3038 = vst.msk [vmem:[#allocation5 + $0xc8] sm:$0xff] %vm2266, %v3006
      %3039 = vst.msk [vmem:[#allocation5 + $0xe0] sm:$0xff] %vm2266, %v3007
      %3040 = vst.msk [vmem:[#allocation5 + $0xf8] sm:$0xff] %vm2266, %v3008
      %3041 = vst.msk [vmem:[#allocation5 + $0x110] sm:$0xff] %vm2266, %v3009
      %3042 = vst.msk [vmem:[#allocation5 + $0x128] sm:$0xff] %vm2266, %v3010
      %3043 = vst.msk [vmem:[#allocation5 + $0x140] sm:$0xff] %vm2266, %v3011
      %3044 = vst.msk [vmem:[#allocation5 + $0x158] sm:$0xff] %vm2266, %v3012
      %3045 = vst.msk [vmem:[#allocation5 + $0x170] sm:$0xff] %vm2266, %v3013
      %3046 = vst.msk [vmem:[#allocation5 + $0x188] sm:$0xff] %vm2266, %v3014
      %3047 = vst.msk [vmem:[#allocation5 + $0x1a0] sm:$0xff] %vm2266, %v3015
      %3048 = vst.msk [vmem:[#allocation5 + $0x1b8] sm:$0xff] %vm2266, %v3016
      %3049 = vst.msk [vmem:[#allocation5 + $0x1d0] sm:$0xff] %vm2266, %v3017
      %3050 = vst.msk [vmem:[#allocation5 + $0x1e8] sm:$0xff] %vm2266, %v3018
      %3051 = vst.msk [vmem:[#allocation5 + $0x200] sm:$0xff] %vm2266, %v3019
      %3052 = vst.msk [vmem:[#allocation5 + $0x218] sm:$0xff] %vm2266, %v3020
      %3053 = vst.msk [vmem:[#allocation5 + $0x230] sm:$0xff] %vm2266, %v3021
      %3054 = vst.msk [vmem:[#allocation5 + $0x248] sm:$0xff] %vm2266, %v3022
      %3055 = vst.msk [vmem:[#allocation5 + $0x260] sm:$0xff] %vm2266, %v3023
      %3056 = vst.msk [vmem:[#allocation5 + $0x278] sm:$0xff] %vm2266, %v3024
      %3057 = vst.msk [vmem:[#allocation5 + $0x290] sm:$0xff] %vm2266, %v3025
      %3058 = vst.msk [vmem:[#allocation5 + $0x2a8] sm:$0xff] %vm2266, %v3026
      %3059 = vst.msk [vmem:[#allocation5 + $0x2c0] sm:$0xff] %vm2266, %v3027
      %3060 = vst.msk [vmem:[#allocation5 + $0x2d8] sm:$0xff] %vm2266, %v3028
      %3061 = vst.msk [vmem:[#allocation5 + $0x2f0] sm:$0xff] %vm2266, %v3029
      %v3062 = vld [vmem:[%s2322 + $0x2] sm:$0xff]
      %v3063 = vld [vmem:[%s2322 + $0xa] sm:$0xff]
      %v3064 = vld [vmem:[%s2322 + $0x1a] sm:$0xff]
      %v3065 = vld [vmem:[%s2322 + $0x22] sm:$0xff]
      %v3066 = vld [vmem:[%s2322 + $0x32] sm:$0xff]
      %v3067 = vld [vmem:[%s2322 + $0x3a] sm:$0xff]
      %v3068 = vld [vmem:[%s2322 + $0x4a] sm:$0xff]
      %v3069 = vld [vmem:[%s2322 + $0x52] sm:$0xff]
      %v3070 = vld [vmem:[%s2322 + $0x62] sm:$0xff]
      %v3071 = vld [vmem:[%s2322 + $0x6a] sm:$0xff]
      %v3072 = vld [vmem:[%s2322 + $0x7a] sm:$0xff]
      %v3073 = vld [vmem:[%s2322 + $0x82] sm:$0xff]
      %v3074 = vld [vmem:[%s2322 + $0x92] sm:$0xff]
      %v3075 = vld [vmem:[%s2322 + $0x9a] sm:$0xff]
      %v3076 = vld [vmem:[%s2322 + $0xaa] sm:$0xff]
      %v3077 = vld [vmem:[%s2322 + $0xb2] sm:$0xff]
      %v3078 = vld [vmem:[%s2322 + $0xc2] sm:$0xff]
      %v3079 = vld [vmem:[%s2322 + $0xca] sm:$0xff]
      %v3080 = vld [vmem:[%s2322 + $0xda] sm:$0xff]
      %v3081 = vld [vmem:[%s2322 + $0xe2] sm:$0xff]
      %v3082 = vld [vmem:[%s2322 + $0xf2] sm:$0xff]
      %v3083 = vld [vmem:[%s2322 + $0xfa] sm:$0xff]
      %v3084 = vld [vmem:[%s2322 + $0x10a] sm:$0xff]
      %v3085 = vld [vmem:[%s2322 + $0x112] sm:$0xff]
      %v3086 = vld [vmem:[%s2322 + $0x122] sm:$0xff]
      %v3087 = vld [vmem:[%s2322 + $0x12a] sm:$0xff]
      %v3088 = vld [vmem:[%s2322 + $0x13a] sm:$0xff]
      %v3089 = vld [vmem:[%s2322 + $0x142] sm:$0xff]
      %v3090 = vld [vmem:[%s2322 + $0x152] sm:$0xff]
      %v3091 = vld [vmem:[%s2322 + $0x15a] sm:$0xff]
      %v3092 = vld [vmem:[%s2322 + $0x16a] sm:$0xff]
      %v3093 = vld [vmem:[%s2322 + $0x172] sm:$0xff]
      %3126 = vrot.lane.b32.xlu0 %v3062, 32
      %v3127 = vpop.permute.xlu0 %3126
      %3128 = vrot.lane.b32.xlu0 %v3063, 32
      %v3129 = vpop.permute.xlu0 %3128
      %3130 = vrot.lane.b32.xlu0 %v3064, 32
      %v3131 = vpop.permute.xlu0 %3130
      %3132 = vrot.lane.b32.xlu0 %v3065, 32
      %v3133 = vpop.permute.xlu0 %3132
      %3134 = vrot.lane.b32.xlu0 %v3066, 32
      %v3135 = vpop.permute.xlu0 %3134
      %3136 = vrot.lane.b32.xlu0 %v3067, 32
      %v3137 = vpop.permute.xlu0 %3136
      %3138 = vrot.lane.b32.xlu0 %v3068, 32
      %v3139 = vpop.permute.xlu0 %3138
      %3140 = vrot.lane.b32.xlu0 %v3069, 32
      %v3141 = vpop.permute.xlu0 %3140
      %3142 = vrot.lane.b32.xlu0 %v3070, 32
      %v3143 = vpop.permute.xlu0 %3142
      %3144 = vrot.lane.b32.xlu0 %v3071, 32
      %v3145 = vpop.permute.xlu0 %3144
      %3146 = vrot.lane.b32.xlu0 %v3072, 32
      %v3147 = vpop.permute.xlu0 %3146
      %3148 = vrot.lane.b32.xlu0 %v3073, 32
      %v3149 = vpop.permute.xlu0 %3148
      %3150 = vrot.lane.b32.xlu0 %v3074, 32
      %v3151 = vpop.permute.xlu0 %3150
      %3152 = vrot.lane.b32.xlu0 %v3075, 32
      %v3153 = vpop.permute.xlu0 %3152
      %3154 = vrot.lane.b32.xlu0 %v3076, 32
      %v3155 = vpop.permute.xlu0 %3154
      %3156 = vrot.lane.b32.xlu0 %v3077, 32
      %v3157 = vpop.permute.xlu0 %3156
      %3158 = vrot.lane.b32.xlu0 %v3078, 32
      %v3159 = vpop.permute.xlu0 %3158
      %3160 = vrot.lane.b32.xlu0 %v3079, 32
      %v3161 = vpop.permute.xlu0 %3160
      %3162 = vrot.lane.b32.xlu0 %v3080, 32
      %v3163 = vpop.permute.xlu0 %3162
      %3164 = vrot.lane.b32.xlu0 %v3081, 32
      %v3165 = vpop.permute.xlu0 %3164
      %3166 = vrot.lane.b32.xlu0 %v3082, 32
      %v3167 = vpop.permute.xlu0 %3166
      %3168 = vrot.lane.b32.xlu0 %v3083, 32
      %v3169 = vpop.permute.xlu0 %3168
      %3170 = vrot.lane.b32.xlu0 %v3084, 32
      %v3171 = vpop.permute.xlu0 %3170
      %3172 = vrot.lane.b32.xlu0 %v3085, 32
      %v3173 = vpop.permute.xlu0 %3172
      %3174 = vrot.lane.b32.xlu0 %v3086, 32
      %v3175 = vpop.permute.xlu0 %3174
      %3176 = vrot.lane.b32.xlu0 %v3087, 32
      %v3177 = vpop.permute.xlu0 %3176
      %3178 = vrot.lane.b32.xlu0 %v3088, 32
      %v3179 = vpop.permute.xlu0 %3178
      %3180 = vrot.lane.b32.xlu0 %v3089, 32
      %v3181 = vpop.permute.xlu0 %3180
      %3182 = vrot.lane.b32.xlu0 %v3090, 32
      %v3183 = vpop.permute.xlu0 %3182
      %3184 = vrot.lane.b32.xlu0 %v3091, 32
      %v3185 = vpop.permute.xlu0 %3184
      %3186 = vrot.lane.b32.xlu0 %v3092, 32
      %v3187 = vpop.permute.xlu0 %3186
      %3188 = vrot.lane.b32.xlu0 %v3093, 32
      %v3189 = vpop.permute.xlu0 %3188
      %3222 = vst.msk [vmem:[#allocation5 + $0x8] sm:$0xff] %vm2579, %v3127
      %3223 = vst.msk [vmem:[#allocation5 + $0x20] sm:$0xff] %vm2579, %v3129
      %3224 = vst.msk [vmem:[#allocation5 + $0x38] sm:$0xff] %vm2579, %v3131
      %3225 = vst.msk [vmem:[#allocation5 + $0x50] sm:$0xff] %vm2579, %v3133
      %3226 = vst.msk [vmem:[#allocation5 + $0x68] sm:$0xff] %vm2579, %v3135
      %3227 = vst.msk [vmem:[#allocation5 + $0x80] sm:$0xff] %vm2579, %v3137
      %3228 = vst.msk [vmem:[#allocation5 + $0x98] sm:$0xff] %vm2579, %v3139
      %3229 = vst.msk [vmem:[#allocation5 + $0xb0] sm:$0xff] %vm2579, %v3141
      %3230 = vst.msk [vmem:[#allocation5 + $0xc8] sm:$0xff] %vm2579, %v3143
      %3231 = vst.msk [vmem:[#allocation5 + $0xe0] sm:$0xff] %vm2579, %v3145
      %3232 = vst.msk [vmem:[#allocation5 + $0xf8] sm:$0xff] %vm2579, %v3147
      %3233 = vst.msk [vmem:[#allocation5 + $0x110] sm:$0xff] %vm2579, %v3149
      %3234 = vst.msk [vmem:[#allocation5 + $0x128] sm:$0xff] %vm2579, %v3151
      %3235 = vst.msk [vmem:[#allocation5 + $0x140] sm:$0xff] %vm2579, %v3153
      %3236 = vst.msk [vmem:[#allocation5 + $0x158] sm:$0xff] %vm2579, %v3155
      %3237 = vst.msk [vmem:[#allocation5 + $0x170] sm:$0xff] %vm2579, %v3157
      %3238 = vst.msk [vmem:[#allocation5 + $0x188] sm:$0xff] %vm2579, %v3159
      %3239 = vst.msk [vmem:[#allocation5 + $0x1a0] sm:$0xff] %vm2579, %v3161
      %3240 = vst.msk [vmem:[#allocation5 + $0x1b8] sm:$0xff] %vm2579, %v3163
      %3241 = vst.msk [vmem:[#allocation5 + $0x1d0] sm:$0xff] %vm2579, %v3165
      %3242 = vst.msk [vmem:[#allocation5 + $0x1e8] sm:$0xff] %vm2579, %v3167
      %3243 = vst.msk [vmem:[#allocation5 + $0x200] sm:$0xff] %vm2579, %v3169
      %3244 = vst.msk [vmem:[#allocation5 + $0x218] sm:$0xff] %vm2579, %v3171
      %3245 = vst.msk [vmem:[#allocation5 + $0x230] sm:$0xff] %vm2579, %v3173
      %3246 = vst.msk [vmem:[#allocation5 + $0x248] sm:$0xff] %vm2579, %v3175
      %3247 = vst.msk [vmem:[#allocation5 + $0x260] sm:$0xff] %vm2579, %v3177
      %3248 = vst.msk [vmem:[#allocation5 + $0x278] sm:$0xff] %vm2579, %v3179
      %3249 = vst.msk [vmem:[#allocation5 + $0x290] sm:$0xff] %vm2579, %v3181
      %3250 = vst.msk [vmem:[#allocation5 + $0x2a8] sm:$0xff] %vm2579, %v3183
      %3251 = vst.msk [vmem:[#allocation5 + $0x2c0] sm:$0xff] %vm2579, %v3185
      %3252 = vst.msk [vmem:[#allocation5 + $0x2d8] sm:$0xff] %vm2579, %v3187
      %3253 = vst.msk [vmem:[#allocation5 + $0x2f0] sm:$0xff] %vm2579, %v3189
      %s3254 = scalar_lea.vmem [#allocation4], 48
      %v3255 = vld [vmem:[%s3254] sm:$0xff]
      %v3256 = vld [vmem:[%s3254 + $0x8] sm:$0xff]
      %v3257 = vld [vmem:[%s3254 + $0x18] sm:$0xff]
      %v3258 = vld [vmem:[%s3254 + $0x20] sm:$0xff]
      %v3259 = vld [vmem:[%s3254 + $0x30] sm:$0xff]
      %v3260 = vld [vmem:[%s3254 + $0x38] sm:$0xff]
      %v3261 = vld [vmem:[%s3254 + $0x48] sm:$0xff]
      %v3262 = vld [vmem:[%s3254 + $0x50] sm:$0xff]
      %v3263 = vld [vmem:[%s3254 + $0x60] sm:$0xff]
      %v3264 = vld [vmem:[%s3254 + $0x68] sm:$0xff]
      %v3265 = vld [vmem:[%s3254 + $0x78] sm:$0xff]
      %v3266 = vld [vmem:[%s3254 + $0x80] sm:$0xff]
      %v3267 = vld [vmem:[%s3254 + $0x90] sm:$0xff]
      %v3268 = vld [vmem:[%s3254 + $0x98] sm:$0xff]
      %v3269 = vld [vmem:[%s3254 + $0xa8] sm:$0xff]
      %v3270 = vld [vmem:[%s3254 + $0xb0] sm:$0xff]
      %v3271 = vld [vmem:[%s3254 + $0xc0] sm:$0xff]
      %v3272 = vld [vmem:[%s3254 + $0xc8] sm:$0xff]
      %v3273 = vld [vmem:[%s3254 + $0xd8] sm:$0xff]
      %v3274 = vld [vmem:[%s3254 + $0xe0] sm:$0xff]
      %v3275 = vld [vmem:[%s3254 + $0xf0] sm:$0xff]
      %v3276 = vld [vmem:[%s3254 + $0xf8] sm:$0xff]
      %v3277 = vld [vmem:[%s3254 + $0x108] sm:$0xff]
      %v3278 = vld [vmem:[%s3254 + $0x110] sm:$0xff]
      %v3279 = vld [vmem:[%s3254 + $0x120] sm:$0xff]
      %v3280 = vld [vmem:[%s3254 + $0x128] sm:$0xff]
      %v3281 = vld [vmem:[%s3254 + $0x138] sm:$0xff]
      %v3282 = vld [vmem:[%s3254 + $0x140] sm:$0xff]
      %v3283 = vld [vmem:[%s3254 + $0x150] sm:$0xff]
      %v3284 = vld [vmem:[%s3254 + $0x158] sm:$0xff]
      %v3285 = vld [vmem:[%s3254 + $0x168] sm:$0xff]
      %v3286 = vld [vmem:[%s3254 + $0x170] sm:$0xff]
      %3319 = vrot.lane.b32.xlu0 %v3255, 64
      %v3320 = vpop.permute.xlu0 %3319
      %3321 = vrot.lane.b32.xlu0 %v3256, 64
      %v3322 = vpop.permute.xlu0 %3321
      %3323 = vrot.lane.b32.xlu0 %v3257, 64
      %v3324 = vpop.permute.xlu0 %3323
      %3325 = vrot.lane.b32.xlu0 %v3258, 64
      %v3326 = vpop.permute.xlu0 %3325
      %3327 = vrot.lane.b32.xlu0 %v3259, 64
      %v3328 = vpop.permute.xlu0 %3327
      %3329 = vrot.lane.b32.xlu0 %v3260, 64
      %v3330 = vpop.permute.xlu0 %3329
      %3331 = vrot.lane.b32.xlu0 %v3261, 64
      %v3332 = vpop.permute.xlu0 %3331
      %3333 = vrot.lane.b32.xlu0 %v3262, 64
      %v3334 = vpop.permute.xlu0 %3333
      %3335 = vrot.lane.b32.xlu0 %v3263, 64
      %v3336 = vpop.permute.xlu0 %3335
      %3337 = vrot.lane.b32.xlu0 %v3264, 64
      %v3338 = vpop.permute.xlu0 %3337
      %3339 = vrot.lane.b32.xlu0 %v3265, 64
      %v3340 = vpop.permute.xlu0 %3339
      %3341 = vrot.lane.b32.xlu0 %v3266, 64
      %v3342 = vpop.permute.xlu0 %3341
      %3343 = vrot.lane.b32.xlu0 %v3267, 64
      %v3344 = vpop.permute.xlu0 %3343
      %3345 = vrot.lane.b32.xlu0 %v3268, 64
      %v3346 = vpop.permute.xlu0 %3345
      %3347 = vrot.lane.b32.xlu0 %v3269, 64
      %v3348 = vpop.permute.xlu0 %3347
      %3349 = vrot.lane.b32.xlu0 %v3270, 64
      %v3350 = vpop.permute.xlu0 %3349
      %3351 = vrot.lane.b32.xlu0 %v3271, 64
      %v3352 = vpop.permute.xlu0 %3351
      %3353 = vrot.lane.b32.xlu0 %v3272, 64
      %v3354 = vpop.permute.xlu0 %3353
      %3355 = vrot.lane.b32.xlu0 %v3273, 64
      %v3356 = vpop.permute.xlu0 %3355
      %3357 = vrot.lane.b32.xlu0 %v3274, 64
      %v3358 = vpop.permute.xlu0 %3357
      %3359 = vrot.lane.b32.xlu0 %v3275, 64
      %v3360 = vpop.permute.xlu0 %3359
      %3361 = vrot.lane.b32.xlu0 %v3276, 64
      %v3362 = vpop.permute.xlu0 %3361
      %3363 = vrot.lane.b32.xlu0 %v3277, 64
      %v3364 = vpop.permute.xlu0 %3363
      %3365 = vrot.lane.b32.xlu0 %v3278, 64
      %v3366 = vpop.permute.xlu0 %3365
      %3367 = vrot.lane.b32.xlu0 %v3279, 64
      %v3368 = vpop.permute.xlu0 %3367
      %3369 = vrot.lane.b32.xlu0 %v3280, 64
      %v3370 = vpop.permute.xlu0 %3369
      %3371 = vrot.lane.b32.xlu0 %v3281, 64
      %v3372 = vpop.permute.xlu0 %3371
      %3373 = vrot.lane.b32.xlu0 %v3282, 64
      %v3374 = vpop.permute.xlu0 %3373
      %3375 = vrot.lane.b32.xlu0 %v3283, 64
      %v3376 = vpop.permute.xlu0 %3375
      %3377 = vrot.lane.b32.xlu0 %v3284, 64
      %v3378 = vpop.permute.xlu0 %3377
      %3379 = vrot.lane.b32.xlu0 %v3285, 64
      %v3380 = vpop.permute.xlu0 %3379
      %3381 = vrot.lane.b32.xlu0 %v3286, 64
      %v3382 = vpop.permute.xlu0 %3381
      %3415 = vst.msk [vmem:[#allocation5 + $0x8] sm:$0xff] %vm2772, %v3320
      %3416 = vst.msk [vmem:[#allocation5 + $0x20] sm:$0xff] %vm2772, %v3322
      %3417 = vst.msk [vmem:[#allocation5 + $0x38] sm:$0xff] %vm2772, %v3324
      %3418 = vst.msk [vmem:[#allocation5 + $0x50] sm:$0xff] %vm2772, %v3326
      %3419 = vst.msk [vmem:[#allocation5 + $0x68] sm:$0xff] %vm2772, %v3328
      %3420 = vst.msk [vmem:[#allocation5 + $0x80] sm:$0xff] %vm2772, %v3330
      %3421 = vst.msk [vmem:[#allocation5 + $0x98] sm:$0xff] %vm2772, %v3332
      %3422 = vst.msk [vmem:[#allocation5 + $0xb0] sm:$0xff] %vm2772, %v3334
      %3423 = vst.msk [vmem:[#allocation5 + $0xc8] sm:$0xff] %vm2772, %v3336
      %3424 = vst.msk [vmem:[#allocation5 + $0xe0] sm:$0xff] %vm2772, %v3338
      %3425 = vst.msk [vmem:[#allocation5 + $0xf8] sm:$0xff] %vm2772, %v3340
      %3426 = vst.msk [vmem:[#allocation5 + $0x110] sm:$0xff] %vm2772, %v3342
      %3427 = vst.msk [vmem:[#allocation5 + $0x128] sm:$0xff] %vm2772, %v3344
      %3428 = vst.msk [vmem:[#allocation5 + $0x140] sm:$0xff] %vm2772, %v3346
      %3429 = vst.msk [vmem:[#allocation5 + $0x158] sm:$0xff] %vm2772, %v3348
      %3430 = vst.msk [vmem:[#allocation5 + $0x170] sm:$0xff] %vm2772, %v3350
      %3431 = vst.msk [vmem:[#allocation5 + $0x188] sm:$0xff] %vm2772, %v3352
      %3432 = vst.msk [vmem:[#allocation5 + $0x1a0] sm:$0xff] %vm2772, %v3354
      %3433 = vst.msk [vmem:[#allocation5 + $0x1b8] sm:$0xff] %vm2772, %v3356
      %3434 = vst.msk [vmem:[#allocation5 + $0x1d0] sm:$0xff] %vm2772, %v3358
      %3435 = vst.msk [vmem:[#allocation5 + $0x1e8] sm:$0xff] %vm2772, %v3360
      %3436 = vst.msk [vmem:[#allocation5 + $0x200] sm:$0xff] %vm2772, %v3362
      %3437 = vst.msk [vmem:[#allocation5 + $0x218] sm:$0xff] %vm2772, %v3364
      %3438 = vst.msk [vmem:[#allocation5 + $0x230] sm:$0xff] %vm2772, %v3366
      %3439 = vst.msk [vmem:[#allocation5 + $0x248] sm:$0xff] %vm2772, %v3368
      %3440 = vst.msk [vmem:[#allocation5 + $0x260] sm:$0xff] %vm2772, %v3370
      %3441 = vst.msk [vmem:[#allocation5 + $0x278] sm:$0xff] %vm2772, %v3372
      %3442 = vst.msk [vmem:[#allocation5 + $0x290] sm:$0xff] %vm2772, %v3374
      %3443 = vst.msk [vmem:[#allocation5 + $0x2a8] sm:$0xff] %vm2772, %v3376
      %3444 = vst.msk [vmem:[#allocation5 + $0x2c0] sm:$0xff] %vm2772, %v3378
      %3445 = vst.msk [vmem:[#allocation5 + $0x2d8] sm:$0xff] %vm2772, %v3380
      %3446 = vst.msk [vmem:[#allocation5 + $0x2f0] sm:$0xff] %vm2772, %v3382
      %v3447 = vld [vmem:[%s3254 + $0x1] sm:$0xff]
      %v3448 = vld [vmem:[%s3254 + $0x9] sm:$0xff]
      %v3449 = vld [vmem:[%s3254 + $0x19] sm:$0xff]
      %v3450 = vld [vmem:[%s3254 + $0x21] sm:$0xff]
      %v3451 = vld [vmem:[%s3254 + $0x31] sm:$0xff]
      %v3452 = vld [vmem:[%s3254 + $0x39] sm:$0xff]
      %v3453 = vld [vmem:[%s3254 + $0x49] sm:$0xff]
      %v3454 = vld [vmem:[%s3254 + $0x51] sm:$0xff]
      %v3455 = vld [vmem:[%s3254 + $0x61] sm:$0xff]
      %v3456 = vld [vmem:[%s3254 + $0x69] sm:$0xff]
      %v3457 = vld [vmem:[%s3254 + $0x79] sm:$0xff]
      %v3458 = vld [vmem:[%s3254 + $0x81] sm:$0xff]
      %v3459 = vld [vmem:[%s3254 + $0x91] sm:$0xff]
      %v3460 = vld [vmem:[%s3254 + $0x99] sm:$0xff]
      %v3461 = vld [vmem:[%s3254 + $0xa9] sm:$0xff]
      %v3462 = vld [vmem:[%s3254 + $0xb1] sm:$0xff]
      %v3463 = vld [vmem:[%s3254 + $0xc1] sm:$0xff]
      %v3464 = vld [vmem:[%s3254 + $0xc9] sm:$0xff]
      %v3465 = vld [vmem:[%s3254 + $0xd9] sm:$0xff]
      %v3466 = vld [vmem:[%s3254 + $0xe1] sm:$0xff]
      %v3467 = vld [vmem:[%s3254 + $0xf1] sm:$0xff]
      %v3468 = vld [vmem:[%s3254 + $0xf9] sm:$0xff]
      %v3469 = vld [vmem:[%s3254 + $0x109] sm:$0xff]
      %v3470 = vld [vmem:[%s3254 + $0x111] sm:$0xff]
      %v3471 = vld [vmem:[%s3254 + $0x121] sm:$0xff]
      %v3472 = vld [vmem:[%s3254 + $0x129] sm:$0xff]
      %v3473 = vld [vmem:[%s3254 + $0x139] sm:$0xff]
      %v3474 = vld [vmem:[%s3254 + $0x141] sm:$0xff]
      %v3475 = vld [vmem:[%s3254 + $0x151] sm:$0xff]
      %v3476 = vld [vmem:[%s3254 + $0x159] sm:$0xff]
      %v3477 = vld [vmem:[%s3254 + $0x169] sm:$0xff]
      %v3478 = vld [vmem:[%s3254 + $0x171] sm:$0xff]
      %3511 = vrot.lane.b32.xlu0 %v3447, 96
      %v3512 = vpop.permute.xlu0 %3511
      %3513 = vrot.lane.b32.xlu0 %v3448, 96
      %v3514 = vpop.permute.xlu0 %3513
      %3515 = vrot.lane.b32.xlu0 %v3449, 96
      %v3516 = vpop.permute.xlu0 %3515
      %3517 = vrot.lane.b32.xlu0 %v3450, 96
      %v3518 = vpop.permute.xlu0 %3517
      %3519 = vrot.lane.b32.xlu0 %v3451, 96
      %v3520 = vpop.permute.xlu0 %3519
      %3521 = vrot.lane.b32.xlu0 %v3452, 96
      %v3522 = vpop.permute.xlu0 %3521
      %3523 = vrot.lane.b32.xlu0 %v3453, 96
      %v3524 = vpop.permute.xlu0 %3523
      %3525 = vrot.lane.b32.xlu0 %v3454, 96
      %v3526 = vpop.permute.xlu0 %3525
      %3527 = vrot.lane.b32.xlu0 %v3455, 96
      %v3528 = vpop.permute.xlu0 %3527
      %3529 = vrot.lane.b32.xlu0 %v3456, 96
      %v3530 = vpop.permute.xlu0 %3529
      %3531 = vrot.lane.b32.xlu0 %v3457, 96
      %v3532 = vpop.permute.xlu0 %3531
      %3533 = vrot.lane.b32.xlu0 %v3458, 96
      %v3534 = vpop.permute.xlu0 %3533
      %3535 = vrot.lane.b32.xlu0 %v3459, 96
      %v3536 = vpop.permute.xlu0 %3535
      %3537 = vrot.lane.b32.xlu0 %v3460, 96
      %v3538 = vpop.permute.xlu0 %3537
      %3539 = vrot.lane.b32.xlu0 %v3461, 96
      %v3540 = vpop.permute.xlu0 %3539
      %3541 = vrot.lane.b32.xlu0 %v3462, 96
      %v3542 = vpop.permute.xlu0 %3541
      %3543 = vrot.lane.b32.xlu0 %v3463, 96
      %v3544 = vpop.permute.xlu0 %3543
      %3545 = vrot.lane.b32.xlu0 %v3464, 96
      %v3546 = vpop.permute.xlu0 %3545
      %3547 = vrot.lane.b32.xlu0 %v3465, 96
      %v3548 = vpop.permute.xlu0 %3547
      %3549 = vrot.lane.b32.xlu0 %v3466, 96
      %v3550 = vpop.permute.xlu0 %3549
      %3551 = vrot.lane.b32.xlu0 %v3467, 96
      %v3552 = vpop.permute.xlu0 %3551
      %3553 = vrot.lane.b32.xlu0 %v3468, 96
      %v3554 = vpop.permute.xlu0 %3553
      %3555 = vrot.lane.b32.xlu0 %v3469, 96
      %v3556 = vpop.permute.xlu0 %3555
      %3557 = vrot.lane.b32.xlu0 %v3470, 96
      %v3558 = vpop.permute.xlu0 %3557
      %3559 = vrot.lane.b32.xlu0 %v3471, 96
      %v3560 = vpop.permute.xlu0 %3559
      %3561 = vrot.lane.b32.xlu0 %v3472, 96
      %v3562 = vpop.permute.xlu0 %3561
      %3563 = vrot.lane.b32.xlu0 %v3473, 96
      %v3564 = vpop.permute.xlu0 %3563
      %3565 = vrot.lane.b32.xlu0 %v3474, 96
      %v3566 = vpop.permute.xlu0 %3565
      %3567 = vrot.lane.b32.xlu0 %v3475, 96
      %v3568 = vpop.permute.xlu0 %3567
      %3569 = vrot.lane.b32.xlu0 %v3476, 96
      %v3570 = vpop.permute.xlu0 %3569
      %3571 = vrot.lane.b32.xlu0 %v3477, 96
      %v3572 = vpop.permute.xlu0 %3571
      %3573 = vrot.lane.b32.xlu0 %v3478, 96
      %v3574 = vpop.permute.xlu0 %3573
      %3607 = vst.msk [vmem:[#allocation5 + $0x8] sm:$0xff] %vm2965, %v3512
      %3608 = vst.msk [vmem:[#allocation5 + $0x20] sm:$0xff] %vm2965, %v3514
      %3609 = vst.msk [vmem:[#allocation5 + $0x38] sm:$0xff] %vm2965, %v3516
      %3610 = vst.msk [vmem:[#allocation5 + $0x50] sm:$0xff] %vm2965, %v3518
      %3611 = vst.msk [vmem:[#allocation5 + $0x68] sm:$0xff] %vm2965, %v3520
      %3612 = vst.msk [vmem:[#allocation5 + $0x80] sm:$0xff] %vm2965, %v3522
      %3613 = vst.msk [vmem:[#allocation5 + $0x98] sm:$0xff] %vm2965, %v3524
      %3614 = vst.msk [vmem:[#allocation5 + $0xb0] sm:$0xff] %vm2965, %v3526
      %3615 = vst.msk [vmem:[#allocation5 + $0xc8] sm:$0xff] %vm2965, %v3528
      %3616 = vst.msk [vmem:[#allocation5 + $0xe0] sm:$0xff] %vm2965, %v3530
      %3617 = vst.msk [vmem:[#allocation5 + $0xf8] sm:$0xff] %vm2965, %v3532
      %3618 = vst.msk [vmem:[#allocation5 + $0x110] sm:$0xff] %vm2965, %v3534
      %3619 = vst.msk [vmem:[#allocation5 + $0x128] sm:$0xff] %vm2965, %v3536
      %3620 = vst.msk [vmem:[#allocation5 + $0x140] sm:$0xff] %vm2965, %v3538
      %3621 = vst.msk [vmem:[#allocation5 + $0x158] sm:$0xff] %vm2965, %v3540
      %3622 = vst.msk [vmem:[#allocation5 + $0x170] sm:$0xff] %vm2965, %v3542
      %3623 = vst.msk [vmem:[#allocation5 + $0x188] sm:$0xff] %vm2965, %v3544
      %3624 = vst.msk [vmem:[#allocation5 + $0x1a0] sm:$0xff] %vm2965, %v3546
      %3625 = vst.msk [vmem:[#allocation5 + $0x1b8] sm:$0xff] %vm2965, %v3548
      %3626 = vst.msk [vmem:[#allocation5 + $0x1d0] sm:$0xff] %vm2965, %v3550
      %3627 = vst.msk [vmem:[#allocation5 + $0x1e8] sm:$0xff] %vm2965, %v3552
      %3628 = vst.msk [vmem:[#allocation5 + $0x200] sm:$0xff] %vm2965, %v3554
      %3629 = vst.msk [vmem:[#allocation5 + $0x218] sm:$0xff] %vm2965, %v3556
      %3630 = vst.msk [vmem:[#allocation5 + $0x230] sm:$0xff] %vm2965, %v3558
      %3631 = vst.msk [vmem:[#allocation5 + $0x248] sm:$0xff] %vm2965, %v3560
      %3632 = vst.msk [vmem:[#allocation5 + $0x260] sm:$0xff] %vm2965, %v3562
      %3633 = vst.msk [vmem:[#allocation5 + $0x278] sm:$0xff] %vm2965, %v3564
      %3634 = vst.msk [vmem:[#allocation5 + $0x290] sm:$0xff] %vm2965, %v3566
      %3635 = vst.msk [vmem:[#allocation5 + $0x2a8] sm:$0xff] %vm2965, %v3568
      %3636 = vst.msk [vmem:[#allocation5 + $0x2c0] sm:$0xff] %vm2965, %v3570
      %3637 = vst.msk [vmem:[#allocation5 + $0x2d8] sm:$0xff] %vm2965, %v3572
      %3638 = vst.msk [vmem:[#allocation5 + $0x2f0] sm:$0xff] %vm2965, %v3574
      %v3639 = vld [vmem:[%s3254 + $0x2] sm:$0xff]
      %v3640 = vld [vmem:[%s3254 + $0xa] sm:$0xff]
      %v3641 = vld [vmem:[%s3254 + $0x1a] sm:$0xff]
      %v3642 = vld [vmem:[%s3254 + $0x22] sm:$0xff]
      %v3643 = vld [vmem:[%s3254 + $0x32] sm:$0xff]
      %v3644 = vld [vmem:[%s3254 + $0x3a] sm:$0xff]
      %v3645 = vld [vmem:[%s3254 + $0x4a] sm:$0xff]
      %v3646 = vld [vmem:[%s3254 + $0x52] sm:$0xff]
      %v3647 = vld [vmem:[%s3254 + $0x62] sm:$0xff]
      %v3648 = vld [vmem:[%s3254 + $0x6a] sm:$0xff]
      %v3649 = vld [vmem:[%s3254 + $0x7a] sm:$0xff]
      %v3650 = vld [vmem:[%s3254 + $0x82] sm:$0xff]
      %v3651 = vld [vmem:[%s3254 + $0x92] sm:$0xff]
      %v3652 = vld [vmem:[%s3254 + $0x9a] sm:$0xff]
      %v3653 = vld [vmem:[%s3254 + $0xaa] sm:$0xff]
      %v3654 = vld [vmem:[%s3254 + $0xb2] sm:$0xff]
      %v3655 = vld [vmem:[%s3254 + $0xc2] sm:$0xff]
      %v3656 = vld [vmem:[%s3254 + $0xca] sm:$0xff]
      %v3657 = vld [vmem:[%s3254 + $0xda] sm:$0xff]
      %v3658 = vld [vmem:[%s3254 + $0xe2] sm:$0xff]
      %v3659 = vld [vmem:[%s3254 + $0xf2] sm:$0xff]
      %v3660 = vld [vmem:[%s3254 + $0xfa] sm:$0xff]
      %v3661 = vld [vmem:[%s3254 + $0x10a] sm:$0xff]
      %v3662 = vld [vmem:[%s3254 + $0x112] sm:$0xff]
      %v3663 = vld [vmem:[%s3254 + $0x122] sm:$0xff]
      %v3664 = vld [vmem:[%s3254 + $0x12a] sm:$0xff]
      %v3665 = vld [vmem:[%s3254 + $0x13a] sm:$0xff]
      %v3666 = vld [vmem:[%s3254 + $0x142] sm:$0xff]
      %v3667 = vld [vmem:[%s3254 + $0x152] sm:$0xff]
      %v3668 = vld [vmem:[%s3254 + $0x15a] sm:$0xff]
      %v3669 = vld [vmem:[%s3254 + $0x16a] sm:$0xff]
      %v3670 = vld [vmem:[%s3254 + $0x172] sm:$0xff]
      %3671 = vst.msk [vmem:[#allocation5 + $0x10] sm:$0xff] %vm2266, %v3639
      %3672 = vst.msk [vmem:[#allocation5 + $0x28] sm:$0xff] %vm2266, %v3640
      %3673 = vst.msk [vmem:[#allocation5 + $0x40] sm:$0xff] %vm2266, %v3641
      %3674 = vst.msk [vmem:[#allocation5 + $0x58] sm:$0xff] %vm2266, %v3642
      %3675 = vst.msk [vmem:[#allocation5 + $0x70] sm:$0xff] %vm2266, %v3643
      %3676 = vst.msk [vmem:[#allocation5 + $0x88] sm:$0xff] %vm2266, %v3644
      %3677 = vst.msk [vmem:[#allocation5 + $0xa0] sm:$0xff] %vm2266, %v3645
      %3678 = vst.msk [vmem:[#allocation5 + $0xb8] sm:$0xff] %vm2266, %v3646
      %3679 = vst.msk [vmem:[#allocation5 + $0xd0] sm:$0xff] %vm2266, %v3647
      %3680 = vst.msk [vmem:[#allocation5 + $0xe8] sm:$0xff] %vm2266, %v3648
      %3681 = vst.msk [vmem:[#allocation5 + $0x100] sm:$0xff] %vm2266, %v3649
      %3682 = vst.msk [vmem:[#allocation5 + $0x118] sm:$0xff] %vm2266, %v3650
      %3683 = vst.msk [vmem:[#allocation5 + $0x130] sm:$0xff] %vm2266, %v3651
      %3684 = vst.msk [vmem:[#allocation5 + $0x148] sm:$0xff] %vm2266, %v3652
      %3685 = vst.msk [vmem:[#allocation5 + $0x160] sm:$0xff] %vm2266, %v3653
      %3686 = vst.msk [vmem:[#allocation5 + $0x178] sm:$0xff] %vm2266, %v3654
      %3687 = vst.msk [vmem:[#allocation5 + $0x190] sm:$0xff] %vm2266, %v3655
      %3688 = vst.msk [vmem:[#allocation5 + $0x1a8] sm:$0xff] %vm2266, %v3656
      %3689 = vst.msk [vmem:[#allocation5 + $0x1c0] sm:$0xff] %vm2266, %v3657
      %3690 = vst.msk [vmem:[#allocation5 + $0x1d8] sm:$0xff] %vm2266, %v3658
      %3691 = vst.msk [vmem:[#allocation5 + $0x1f0] sm:$0xff] %vm2266, %v3659
      %3692 = vst.msk [vmem:[#allocation5 + $0x208] sm:$0xff] %vm2266, %v3660
      %3693 = vst.msk [vmem:[#allocation5 + $0x220] sm:$0xff] %vm2266, %v3661
      %3694 = vst.msk [vmem:[#allocation5 + $0x238] sm:$0xff] %vm2266, %v3662
      %3695 = vst.msk [vmem:[#allocation5 + $0x250] sm:$0xff] %vm2266, %v3663
      %3696 = vst.msk [vmem:[#allocation5 + $0x268] sm:$0xff] %vm2266, %v3664
      %3697 = vst.msk [vmem:[#allocation5 + $0x280] sm:$0xff] %vm2266, %v3665
      %3698 = vst.msk [vmem:[#allocation5 + $0x298] sm:$0xff] %vm2266, %v3666
      %3699 = vst.msk [vmem:[#allocation5 + $0x2b0] sm:$0xff] %vm2266, %v3667
      %3700 = vst.msk [vmem:[#allocation5 + $0x2c8] sm:$0xff] %vm2266, %v3668
      %3701 = vst.msk [vmem:[#allocation5 + $0x2e0] sm:$0xff] %vm2266, %v3669
      %3702 = vst.msk [vmem:[#allocation5 + $0x2f8] sm:$0xff] %vm2266, %v3670
      %v3703 = vld [vmem:[#allocation5] sm:$0xff]
      %v3704 = vld [vmem:[#allocation5 + $0x8] sm:$0xff]
      %v3705 = vld [vmem:[#allocation5 + $0x10] sm:$0xff]
      %v3706 = vld [vmem:[#allocation5 + $0x18] sm:$0xff]
      %v3707 = vld [vmem:[#allocation5 + $0x20] sm:$0xff]
      %v3708 = vld [vmem:[#allocation5 + $0x28] sm:$0xff]
      %v3709 = vld [vmem:[#allocation5 + $0x30] sm:$0xff]
      %v3710 = vld [vmem:[#allocation5 + $0x38] sm:$0xff]
      %v3711 = vld [vmem:[#allocation5 + $0x40] sm:$0xff]
      %v3712 = vld [vmem:[#allocation5 + $0x48] sm:$0xff]
      %v3713 = vld [vmem:[#allocation5 + $0x50] sm:$0xff]
      %v3714 = vld [vmem:[#allocation5 + $0x58] sm:$0xff]
      %v3715 = vld [vmem:[#allocation5 + $0x60] sm:$0xff]
      %v3716 = vld [vmem:[#allocation5 + $0x68] sm:$0xff]
      %v3717 = vld [vmem:[#allocation5 + $0x70] sm:$0xff]
      %v3718 = vld [vmem:[#allocation5 + $0x78] sm:$0xff]
      %v3719 = vld [vmem:[#allocation5 + $0x80] sm:$0xff]
      %v3720 = vld [vmem:[#allocation5 + $0x88] sm:$0xff]
      %v3721 = vld [vmem:[#allocation5 + $0x90] sm:$0xff]
      %v3722 = vld [vmem:[#allocation5 + $0x98] sm:$0xff]
      %v3723 = vld [vmem:[#allocation5 + $0xa0] sm:$0xff]
      %v3724 = vld [vmem:[#allocation5 + $0xa8] sm:$0xff]
      %v3725 = vld [vmem:[#allocation5 + $0xb0] sm:$0xff]
      %v3726 = vld [vmem:[#allocation5 + $0xb8] sm:$0xff]
      %v3727 = vld [vmem:[#allocation5 + $0xc0] sm:$0xff]
      %v3728 = vld [vmem:[#allocation5 + $0xc8] sm:$0xff]
      %v3729 = vld [vmem:[#allocation5 + $0xd0] sm:$0xff]
      %v3730 = vld [vmem:[#allocation5 + $0xd8] sm:$0xff]
      %v3731 = vld [vmem:[#allocation5 + $0xe0] sm:$0xff]
      %v3732 = vld [vmem:[#allocation5 + $0xe8] sm:$0xff]
      %v3733 = vld [vmem:[#allocation5 + $0xf0] sm:$0xff]
      %v3734 = vld [vmem:[#allocation5 + $0xf8] sm:$0xff]
      %v3735 = vld [vmem:[#allocation5 + $0x100] sm:$0xff]
      %v3736 = vld [vmem:[#allocation5 + $0x108] sm:$0xff]
      %v3737 = vld [vmem:[#allocation5 + $0x110] sm:$0xff]
      %v3738 = vld [vmem:[#allocation5 + $0x118] sm:$0xff]
      %v3739 = vld [vmem:[#allocation5 + $0x120] sm:$0xff]
      %v3740 = vld [vmem:[#allocation5 + $0x128] sm:$0xff]
      %v3741 = vld [vmem:[#allocation5 + $0x130] sm:$0xff]
      %v3742 = vld [vmem:[#allocation5 + $0x138] sm:$0xff]
      %v3743 = vld [vmem:[#allocation5 + $0x140] sm:$0xff]
      %v3744 = vld [vmem:[#allocation5 + $0x148] sm:$0xff]
      %v3745 = vld [vmem:[#allocation5 + $0x150] sm:$0xff]
      %v3746 = vld [vmem:[#allocation5 + $0x158] sm:$0xff]
      %v3747 = vld [vmem:[#allocation5 + $0x160] sm:$0xff]
      %v3748 = vld [vmem:[#allocation5 + $0x168] sm:$0xff]
      %v3749 = vld [vmem:[#allocation5 + $0x170] sm:$0xff]
      %v3750 = vld [vmem:[#allocation5 + $0x178] sm:$0xff]
      %v3751 = vld [vmem:[#allocation5 + $0x180] sm:$0xff]
      %v3752 = vld [vmem:[#allocation5 + $0x188] sm:$0xff]
      %v3753 = vld [vmem:[#allocation5 + $0x190] sm:$0xff]
      %v3754 = vld [vmem:[#allocation5 + $0x198] sm:$0xff]
      %v3755 = vld [vmem:[#allocation5 + $0x1a0] sm:$0xff]
      %v3756 = vld [vmem:[#allocation5 + $0x1a8] sm:$0xff]
      %v3757 = vld [vmem:[#allocation5 + $0x1b0] sm:$0xff]
      %v3758 = vld [vmem:[#allocation5 + $0x1b8] sm:$0xff]
      %v3759 = vld [vmem:[#allocation5 + $0x1c0] sm:$0xff]
      %v3760 = vld [vmem:[#allocation5 + $0x1c8] sm:$0xff]
      %v3761 = vld [vmem:[#allocation5 + $0x1d0] sm:$0xff]
      %v3762 = vld [vmem:[#allocation5 + $0x1d8] sm:$0xff]
      %v3763 = vld [vmem:[#allocation5 + $0x1e0] sm:$0xff]
      %v3764 = vld [vmem:[#allocation5 + $0x1e8] sm:$0xff]
      %v3765 = vld [vmem:[#allocation5 + $0x1f0] sm:$0xff]
      %v3766 = vld [vmem:[#allocation5 + $0x1f8] sm:$0xff]
      %v3767 = vld [vmem:[#allocation5 + $0x200] sm:$0xff]
      %v3768 = vld [vmem:[#allocation5 + $0x208] sm:$0xff]
      %v3769 = vld [vmem:[#allocation5 + $0x210] sm:$0xff]
      %v3770 = vld [vmem:[#allocation5 + $0x218] sm:$0xff]
      %v3771 = vld [vmem:[#allocation5 + $0x220] sm:$0xff]
      %v3772 = vld [vmem:[#allocation5 + $0x228] sm:$0xff]
      %v3773 = vld [vmem:[#allocation5 + $0x230] sm:$0xff]
      %v3774 = vld [vmem:[#allocation5 + $0x238] sm:$0xff]
      %v3775 = vld [vmem:[#allocation5 + $0x240] sm:$0xff]
      %v3776 = vld [vmem:[#allocation5 + $0x248] sm:$0xff]
      %v3777 = vld [vmem:[#allocation5 + $0x250] sm:$0xff]
      %v3778 = vld [vmem:[#allocation5 + $0x258] sm:$0xff]
      %v3779 = vld [vmem:[#allocation5 + $0x260] sm:$0xff]
      %v3780 = vld [vmem:[#allocation5 + $0x268] sm:$0xff]
      %v3781 = vld [vmem:[#allocation5 + $0x270] sm:$0xff]
      %v3782 = vld [vmem:[#allocation5 + $0x278] sm:$0xff]
      %v3783 = vld [vmem:[#allocation5 + $0x280] sm:$0xff]
      %v3784 = vld [vmem:[#allocation5 + $0x288] sm:$0xff]
      %v3785 = vld [vmem:[#allocation5 + $0x290] sm:$0xff]
      %v3786 = vld [vmem:[#allocation5 + $0x298] sm:$0xff]
      %v3787 = vld [vmem:[#allocation5 + $0x2a0] sm:$0xff]
      %v3788 = vld [vmem:[#allocation5 + $0x2a8] sm:$0xff]
      %v3789 = vld [vmem:[#allocation5 + $0x2b0] sm:$0xff]
      %v3790 = vld [vmem:[#allocation5 + $0x2b8] sm:$0xff]
      %v3791 = vld [vmem:[#allocation5 + $0x2c0] sm:$0xff]
      %v3792 = vld [vmem:[#allocation5 + $0x2c8] sm:$0xff]
      %v3793 = vld [vmem:[#allocation5 + $0x2d0] sm:$0xff]
      %v3794 = vld [vmem:[#allocation5 + $0x2d8] sm:$0xff]
      %v3795 = vld [vmem:[#allocation5 + $0x2e0] sm:$0xff]
      %v3796 = vld [vmem:[#allocation5 + $0x2e8] sm:$0xff]
      %v3797 = vld [vmem:[#allocation5 + $0x2f0] sm:$0xff]
      %v3798 = vld [vmem:[#allocation5 + $0x2f8] sm:$0xff]
      %v3799 = vpack.c.bf16 %v3706, %v3703
      %v3800 = vpack.c.bf16 %v3707, %v3704
      %v3801 = vpack.c.bf16 %v3708, %v3705
      %v3802 = vpack.c.bf16 %v3712, %v3709
      %v3803 = vpack.c.bf16 %v3713, %v3710
      %v3804 = vpack.c.bf16 %v3714, %v3711
      %v3805 = vpack.c.bf16 %v3718, %v3715
      %v3806 = vpack.c.bf16 %v3719, %v3716
      %v3807 = vpack.c.bf16 %v3720, %v3717
      %v3808 = vpack.c.bf16 %v3724, %v3721
      %v3809 = vpack.c.bf16 %v3725, %v3722
      %v3810 = vpack.c.bf16 %v3726, %v3723
      %v3811 = vpack.c.bf16 %v3730, %v3727
      %v3812 = vpack.c.bf16 %v3731, %v3728
      %v3813 = vpack.c.bf16 %v3732, %v3729
      %v3814 = vpack.c.bf16 %v3736, %v3733
      %v3815 = vpack.c.bf16 %v3737, %v3734
      %v3816 = vpack.c.bf16 %v3738, %v3735
      %v3817 = vpack.c.bf16 %v3742, %v3739
      %v3818 = vpack.c.bf16 %v3743, %v3740
      %v3819 = vpack.c.bf16 %v3744, %v3741
      %v3820 = vpack.c.bf16 %v3748, %v3745
      %v3821 = vpack.c.bf16 %v3749, %v3746
      %v3822 = vpack.c.bf16 %v3750, %v3747
      %v3823 = vpack.c.bf16 %v3754, %v3751
      %v3824 = vpack.c.bf16 %v3755, %v3752
      %v3825 = vpack.c.bf16 %v3756, %v3753
      %v3826 = vpack.c.bf16 %v3760, %v3757
      %v3827 = vpack.c.bf16 %v3761, %v3758
      %v3828 = vpack.c.bf16 %v3762, %v3759
      %v3829 = vpack.c.bf16 %v3766, %v3763
      %v3830 = vpack.c.bf16 %v3767, %v3764
      %v3831 = vpack.c.bf16 %v3768, %v3765
      %v3832 = vpack.c.bf16 %v3772, %v3769
      %v3833 = vpack.c.bf16 %v3773, %v3770
      %v3834 = vpack.c.bf16 %v3774, %v3771
      %v3835 = vpack.c.bf16 %v3778, %v3775
      %v3836 = vpack.c.bf16 %v3779, %v3776
      %v3837 = vpack.c.bf16 %v3780, %v3777
      %v3838 = vpack.c.bf16 %v3784, %v3781
      %v3839 = vpack.c.bf16 %v3785, %v3782
      %v3840 = vpack.c.bf16 %v3786, %v3783
      %v3841 = vpack.c.bf16 %v3790, %v3787
      %v3842 = vpack.c.bf16 %v3791, %v3788
      %v3843 = vpack.c.bf16 %v3792, %v3789
      %v3844 = vpack.c.bf16 %v3796, %v3793
      %v3845 = vpack.c.bf16 %v3797, %v3794
      %v3846 = vpack.c.bf16 %v3798, %v3795
      %v3847 = vld [vmem:[%s3] sm:$0xf]
      %v3848 = vld [vmem:[%s3 + $0x4] sm:$0xf]
      %v3849 = vld [vmem:[%s3 + $0x8] sm:$0xf]
      %v3850 = vld [vmem:[%s3 + $0xc] sm:$0xf]
      %v3851 = vld [vmem:[%s3 + $0x10] sm:$0xf]
      %v3852 = vld [vmem:[%s3 + $0x14] sm:$0xf]
      %v3853 = vld [vmem:[%s3 + $0x18] sm:$0xf]
      %v3854 = vld [vmem:[%s3 + $0x1c] sm:$0xf]
      %v3855 = vld [vmem:[%s3 + $0x20] sm:$0xf]
      %v3856 = vld [vmem:[%s3 + $0x24] sm:$0xf]
      %v3857 = vld [vmem:[%s3 + $0x28] sm:$0xf]
      %v3858 = vld [vmem:[%s3 + $0x2c] sm:$0xf]
      %v3859 = vld [vmem:[%s3 + $0x30] sm:$0xf]
      %v3860 = vld [vmem:[%s3 + $0x34] sm:$0xf]
      %v3861 = vld [vmem:[%s3 + $0x38] sm:$0xf]
      %v3862 = vld [vmem:[%s3 + $0x3c] sm:$0xf]
      %v3863 = vld [vmem:[%s3 + $0x40] sm:$0xf]
      %v3864 = vld [vmem:[%s3 + $0x44] sm:$0xf]
      %v3865 = vld [vmem:[%s3 + $0x48] sm:$0xf]
      %v3866 = vld [vmem:[%s3 + $0x4c] sm:$0xf]
      %v3867 = vld [vmem:[%s3 + $0x50] sm:$0xf]
      %v3868 = vld [vmem:[%s3 + $0x54] sm:$0xf]
      %v3869 = vld [vmem:[%s3 + $0x58] sm:$0xf]
      %v3870 = vld [vmem:[%s3 + $0x5c] sm:$0xf]
      %v3871 = vld [vmem:[%s3 + $0x60] sm:$0xf]
      %v3872 = vld [vmem:[%s3 + $0x64] sm:$0xf]
      %v3873 = vld [vmem:[%s3 + $0x68] sm:$0xf]
      %v3874 = vld [vmem:[%s3 + $0x6c] sm:$0xf]
      %v3875 = vld [vmem:[%s3 + $0x70] sm:$0xf]
      %v3876 = vld [vmem:[%s3 + $0x74] sm:$0xf]
      %v3877 = vld [vmem:[%s3 + $0x78] sm:$0xf]
      %v3878 = vld [vmem:[%s3 + $0x7c] sm:$0xf]
      %v3879 = vld [vmem:[%s3 + $0x80] sm:$0xf]
      %v3880 = vld [vmem:[%s3 + $0x84] sm:$0xf]
      %v3881 = vld [vmem:[%s3 + $0x88] sm:$0xf]
      %v3882 = vld [vmem:[%s3 + $0x8c] sm:$0xf]
      %v3883 = vld [vmem:[%s4] sm:$0x1]
      %v3885 = vperm.slane %v3883, 0
      %v3923 = vunpack.c.l.b16 %v3847
      %v3924 = vunpack.c.l.b16 %v3848
      %v3925 = vunpack.c.l.b16 %v3849
      %v3926 = vunpack.c.l.b16 %v3850
      %v3927 = vunpack.c.l.b16 %v3851
      %v3928 = vunpack.c.l.b16 %v3852
      %v3929 = vunpack.c.l.b16 %v3853
      %v3930 = vunpack.c.l.b16 %v3854
      %v3931 = vunpack.c.l.b16 %v3855
      %v3932 = vunpack.c.l.b16 %v3856
      %v3933 = vunpack.c.l.b16 %v3857
      %v3934 = vunpack.c.l.b16 %v3858
      %v3935 = vunpack.c.l.b16 %v3859
      %v3936 = vunpack.c.l.b16 %v3860
      %v3937 = vunpack.c.l.b16 %v3861
      %v3938 = vunpack.c.l.b16 %v3862
      %v3939 = vunpack.c.l.b16 %v3863
      %v3940 = vunpack.c.l.b16 %v3864
      %v3941 = vunpack.c.l.b16 %v3865
      %v3942 = vunpack.c.l.b16 %v3866
      %v3943 = vunpack.c.l.b16 %v3867
      %v3944 = vunpack.c.l.b16 %v3868
      %v3945 = vunpack.c.l.b16 %v3869
      %v3946 = vunpack.c.l.b16 %v3870
      %v3947 = vunpack.c.l.b16 %v3871
      %v3948 = vunpack.c.l.b16 %v3872
      %v3949 = vunpack.c.l.b16 %v3873
      %v3950 = vunpack.c.l.b16 %v3874
      %v3951 = vunpack.c.l.b16 %v3875
      %v3952 = vunpack.c.l.b16 %v3876
      %v3953 = vunpack.c.l.b16 %v3877
      %v3954 = vunpack.c.l.b16 %v3878
      %v3955 = vunpack.c.l.b16 %v3879
      %v3956 = vunpack.c.l.b16 %v3880
      %v3957 = vunpack.c.l.b16 %v3881
      %v3958 = vunpack.c.l.b16 %v3882
      %v3959 = vpack.c.b16 %v3924, %v3923
      %v3960 = vpack.c.b16 %v3926, %v3925
      %v3961 = vpack.c.b16 %v3928, %v3927
      %v3962 = vpack.c.b16 %v3930, %v3929
      %v3963 = vpack.c.b16 %v3932, %v3931
      %v3964 = vpack.c.b16 %v3934, %v3933
      %v3965 = vpack.c.b16 %v3936, %v3935
      %v3966 = vpack.c.b16 %v3938, %v3937
      %v3967 = vpack.c.b16 %v3940, %v3939
      %v3968 = vpack.c.b16 %v3942, %v3941
      %v3969 = vpack.c.b16 %v3944, %v3943
      %v3970 = vpack.c.b16 %v3946, %v3945
      %v3971 = vpack.c.b16 %v3948, %v3947
      %v3972 = vpack.c.b16 %v3950, %v3949
      %v3973 = vpack.c.b16 %v3952, %v3951
      %v3974 = vpack.c.b16 %v3954, %v3953
      %v3975 = vpack.c.b16 %v3956, %v3955
      %v3976 = vpack.c.b16 %v3958, %v3957
      %v3996 = vsel %vm2266, %v3801, 0
      %v3999 = vsel %vm2266, %v3804, 0
      %v4002 = vsel %vm2266, %v3807, 0
      %v4005 = vsel %vm2266, %v3810, 0
      %v4008 = vsel %vm2266, %v3813, 0
      %v4011 = vsel %vm2266, %v3816, 0
      %v4014 = vsel %vm2266, %v3819, 0
      %v4017 = vsel %vm2266, %v3822, 0
      %v4020 = vsel %vm2266, %v3825, 0
      %v4023 = vsel %vm2266, %v3828, 0
      %v4026 = vsel %vm2266, %v3831, 0
      %v4029 = vsel %vm2266, %v3834, 0
      %v4032 = vsel %vm2266, %v3837, 0
      %v4035 = vsel %vm2266, %v3840, 0
      %v4038 = vsel %vm2266, %v3843, 0
      %v4041 = vsel %vm2266, %v3846, 0
      %4043 = vmatpush.bf16.msra.mxu0 %v3966
      %4044 = vmatpush.bf16.msra.mxu0 %v3965
      %4045 = vmatpush.bf16.msra.mxu0 %v3964
      %4046 = vmatpush.bf16.msra.mxu0 %v3963
      %4047 = vmatpush.bf16.msra.mxu0 %v3962
      %4048 = vmatpush.bf16.msra.mxu0 %v3961
      %4049 = vmatpush.bf16.msra.mxu0 %v3960
      %4050 = vmatpush.bf16.msra.mxu0 %v3959
      %4051 = vmatmul.bf16.gmra.mxu0 %v3799
      %v4052 = vpop.f32.mrf.mxu0
      %v4053 = vadd.f32 %v3885, %v4052
      %v4054 = vpop.f32.mrf.mxu0
      %v4055 = vadd.f32 %v3885, %v4054
      %4056 = vmatmul.bf16.gmra.mxu0 %v3802
      %v4057 = vpop.f32.mrf.mxu0
      %v4058 = vadd.f32 %v3885, %v4057
      %v4059 = vpop.f32.mrf.mxu0
      %v4060 = vadd.f32 %v3885, %v4059
      %4061 = vmatmul.bf16.gmra.mxu0 %v3805
      %v4062 = vpop.f32.mrf.mxu0
      %v4063 = vadd.f32 %v3885, %v4062
      %v4064 = vpop.f32.mrf.mxu0
      %v4065 = vadd.f32 %v3885, %v4064
      %4066 = vmatmul.bf16.gmra.mxu0 %v3808
      %v4067 = vpop.f32.mrf.mxu0
      %v4068 = vadd.f32 %v3885, %v4067
      %v4069 = vpop.f32.mrf.mxu0
      %v4070 = vadd.f32 %v3885, %v4069
      %4071 = vmatmul.bf16.gmra.mxu0 %v3811
      %v4072 = vpop.f32.mrf.mxu0
      %v4073 = vadd.f32 %v3885, %v4072
      %v4074 = vpop.f32.mrf.mxu0
      %v4075 = vadd.f32 %v3885, %v4074
      %4076 = vmatmul.bf16.gmra.mxu0 %v3814
      %v4077 = vpop.f32.mrf.mxu0
      %v4078 = vadd.f32 %v3885, %v4077
      %v4079 = vpop.f32.mrf.mxu0
      %v4080 = vadd.f32 %v3885, %v4079
      %4081 = vmatmul.bf16.gmra.mxu0 %v3817
      %v4082 = vpop.f32.mrf.mxu0
      %v4083 = vadd.f32 %v3885, %v4082
      %v4084 = vpop.f32.mrf.mxu0
      %v4085 = vadd.f32 %v3885, %v4084
      %4086 = vmatmul.bf16.gmra.mxu0 %v3820
      %v4087 = vpop.f32.mrf.mxu0
      %v4088 = vadd.f32 %v3885, %v4087
      %v4089 = vpop.f32.mrf.mxu0
      %v4090 = vadd.f32 %v3885, %v4089
      %4091 = vmatmul.bf16.gmra.mxu0 %v3823
      %v4092 = vpop.f32.mrf.mxu0
      %v4093 = vadd.f32 %v3885, %v4092
      %v4094 = vpop.f32.mrf.mxu0
      %v4095 = vadd.f32 %v3885, %v4094
      %4096 = vmatmul.bf16.gmra.mxu0 %v3826
      %v4097 = vpop.f32.mrf.mxu0
      %v4098 = vadd.f32 %v3885, %v4097
      %v4099 = vpop.f32.mrf.mxu0
      %v4100 = vadd.f32 %v3885, %v4099
      %4101 = vmatmul.bf16.gmra.mxu0 %v3829
      %v4102 = vpop.f32.mrf.mxu0
      %v4103 = vadd.f32 %v3885, %v4102
      %v4104 = vpop.f32.mrf.mxu0
      %v4105 = vadd.f32 %v3885, %v4104
      %4106 = vmatmul.bf16.gmra.mxu0 %v3832
      %v4107 = vpop.f32.mrf.mxu0
      %v4108 = vadd.f32 %v3885, %v4107
      %v4109 = vpop.f32.mrf.mxu0
      %v4110 = vadd.f32 %v3885, %v4109
      %4111 = vmatmul.bf16.gmra.mxu0 %v3835
      %v4112 = vpop.f32.mrf.mxu0
      %v4113 = vadd.f32 %v3885, %v4112
      %v4114 = vpop.f32.mrf.mxu0
      %v4115 = vadd.f32 %v3885, %v4114
      %4116 = vmatmul.bf16.gmra.mxu0 %v3838
      %v4117 = vpop.f32.mrf.mxu0
      %v4118 = vadd.f32 %v3885, %v4117
      %v4119 = vpop.f32.mrf.mxu0
      %v4120 = vadd.f32 %v3885, %v4119
      %4121 = vmatmul.bf16.gmra.mxu0 %v3841
      %v4122 = vpop.f32.mrf.mxu0
      %v4123 = vadd.f32 %v3885, %v4122
      %v4124 = vpop.f32.mrf.mxu0
      %v4125 = vadd.f32 %v3885, %v4124
      %4126 = vmatmul.bf16.gmra.mxu0 %v3844
      %v4127 = vpop.f32.mrf.mxu0
      %v4128 = vadd.f32 %v3885, %v4127
      %v4129 = vpop.f32.mrf.mxu0
      %v4130 = vadd.f32 %v3885, %v4129
      %4131 = vdwg.mxu0
      %4132 = vmatpush.bf16.msra.mxu0 %v3974
      %4133 = vmatpush.bf16.msra.mxu0 %v3973
      %4134 = vmatpush.bf16.msra.mxu0 %v3972
      %4135 = vmatpush.bf16.msra.mxu0 %v3971
      %4136 = vmatpush.bf16.msra.mxu0 %v3970
      %4137 = vmatpush.bf16.msra.mxu0 %v3969
      %4138 = vmatpush.bf16.msra.mxu0 %v3968
      %4139 = vmatpush.bf16.msra.mxu0 %v3967
      %4140 = vmatmul.bf16.gmra.mxu0 %v3800
      %v4141 = vpop.f32.mrf.mxu0
      %v4142 = vadd.f32 %v4053, %v4141
      %v4143 = vpop.f32.mrf.mxu0
      %v4144 = vadd.f32 %v4055, %v4143
      %4145 = vmatmul.bf16.gmra.mxu0 %v3803
      %v4146 = vpop.f32.mrf.mxu0
      %v4147 = vadd.f32 %v4058, %v4146
      %v4148 = vpop.f32.mrf.mxu0
      %v4149 = vadd.f32 %v4060, %v4148
      %4150 = vmatmul.bf16.gmra.mxu0 %v3806
      %v4151 = vpop.f32.mrf.mxu0
      %v4152 = vadd.f32 %v4063, %v4151
      %v4153 = vpop.f32.mrf.mxu0
      %v4154 = vadd.f32 %v4065, %v4153
      %4155 = vmatmul.bf16.gmra.mxu0 %v3809
      %v4156 = vpop.f32.mrf.mxu0
      %v4157 = vadd.f32 %v4068, %v4156
      %v4158 = vpop.f32.mrf.mxu0
      %v4159 = vadd.f32 %v4070, %v4158
      %4160 = vmatmul.bf16.gmra.mxu0 %v3812
      %v4161 = vpop.f32.mrf.mxu0
      %v4162 = vadd.f32 %v4073, %v4161
      %v4163 = vpop.f32.mrf.mxu0
      %v4164 = vadd.f32 %v4075, %v4163
      %4165 = vmatmul.bf16.gmra.mxu0 %v3815
      %v4166 = vpop.f32.mrf.mxu0
      %v4167 = vadd.f32 %v4078, %v4166
      %v4168 = vpop.f32.mrf.mxu0
      %v4169 = vadd.f32 %v4080, %v4168
      %4170 = vmatmul.bf16.gmra.mxu0 %v3818
      %v4171 = vpop.f32.mrf.mxu0
      %v4172 = vadd.f32 %v4083, %v4171
      %v4173 = vpop.f32.mrf.mxu0
      %v4174 = vadd.f32 %v4085, %v4173
      %4175 = vmatmul.bf16.gmra.mxu0 %v3821
      %v4176 = vpop.f32.mrf.mxu0
      %v4177 = vadd.f32 %v4088, %v4176
      %v4178 = vpop.f32.mrf.mxu0
      %v4179 = vadd.f32 %v4090, %v4178
      %4180 = vmatmul.bf16.gmra.mxu0 %v3824
      %v4181 = vpop.f32.mrf.mxu0
      %v4182 = vadd.f32 %v4093, %v4181
      %v4183 = vpop.f32.mrf.mxu0
      %v4184 = vadd.f32 %v4095, %v4183
      %4185 = vmatmul.bf16.gmra.mxu0 %v3827
      %v4186 = vpop.f32.mrf.mxu0
      %v4187 = vadd.f32 %v4098, %v4186
      %v4188 = vpop.f32.mrf.mxu0
      %v4189 = vadd.f32 %v4100, %v4188
      %4190 = vmatmul.bf16.gmra.mxu0 %v3830
      %v4191 = vpop.f32.mrf.mxu0
      %v4192 = vadd.f32 %v4103, %v4191
      %v4193 = vpop.f32.mrf.mxu0
      %v4194 = vadd.f32 %v4105, %v4193
      %4195 = vmatmul.bf16.gmra.mxu0 %v3833
      %v4196 = vpop.f32.mrf.mxu0
      %v4197 = vadd.f32 %v4108, %v4196
      %v4198 = vpop.f32.mrf.mxu0
      %v4199 = vadd.f32 %v4110, %v4198
      %4200 = vmatmul.bf16.gmra.mxu0 %v3836
      %v4201 = vpop.f32.mrf.mxu0
      %v4202 = vadd.f32 %v4113, %v4201
      %v4203 = vpop.f32.mrf.mxu0
      %v4204 = vadd.f32 %v4115, %v4203
      %4205 = vmatmul.bf16.gmra.mxu0 %v3839
      %v4206 = vpop.f32.mrf.mxu0
      %v4207 = vadd.f32 %v4118, %v4206
      %v4208 = vpop.f32.mrf.mxu0
      %v4209 = vadd.f32 %v4120, %v4208
      %4210 = vmatmul.bf16.gmra.mxu0 %v3842
      %v4211 = vpop.f32.mrf.mxu0
      %v4212 = vadd.f32 %v4123, %v4211
      %v4213 = vpop.f32.mrf.mxu0
      %v4214 = vadd.f32 %v4125, %v4213
      %4215 = vmatmul.bf16.gmra.mxu0 %v3845
      %v4216 = vpop.f32.mrf.mxu0
      %v4217 = vadd.f32 %v4128, %v4216
      %v4218 = vpop.f32.mrf.mxu0
      %v4219 = vadd.f32 %v4130, %v4218
      %4220 = vdwg.mxu0
      %4221 = vmatpush.bf16.msra.mxu0 0
      %4222 = vmatpush.bf16.msra.mxu0 0
      %4223 = vmatpush.bf16.msra.mxu0 0
      %4224 = vmatpush.bf16.msra.mxu0 0
      %4225 = vmatpush.bf16.msra.mxu0 0
      %4226 = vmatpush.bf16.msra.mxu0 0
      %4227 = vmatpush.bf16.msra.mxu0 %v3976
      %4228 = vmatpush.bf16.msra.mxu0 %v3975
      %4229 = vmatmul.bf16.gmra.mxu0 %v3996
      %v4230 = vpop.f32.mrf.mxu0
      %v4231 = vadd.f32 %v4142, %v4230
      %v4232 = vpop.f32.mrf.mxu0
      %v4233 = vadd.f32 %v4144, %v4232
      %4234 = vmatmul.bf16.gmra.mxu0 %v3999
      %v4235 = vpop.f32.mrf.mxu0
      %v4236 = vadd.f32 %v4147, %v4235
      %v4237 = vpop.f32.mrf.mxu0
      %v4238 = vadd.f32 %v4149, %v4237
      %4239 = vmatmul.bf16.gmra.mxu0 %v4002
      %v4240 = vpop.f32.mrf.mxu0
      %v4241 = vadd.f32 %v4152, %v4240
      %v4242 = vpop.f32.mrf.mxu0
      %v4243 = vadd.f32 %v4154, %v4242
      %4244 = vmatmul.bf16.gmra.mxu0 %v4005
      %v4245 = vpop.f32.mrf.mxu0
      %v4246 = vadd.f32 %v4157, %v4245
      %v4247 = vpop.f32.mrf.mxu0
      %v4248 = vadd.f32 %v4159, %v4247
      %4249 = vmatmul.bf16.gmra.mxu0 %v4008
      %v4250 = vpop.f32.mrf.mxu0
      %v4251 = vadd.f32 %v4162, %v4250
      %v4252 = vpop.f32.mrf.mxu0
      %v4253 = vadd.f32 %v4164, %v4252
      %4254 = vmatmul.bf16.gmra.mxu0 %v4011
      %v4255 = vpop.f32.mrf.mxu0
      %v4256 = vadd.f32 %v4167, %v4255
      %v4257 = vpop.f32.mrf.mxu0
      %v4258 = vadd.f32 %v4169, %v4257
      %4259 = vmatmul.bf16.gmra.mxu0 %v4014
      %v4260 = vpop.f32.mrf.mxu0
      %v4261 = vadd.f32 %v4172, %v4260
      %v4262 = vpop.f32.mrf.mxu0
      %v4263 = vadd.f32 %v4174, %v4262
      %4264 = vmatmul.bf16.gmra.mxu0 %v4017
      %v4265 = vpop.f32.mrf.mxu0
      %v4266 = vadd.f32 %v4177, %v4265
      %v4267 = vpop.f32.mrf.mxu0
      %v4268 = vadd.f32 %v4179, %v4267
      %4269 = vmatmul.bf16.gmra.mxu0 %v4020
      %v4270 = vpop.f32.mrf.mxu0
      %v4271 = vadd.f32 %v4182, %v4270
      %v4272 = vpop.f32.mrf.mxu0
      %v4273 = vadd.f32 %v4184, %v4272
      %4274 = vmatmul.bf16.gmra.mxu0 %v4023
      %v4275 = vpop.f32.mrf.mxu0
      %v4276 = vadd.f32 %v4187, %v4275
      %v4277 = vpop.f32.mrf.mxu0
      %v4278 = vadd.f32 %v4189, %v4277
      %4279 = vmatmul.bf16.gmra.mxu0 %v4026
      %v4280 = vpop.f32.mrf.mxu0
      %v4281 = vadd.f32 %v4192, %v4280
      %v4282 = vpop.f32.mrf.mxu0
      %v4283 = vadd.f32 %v4194, %v4282
      %4284 = vmatmul.bf16.gmra.mxu0 %v4029
      %v4285 = vpop.f32.mrf.mxu0
      %v4286 = vadd.f32 %v4197, %v4285
      %v4287 = vpop.f32.mrf.mxu0
      %v4288 = vadd.f32 %v4199, %v4287
      %4289 = vmatmul.bf16.gmra.mxu0 %v4032
      %v4290 = vpop.f32.mrf.mxu0
      %v4291 = vadd.f32 %v4202, %v4290
      %v4292 = vpop.f32.mrf.mxu0
      %v4293 = vadd.f32 %v4204, %v4292
      %4294 = vmatmul.bf16.gmra.mxu0 %v4035
      %v4295 = vpop.f32.mrf.mxu0
      %v4296 = vadd.f32 %v4207, %v4295
      %v4297 = vpop.f32.mrf.mxu0
      %v4298 = vadd.f32 %v4209, %v4297
      %4299 = vmatmul.bf16.gmra.mxu0 %v4038
      %v4300 = vpop.f32.mrf.mxu0
      %v4301 = vadd.f32 %v4212, %v4300
      %v4302 = vpop.f32.mrf.mxu0
      %v4303 = vadd.f32 %v4214, %v4302
      %4304 = vmatmul.bf16.gmra.mxu0 %v4041
      %v4305 = vpop.f32.mrf.mxu0
      %v4306 = vadd.f32 %v4217, %v4305
      %v4307 = vpop.f32.mrf.mxu0
      %v4308 = vadd.f32 %v4219, %v4307
      %4309 = vdwg.mxu0
      %vm4310 = vcmp.ge.f32.partialorder %v4231, 0.0
      %vm4311 = vcmp.ge.f32.partialorder %v4233, 0.0
      %vm4312 = vcmp.ge.f32.partialorder %v4236, 0.0
      %vm4313 = vcmp.ge.f32.partialorder %v4238, 0.0
      %vm4314 = vcmp.ge.f32.partialorder %v4241, 0.0
      %vm4315 = vcmp.ge.f32.partialorder %v4243, 0.0
      %vm4316 = vcmp.ge.f32.partialorder %v4246, 0.0
      %vm4317 = vcmp.ge.f32.partialorder %v4248, 0.0
      %vm4318 = vcmp.ge.f32.partialorder %v4251, 0.0
      %vm4319 = vcmp.ge.f32.partialorder %v4253, 0.0
      %vm4320 = vcmp.ge.f32.partialorder %v4256, 0.0
      %vm4321 = vcmp.ge.f32.partialorder %v4258, 0.0
      %vm4322 = vcmp.ge.f32.partialorder %v4261, 0.0
      %vm4323 = vcmp.ge.f32.partialorder %v4263, 0.0
      %vm4324 = vcmp.ge.f32.partialorder %v4266, 0.0
      %vm4325 = vcmp.ge.f32.partialorder %v4268, 0.0
      %vm4326 = vcmp.ge.f32.partialorder %v4271, 0.0
      %vm4327 = vcmp.ge.f32.partialorder %v4273, 0.0
      %vm4328 = vcmp.ge.f32.partialorder %v4276, 0.0
      %vm4329 = vcmp.ge.f32.partialorder %v4278, 0.0
      %vm4330 = vcmp.ge.f32.partialorder %v4281, 0.0
      %vm4331 = vcmp.ge.f32.partialorder %v4283, 0.0
      %vm4332 = vcmp.ge.f32.partialorder %v4286, 0.0
      %vm4333 = vcmp.ge.f32.partialorder %v4288, 0.0
      %vm4334 = vcmp.ge.f32.partialorder %v4291, 0.0
      %vm4335 = vcmp.ge.f32.partialorder %v4293, 0.0
      %vm4336 = vcmp.ge.f32.partialorder %v4296, 0.0
      %vm4337 = vcmp.ge.f32.partialorder %v4298, 0.0
      %vm4338 = vcmp.ge.f32.partialorder %v4301, 0.0
      %vm4339 = vcmp.ge.f32.partialorder %v4303, 0.0
      %vm4340 = vcmp.ge.f32.partialorder %v4306, 0.0
      %vm4341 = vcmp.ge.f32.partialorder %v4308, 0.0
      %v4342 = vmul.f32 %v4231, 0.2
      %v4343 = vmul.f32 %v4233, 0.2
      %v4344 = vmul.f32 %v4236, 0.2
      %v4345 = vmul.f32 %v4238, 0.2
      %v4346 = vmul.f32 %v4241, 0.2
      %v4347 = vmul.f32 %v4243, 0.2
      %v4348 = vmul.f32 %v4246, 0.2
      %v4349 = vmul.f32 %v4248, 0.2
      %v4350 = vmul.f32 %v4251, 0.2
      %v4351 = vmul.f32 %v4253, 0.2
      %v4352 = vmul.f32 %v4256, 0.2
      %v4353 = vmul.f32 %v4258, 0.2
      %v4354 = vmul.f32 %v4261, 0.2
      %v4355 = vmul.f32 %v4263, 0.2
      %v4356 = vmul.f32 %v4266, 0.2
      %v4357 = vmul.f32 %v4268, 0.2
      %v4358 = vmul.f32 %v4271, 0.2
      %v4359 = vmul.f32 %v4273, 0.2
      %v4360 = vmul.f32 %v4276, 0.2
      %v4361 = vmul.f32 %v4278, 0.2
      %v4362 = vmul.f32 %v4281, 0.2
      %v4363 = vmul.f32 %v4283, 0.2
      %v4364 = vmul.f32 %v4286, 0.2
      %v4365 = vmul.f32 %v4288, 0.2
      %v4366 = vmul.f32 %v4291, 0.2
      %v4367 = vmul.f32 %v4293, 0.2
      %v4368 = vmul.f32 %v4296, 0.2
      %v4369 = vmul.f32 %v4298, 0.2
      %v4370 = vmul.f32 %v4301, 0.2
      %v4371 = vmul.f32 %v4303, 0.2
      %v4372 = vmul.f32 %v4306, 0.2
      %v4373 = vmul.f32 %v4308, 0.2
      %v4374 = vsel %vm4310, %v4231, %v4342
      %v4375 = vsel %vm4311, %v4233, %v4343
      %v4376 = vsel %vm4312, %v4236, %v4344
      %v4377 = vsel %vm4313, %v4238, %v4345
      %v4378 = vsel %vm4314, %v4241, %v4346
      %v4379 = vsel %vm4315, %v4243, %v4347
      %v4380 = vsel %vm4316, %v4246, %v4348
      %v4381 = vsel %vm4317, %v4248, %v4349
      %v4382 = vsel %vm4318, %v4251, %v4350
      %v4383 = vsel %vm4319, %v4253, %v4351
      %v4384 = vsel %vm4320, %v4256, %v4352
      %v4385 = vsel %vm4321, %v4258, %v4353
      %v4386 = vsel %vm4322, %v4261, %v4354
      %v4387 = vsel %vm4323, %v4263, %v4355
      %v4388 = vsel %vm4324, %v4266, %v4356
      %v4389 = vsel %vm4325, %v4268, %v4357
      %v4390 = vsel %vm4326, %v4271, %v4358
      %v4391 = vsel %vm4327, %v4273, %v4359
      %v4392 = vsel %vm4328, %v4276, %v4360
      %v4393 = vsel %vm4329, %v4278, %v4361
      %v4394 = vsel %vm4330, %v4281, %v4362
      %v4395 = vsel %vm4331, %v4283, %v4363
      %v4396 = vsel %vm4332, %v4286, %v4364
      %v4397 = vsel %vm4333, %v4288, %v4365
      %v4398 = vsel %vm4334, %v4291, %v4366
      %v4399 = vsel %vm4335, %v4293, %v4367
      %v4400 = vsel %vm4336, %v4296, %v4368
      %v4401 = vsel %vm4337, %v4298, %v4369
      %v4402 = vsel %vm4338, %v4301, %v4370
      %v4403 = vsel %vm4339, %v4303, %v4371
      %v4404 = vsel %vm4340, %v4306, %v4372
      %v4405 = vsel %vm4341, %v4308, %v4373
      %4406 = vst.msk [vmem:[%s224] sm:$0xff] %vm2266, %v4374
      %4407 = vst.msk [vmem:[%s224 + $0x8] sm:$0xff] %vm2266, %v4375
      %4408 = vst.msk [vmem:[%s224 + $0x10] sm:$0xff] %vm2266, %v4376
      %4409 = vst.msk [vmem:[%s224 + $0x18] sm:$0xff] %vm2266, %v4377
      %4410 = vst.msk [vmem:[%s224 + $0x20] sm:$0xff] %vm2266, %v4378
      %4411 = vst.msk [vmem:[%s224 + $0x28] sm:$0xff] %vm2266, %v4379
      %4412 = vst.msk [vmem:[%s224 + $0x30] sm:$0xff] %vm2266, %v4380
      %4413 = vst.msk [vmem:[%s224 + $0x38] sm:$0xff] %vm2266, %v4381
      %4414 = vst.msk [vmem:[%s224 + $0x40] sm:$0xff] %vm2266, %v4382
      %4415 = vst.msk [vmem:[%s224 + $0x48] sm:$0xff] %vm2266, %v4383
      %4416 = vst.msk [vmem:[%s224 + $0x50] sm:$0xff] %vm2266, %v4384
      %4417 = vst.msk [vmem:[%s224 + $0x58] sm:$0xff] %vm2266, %v4385
      %4418 = vst.msk [vmem:[%s224 + $0x60] sm:$0xff] %vm2266, %v4386
      %4419 = vst.msk [vmem:[%s224 + $0x68] sm:$0xff] %vm2266, %v4387
      %4420 = vst.msk [vmem:[%s224 + $0x70] sm:$0xff] %vm2266, %v4388
      %4421 = vst.msk [vmem:[%s224 + $0x78] sm:$0xff] %vm2266, %v4389
      %4422 = vst.msk [vmem:[%s224 + $0x80] sm:$0xff] %vm2266, %v4390
      %4423 = vst.msk [vmem:[%s224 + $0x88] sm:$0xff] %vm2266, %v4391
      %4424 = vst.msk [vmem:[%s224 + $0x90] sm:$0xff] %vm2266, %v4392
      %4425 = vst.msk [vmem:[%s224 + $0x98] sm:$0xff] %vm2266, %v4393
      %4426 = vst.msk [vmem:[%s224 + $0xa0] sm:$0xff] %vm2266, %v4394
      %4427 = vst.msk [vmem:[%s224 + $0xa8] sm:$0xff] %vm2266, %v4395
      %4428 = vst.msk [vmem:[%s224 + $0xb0] sm:$0xff] %vm2266, %v4396
      %4429 = vst.msk [vmem:[%s224 + $0xb8] sm:$0xff] %vm2266, %v4397
      %4430 = vst.msk [vmem:[%s224 + $0xc0] sm:$0xff] %vm2266, %v4398
      %4431 = vst.msk [vmem:[%s224 + $0xc8] sm:$0xff] %vm2266, %v4399
      %4432 = vst.msk [vmem:[%s224 + $0xd0] sm:$0xff] %vm2266, %v4400
      %4433 = vst.msk [vmem:[%s224 + $0xd8] sm:$0xff] %vm2266, %v4401
      %4434 = vst.msk [vmem:[%s224 + $0xe0] sm:$0xff] %vm2266, %v4402
      %4435 = vst.msk [vmem:[%s224 + $0xe8] sm:$0xff] %vm2266, %v4403
      %4436 = vst.msk [vmem:[%s224 + $0xf0] sm:$0xff] %vm2266, %v4404
      %4437 = vst.msk [vmem:[%s224 + $0xf8] sm:$0xff] %vm2266, %v4405
      %p4438 = scmp.lt.s32.totalorder %s16, 1
      %s4439 = scalar_select %p4438, %s16, 1
      %s4440 = smul.addr %s4439, 32
      %s4441 = smul.addr %s4440, 8
      %s4442 = scalar_lea.vmem %s5, %s4441
      // Predicated region
      $region41: #{tpu_custom_call.1} parent=39 // pred_check
        %p4443 = pneg %p144
      $region42: #{tpu_custom_call.1} parent=39 // pred_check_branch
        %4445 = sbr.rel (%p4443) target = $region44
      $region43: #{tpu_custom_call.1} parent=39 // pred_region
        _
      $region44: #{tpu_custom_call.1} parent=39 // pred_fallthru
        _
    $region40: #{tpu_custom_call.1} parent=5 // pred_fallthru
      _
    %p4446 = scmp.le.s32.totalorder 2, %s11
    // Predicated region
    $region45: #{tpu_custom_call.1} parent=5 // pred_check
      %p4447 = pneg %p4446
    $region46: #{tpu_custom_call.1} parent=5 // pred_check_branch
      %4449 = sbr.rel (%p4447) target = $region48
    $region47: #{tpu_custom_call.1} parent=5 // pred_region
      %s4450 = ssub.s32 %s11, 2
      // Predicated region
      $region49: #{tpu_custom_call.1} parent=47 // pred_check
        %p4451 = pneg %p150
      $region50: #{tpu_custom_call.1} parent=47 // pred_check_branch
        %4453 = sbr.rel (%p4451) target = $region52
      $region51: #{tpu_custom_call.1} parent=47 // pred_region
        %p4454 = scmp.lt.s32.totalorder %s17, 1
        %s4455 = scalar_select %p4454, %s17, 1
        %s4456 = smul.addr %s4455, 32
        %s4457 = smul.addr %s4456, 8
        %s4458 = scalar_lea.vmem %s5, %s4457
      $region52: #{tpu_custom_call.1} parent=47 // pred_fallthru
        _
    $region48: #{tpu_custom_call.1} parent=5 // pred_fallthru
      _
  $region6: #{tpu_custom_call.1} parent=0 // loop_footer
    %s15 = sadd.s32 1, %s11
  $region7: #{tpu_custom_call.1} parent=0 // loop_footer_branch
    %10 = sbr.rel target = $region3
  $region8: #{tpu_custom_call.1} parent=0 // loop_exit
    _

</llo_original>
